<compile_context>
chip_gen: v6e
topology: v6e:2x2x1
jax: 0.10.0
libtpu: 0.0.40
codegen_flags: <defaults>
</compile_context>

<pallas_src>
import numpy as np
import jax
import jax.numpy as jnp
from jax.experimental import pallas as pl
from jax.experimental.pallas import tpu as pltpu


# ---------------- fused Pallas kernel ----------------

def cnn_fused_kernel(x0_ref, x1_ref, x2_ref, x3_ref,
                     wb1_ref, wb2_ref, wfc_ref,
                     b1_ref, b2_ref, bfc_ref,
                     o_ref):
    """Whole CNN forward for one batch tile.

    x{r}_ref : (nr, Bt, 90) f32  padded 28x28x3 image rows flattened to (W+2)*Cin = 90
               lanes, deinterleaved by (padded row) mod 4 (r=0..3, nr = 8,8,7,7).
               Rows are m-major with the batch tile in sublanes.
    wb1_ref  : (6, 90, 112)  bf16 banded conv1 weights, index rj*3 + kh.
    wb2_ref  : (6, 112, 112) bf16 banded conv2 weights, index rj*3 + kh.
    wfc_ref  : (7, 112, 10)  bf16 fc weights, one (112, 10) block per pooled row.
    b1/b2/bfc: (1, 112) / (1, 112) / (1, 10) f32 tiled biases.
    o_ref    : (Bt, 10) f32 logits.
    """
    bt = o_ref.shape[0]
    f32 = jnp.float32
    bf16 = jnp.bfloat16

    def slab(ref, lo):
        # (7, Bt, K) -> (7*Bt, K) bf16; leading-dim merge only (layout trivial).
        v = ref[lo:lo + 7]
        return v.reshape(7 * bt, v.shape[-1]).astype(bf16)

    x0a, x0b = slab(x0_ref, 0), slab(x0_ref, 1)
    x1a, x1b = slab(x1_ref, 0), slab(x1_ref, 1)
    x2a = slab(x2_ref, 0)
    x3a = slab(x3_ref, 0)

    def conv_relu_pool(lhs_ri0, lhs_ri1, w_ref, bias):
        # pooled = relu(max over the 4 pool-window parities of conv + bias);
        # each parity branch is a sum of 3 (kh) matmuls against a banded weight.
        acc = None
        for lhs3 in (lhs_ri0, lhs_ri1):          # row parity of the 2x2 window
            for rj in (0, 1):                    # column parity of the window
                a = None
                for kh in range(3):
                    t = jnp.dot(lhs3[kh], w_ref[rj * 3 + kh],
                                preferred_element_type=f32)
                    a = t if a is None else a + t
                acc = a if acc is None else jnp.maximum(acc, a)
        return jnp.maximum(acc + bias, 0.0)      # f32 (7*Bt, 14*Cout)

    # ---- stage 1: conv1 + relu + pool, split into even / odd pooled rows ----
    b1 = b1_ref[...]
    y1e = conv_relu_pool((x0a, x1a, x2a), (x1a, x2a, x3a), wb1_ref, b1)
    y1o = conv_relu_pool((x2a, x3a, x0b), (x3a, x0b, x1b), wb1_ref, b1)

    # ---- stage 2 lhs slabs: zero-padded stage-2 input rows by row parity ----
    # Only batch-tile-aligned shifts / concats are needed (Bt rows at a time).
    zeros_row = jnp.zeros((bt, y1e.shape[-1]), f32)
    pe2_head = jnp.concatenate([zeros_row, y1o[:6 * bt]], axis=0).astype(bf16)
    po2_tail = jnp.concatenate([y1e[bt:], zeros_row], axis=0).astype(bf16)
    y1e_c = y1e.astype(bf16)
    y1o_c = y1o.astype(bf16)

    # ---- stage 2: conv2 + relu + pool ----
    y2 = conv_relu_pool((pe2_head, y1e_c, y1o_c),
                        (y1e_c, y1o_c, po2_tail),
                        wb2_ref, b2_ref[...])     # (7*Bt, 112) f32, rows (ip2, b)

    # ---- fully connected: one (Bt, 112) x (112, 10) matmul per pooled row ----
    acc = jnp.zeros((bt, o_ref.shape[-1]), f32)
    for ip2 in range(7):
        lhs = y2[ip2 * bt:(ip2 + 1) * bt].astype(bf16)
        acc = acc + jnp.dot(lhs, wfc_ref[ip2], preferred_element_type=f32)
    o_ref[...] = (acc + bfc_ref[...]).astype(o_ref.dtype)


# ---------------- pallas_call wrapper ----------------

def cnn_fused_call(x4, packed, block_b):
    wb1, wb2, wfc, b1t, b2t, bfc = packed
    x0, x1, x2, x3 = x4
    bp = x0.shape[1]                      # padded batch
    nb = bp // block_b
    ncls = bfc.shape[-1]

    xmap = lambda i: (0, i, 0)
    wmap3 = lambda i: (0, 0, 0)
    wmap2 = lambda i: (0, 0)

    grid_spec = pltpu.PrefetchScalarGridSpec(
        num_scalar_prefetch=0,
        grid=(nb,),
        in_specs=[
            pl.BlockSpec((8, block_b, 90), xmap),
            pl.BlockSpec((8, block_b, 90), xmap),
            pl.BlockSpec((7, block_b, 90), xmap),
            pl.BlockSpec((7, block_b, 90), xmap),
            pl.BlockSpec(wb1.shape, wmap3),
            pl.BlockSpec(wb2.shape, wmap3),
            pl.BlockSpec(wfc.shape, wmap3),
            pl.BlockSpec(b1t.shape, wmap2),
            pl.BlockSpec(b2t.shape, wmap2),
            pl.BlockSpec(bfc.shape, wmap2),
        ],
        out_specs=pl.BlockSpec((block_b, ncls), lambda i: (i, 0)),
    )
    return pl.pallas_call(
        cnn_fused_kernel,
        out_shape=jax.ShapeDtypeStruct((bp, ncls), jnp.float32),
        grid_spec=grid_spec,
        compiler_params=pltpu.CompilerParams(
            dimension_semantics=("parallel",),     # batch tiles shard across TCs
            vmem_limit_bytes=32 * 1024 * 1024,     # far above the <1 MiB actually used
        ),
    )(x0, x1, x2, x3, wb1, wb2, wfc, b1t, b2t, bfc)


# ---------------- one-time parameter packing (outside the jitted forward) ----------------

def pack_params(params, mm_dtype=jnp.bfloat16):
    """PyTorch-layout params -> banded matmul weights / tiled biases."""
    w1_t, b1, w2_t, b2, wfc_t, bfc = [np.asarray(p, np.float32) for p in params]
    cout1, cin1 = w1_t.shape[0], w1_t.shape[1]      # 8, 3
    cout2, cin2 = w2_t.shape[0], w2_t.shape[1]      # 16, 8
    ncls = wfc_t.shape[0]                           # 10

    # conv1 banded weights: rows = padded col (0..29) x cin, cols = pooled col (0..13) x cout
    W1 = np.transpose(w1_t, (2, 3, 1, 0))           # (kh, kw, cin, cout)
    wb1 = np.zeros((6, 30 * cin1, 14 * cout1), np.float32)
    for rj in range(2):
        for kh in range(3):
            for jp in range(14):
                for kw in range(3):
                    jpad = 2 * jp + rj + kw
                    wb1[rj * 3 + kh,
                        jpad * cin1:(jpad + 1) * cin1,
                        jp * cout1:(jp + 1) * cout1] = W1[kh, kw]

    # conv2 banded weights: rows = unpadded col (0..13) x cin2 (zero-pad cols folded in)
    W2 = np.transpose(w2_t, (2, 3, 1, 0))
    wb2 = np.zeros((6, 14 * cin2, 7 * cout2), np.float32)
    for rj in range(2):
        for kh in range(3):
            for jp in range(7):
                for kw in range(3):
                    su = 2 * jp + rj + kw - 1
                    if 0 <= su < 14:
                        wb2[rj * 3 + kh,
                            su * cin2:(su + 1) * cin2,
                            jp * cout2:(jp + 1) * cout2] = W2[kh, kw]

    # fc weights: per pooled row ip2, rows = (jp2, c) in kernel layout, cols = classes.
    # PyTorch flatten order of (c, h, w): idx = c*49 + h*7 + w.
    wfc = np.zeros((7, 7 * cout2, ncls), np.float32)
    for ip2 in range(7):
        for jp2 in range(7):
            for c in range(cout2):
                wfc[ip2, jp2 * cout2 + c, :] = wfc_t[:, c * 49 + ip2 * 7 + jp2]

    b1t = np.tile(b1, 14)[None, :]      # (1, 112)
    b2t = np.tile(b2, 7)[None, :]       # (1, 112)
    bfc2 = bfc[None, :]                 # (1, 10)
    return (jnp.asarray(wb1, mm_dtype), jnp.asarray(wb2, mm_dtype),
            jnp.asarray(wfc, mm_dtype), jnp.asarray(b1t, jnp.float32),
            jnp.asarray(b2t, jnp.float32), jnp.asarray(bfc2, jnp.float32))


# ---------------- input prep (cheap XLA glue) ----------------

def _prep_inputs(x_nchw, block_b):
    """NCHW -> padded NHWC row-slabs, deinterleaved by (padded row) mod 4."""
    b, c, h, w = x_nchw.shape                                 # (B, 3, 28, 28)
    x = jnp.transpose(x_nchw, (0, 2, 3, 1))                   # (B, 28, 28, 3)
    bp = ((b + block_b - 1) // block_b) * block_b
    if bp != b:
        x = jnp.pad(x, ((0, bp - b), (0, 0), (0, 0), (0, 0)))
    xp = jnp.pad(x, ((0, 0), (1, 1), (1, 1), (0, 0)))         # (Bp, 30, 30, 3)
    xp = xp.reshape(bp, h + 2, (w + 2) * c)                   # (Bp, 30, 90)
    slabs = []
    for r in range(4):
        a = xp[:, r::4, :]                                    # (Bp, nr, 90)
        slabs.append(jnp.transpose(a, (1, 0, 2)))             # (nr, Bp, 90), m-major
    return slabs, bp


@jax.jit
def cnn_forward(x_nchw, packed):
    b = x_nchw.shape[0]
    block_b = 8 if b <= 8 else (16 if b <= 16 else 32)
    x4, _ = _prep_inputs(x_nchw, block_b)
    out = cnn_fused_call(x4, packed, block_b)
    return out[:b]


# ---------------- synthetic params + pure-JAX reference ----------------

def init_params(key, img_channels=3, num_features=8, num_classes=10):
    k1, k2, k3, k4, k5, k6 = jax.random.split(key, 6)
    w1_t = jax.random.normal(k1, (num_features, img_channels, 3, 3), jnp.float32) * 0.1
    b1 = jax.random.normal(k2, (num_features,), jnp.float32) * 0.1
    w2_t = jax.random.normal(k3, (num_features * 2, num_features, 3, 3), jnp.float32) * 0.1
    b2 = jax.random.normal(k4, (num_features * 2,), jnp.float32) * 0.1
    wfc_t = jax.random.normal(k5, (num_classes, 7 * 7 * num_features * 2), jnp.float32) * 0.05
    bfc = jax.random.normal(k6, (num_classes,), jnp.float32) * 0.05
    return w1_t, b1, w2_t, b2, wfc_t, bfc


def ref_forward(x, params):
    """Pure-JAX reference of the PyTorch forward (for in-script verification)."""
    w1_t, b1, w2_t, b2, wfc_t, bfc = params
    dn = ('NCHW', 'OIHW', 'NCHW')
    y = jax.lax.conv_general_dilated(x, w1_t, (1, 1), 'SAME', dimension_numbers=dn)
    y = jax.nn.relu(y + b1[None, :, None, None])
    y = jax.lax.reduce_window(y, -jnp.inf, jax.lax.max, (1, 1, 2, 2), (1, 1, 2, 2), 'VALID')
    y = jax.lax.conv_general_dilated(y, w2_t, (1, 1), 'SAME', dimension_numbers=dn)
    y = jax.nn.relu(y + b2[None, :, None, None])
    y = jax.lax.reduce_window(y, -jnp.inf, jax.lax.max, (1, 1, 2, 2), (1, 1, 2, 2), 'VALID')
    y = y.reshape(y.shape[0], -1)
    return y @ wfc_t.T + bfc


if __name__ == "__main__":
    key = jax.random.PRNGKey(0)
    kx, kp = jax.random.split(key)
    # fc expects 7x7 spatial after two 2x2 pools -> input spatial must be 28x28.
    x = jax.random.normal(kx, (2, 3, 28, 28), jnp.float32)    # NCHW, like PyTorch
    params = init_params(kp)
    packed = pack_params(params)                              # one-time weight packing

    out = cnn_forward(x, packed)
    out = jax.block_until_ready(out)
    assert out.shape == (2, 10) and out.dtype == jnp.float32

    ref = ref_forward(x, params)
    # bf16 matmul operands (f32 accumulation) -> relaxed tolerance vs the f32 reference.
    np.testing.assert_allclose(np.asarray(out), np.asarray(ref), rtol=5e-2, atol=5e-2)
    print("KERNEL_OK")
</pallas_src>

<mosaic_0001>
module attributes {stable_mosaic.version = 11 : i64} {
  func.func @cnn_fused_kernel(%arg0: i32, %arg1: memref<8x8x90xf32, #tpu.memory_space<vmem>>, %arg2: memref<8x8x90xf32, #tpu.memory_space<vmem>>, %arg3: memref<7x8x90xf32, #tpu.memory_space<vmem>>, %arg4: memref<7x8x90xf32, #tpu.memory_space<vmem>>, %arg5: memref<6x90x112xbf16, #tpu.memory_space<vmem>>, %arg6: memref<6x112x112xbf16, #tpu.memory_space<vmem>>, %arg7: memref<7x112x10xbf16, #tpu.memory_space<vmem>>, %arg8: memref<1x112xf32, #tpu.memory_space<vmem>>, %arg9: memref<1x112xf32, #tpu.memory_space<vmem>>, %arg10: memref<1x10xf32, #tpu.memory_space<vmem>>, %arg11: memref<8x10xf32, #tpu.memory_space<vmem>>) attributes {dimension_semantics = [#tpu.dimension_semantics<parallel>], iteration_bounds = array<i64: 1>, scalar_prefetch = 0 : i64, scratch_operands = 0 : i64, tpu.core_type = #tpu.core_type<tc>, window_params = [{transform_indices = @transform_0, window_bounds = array<i64: 8, 8, 90>}, {transform_indices = @transform_1, window_bounds = array<i64: 8, 8, 90>}, {transform_indices = @transform_2, window_bounds = array<i64: 7, 8, 90>}, {transform_indices = @transform_3, window_bounds = array<i64: 7, 8, 90>}, {pipeline_mode = #tpu.pipeline_mode<synchronous>, transform_indices = @transform_4, window_bounds = array<i64: 6, 90, 112>}, {pipeline_mode = #tpu.pipeline_mode<synchronous>, transform_indices = @transform_5, window_bounds = array<i64: 6, 112, 112>}, {pipeline_mode = #tpu.pipeline_mode<synchronous>, transform_indices = @transform_6, window_bounds = array<i64: 7, 112, 10>}, {pipeline_mode = #tpu.pipeline_mode<synchronous>, transform_indices = @transform_7, window_bounds = array<i64: 1, 112>}, {pipeline_mode = #tpu.pipeline_mode<synchronous>, transform_indices = @transform_8, window_bounds = array<i64: 1, 112>}, {pipeline_mode = #tpu.pipeline_mode<synchronous>, transform_indices = @transform_9, window_bounds = array<i64: 1, 10>}, {transform_indices = @transform_10, window_bounds = array<i64: 8, 10>}]} {
    %c0 = arith.constant 0 : index
    %c0_0 = arith.constant 0 : index
    %c0_1 = arith.constant 0 : index
    %0 = vector.load %arg1[%c0, %c0_0, %c0_1] : memref<8x8x90xf32, #tpu.memory_space<vmem>>, vector<7x8x90xf32>
    %1 = vector.shape_cast %0 : vector<7x8x90xf32> to vector<56x90xf32>
    %2 = arith.truncf %1 : vector<56x90xf32> to vector<56x90xbf16>
    %c1 = arith.constant 1 : index
    %c0_2 = arith.constant 0 : index
    %c0_3 = arith.constant 0 : index
    %3 = vector.load %arg1[%c1, %c0_2, %c0_3] : memref<8x8x90xf32, #tpu.memory_space<vmem>>, vector<7x8x90xf32>
    %4 = vector.shape_cast %3 : vector<7x8x90xf32> to vector<56x90xf32>
    %5 = arith.truncf %4 : vector<56x90xf32> to vector<56x90xbf16>
    %c0_4 = arith.constant 0 : index
    %c0_5 = arith.constant 0 : index
    %c0_6 = arith.constant 0 : index
    %6 = vector.load %arg2[%c0_4, %c0_5, %c0_6] : memref<8x8x90xf32, #tpu.memory_space<vmem>>, vector<7x8x90xf32>
    %7 = vector.shape_cast %6 : vector<7x8x90xf32> to vector<56x90xf32>
    %8 = arith.truncf %7 : vector<56x90xf32> to vector<56x90xbf16>
    %c1_7 = arith.constant 1 : index
    %c0_8 = arith.constant 0 : index
    %c0_9 = arith.constant 0 : index
    %9 = vector.load %arg2[%c1_7, %c0_8, %c0_9] : memref<8x8x90xf32, #tpu.memory_space<vmem>>, vector<7x8x90xf32>
    %10 = vector.shape_cast %9 : vector<7x8x90xf32> to vector<56x90xf32>
    %11 = arith.truncf %10 : vector<56x90xf32> to vector<56x90xbf16>
    %c0_10 = arith.constant 0 : index
    %c0_11 = arith.constant 0 : index
    %c0_12 = arith.constant 0 : index
    %12 = vector.load %arg3[%c0_10, %c0_11, %c0_12] : memref<7x8x90xf32, #tpu.memory_space<vmem>>, vector<7x8x90xf32>
    %13 = vector.shape_cast %12 : vector<7x8x90xf32> to vector<56x90xf32>
    %14 = arith.truncf %13 : vector<56x90xf32> to vector<56x90xbf16>
    %c0_13 = arith.constant 0 : index
    %c0_14 = arith.constant 0 : index
    %c0_15 = arith.constant 0 : index
    %15 = vector.load %arg4[%c0_13, %c0_14, %c0_15] : memref<7x8x90xf32, #tpu.memory_space<vmem>>, vector<7x8x90xf32>
    %16 = vector.shape_cast %15 : vector<7x8x90xf32> to vector<56x90xf32>
    %17 = arith.truncf %16 : vector<56x90xf32> to vector<56x90xbf16>
    %c0_16 = arith.constant 0 : index
    %c0_17 = arith.constant 0 : index
    %18 = vector.load %arg8[%c0_16, %c0_17] : memref<1x112xf32, #tpu.memory_space<vmem>>, vector<1x112xf32>
    %c0_18 = arith.constant 0 : index
    %c0_19 = arith.constant 0 : index
    %c0_20 = arith.constant 0 : index
    %19 = vector.load %arg5[%c0_18, %c0_19, %c0_20] : memref<6x90x112xbf16, #tpu.memory_space<vmem>>, vector<1x90x112xbf16>
    %20 = vector.shape_cast %19 : vector<1x90x112xbf16> to vector<90x112xbf16>
    %cst = arith.constant dense<0.000000e+00> : vector<56x112xf32>
    %21 = tpu.matmul %2, %20, %cst {dimension_numbers = #tpu.dot_dimension_numbers<[1], [0], [0], [1], [0, 0, 1, 1], [], []>} : vector<56x90xbf16>, vector<90x112xbf16>, vector<56x112xf32> -> vector<56x112xf32>
    %c1_21 = arith.constant 1 : index
    %c0_22 = arith.constant 0 : index
    %c0_23 = arith.constant 0 : index
    %22 = vector.load %arg5[%c1_21, %c0_22, %c0_23] : memref<6x90x112xbf16, #tpu.memory_space<vmem>>, vector<1x90x112xbf16>
    %23 = vector.shape_cast %22 : vector<1x90x112xbf16> to vector<90x112xbf16>
    %cst_24 = arith.constant dense<0.000000e+00> : vector<56x112xf32>
    %24 = tpu.matmul %8, %23, %cst_24 {dimension_numbers = #tpu.dot_dimension_numbers<[1], [0], [0], [1], [0, 0, 1, 1], [], []>} : vector<56x90xbf16>, vector<90x112xbf16>, vector<56x112xf32> -> vector<56x112xf32>
    %25 = arith.addf %21, %24 : vector<56x112xf32>
    %c2 = arith.constant 2 : index
    %c0_25 = arith.constant 0 : index
    %c0_26 = arith.constant 0 : index
    %26 = vector.load %arg5[%c2, %c0_25, %c0_26] : memref<6x90x112xbf16, #tpu.memory_space<vmem>>, vector<1x90x112xbf16>
    %27 = vector.shape_cast %26 : vector<1x90x112xbf16> to vector<90x112xbf16>
    %cst_27 = arith.constant dense<0.000000e+00> : vector<56x112xf32>
    %28 = tpu.matmul %14, %27, %cst_27 {dimension_numbers = #tpu.dot_dimension_numbers<[1], [0], [0], [1], [0, 0, 1, 1], [], []>} : vector<56x90xbf16>, vector<90x112xbf16>, vector<56x112xf32> -> vector<56x112xf32>
    %29 = arith.addf %25, %28 : vector<56x112xf32>
    %c3 = arith.constant 3 : index
    %c0_28 = arith.constant 0 : index
    %c0_29 = arith.constant 0 : index
    %30 = vector.load %arg5[%c3, %c0_28, %c0_29] : memref<6x90x112xbf16, #tpu.memory_space<vmem>>, vector<1x90x112xbf16>
    %31 = vector.shape_cast %30 : vector<1x90x112xbf16> to vector<90x112xbf16>
    %cst_30 = arith.constant dense<0.000000e+00> : vector<56x112xf32>
    %32 = tpu.matmul %2, %31, %cst_30 {dimension_numbers = #tpu.dot_dimension_numbers<[1], [0], [0], [1], [0, 0, 1, 1], [], []>} : vector<56x90xbf16>, vector<90x112xbf16>, vector<56x112xf32> -> vector<56x112xf32>
    %c4 = arith.constant 4 : index
    %c0_31 = arith.constant 0 : index
    %c0_32 = arith.constant 0 : index
    %33 = vector.load %arg5[%c4, %c0_31, %c0_32] : memref<6x90x112xbf16, #tpu.memory_space<vmem>>, vector<1x90x112xbf16>
    %34 = vector.shape_cast %33 : vector<1x90x112xbf16> to vector<90x112xbf16>
    %cst_33 = arith.constant dense<0.000000e+00> : vector<56x112xf32>
    %35 = tpu.matmul %8, %34, %cst_33 {dimension_numbers = #tpu.dot_dimension_numbers<[1], [0], [0], [1], [0, 0, 1, 1], [], []>} : vector<56x90xbf16>, vector<90x112xbf16>, vector<56x112xf32> -> vector<56x112xf32>
    %36 = arith.addf %32, %35 : vector<56x112xf32>
    %c5 = arith.constant 5 : index
    %c0_34 = arith.constant 0 : index
    %c0_35 = arith.constant 0 : index
    %37 = vector.load %arg5[%c5, %c0_34, %c0_35] : memref<6x90x112xbf16, #tpu.memory_space<vmem>>, vector<1x90x112xbf16>
    %38 = vector.shape_cast %37 : vector<1x90x112xbf16> to vector<90x112xbf16>
    %cst_36 = arith.constant dense<0.000000e+00> : vector<56x112xf32>
    %39 = tpu.matmul %14, %38, %cst_36 {dimension_numbers = #tpu.dot_dimension_numbers<[1], [0], [0], [1], [0, 0, 1, 1], [], []>} : vector<56x90xbf16>, vector<90x112xbf16>, vector<56x112xf32> -> vector<56x112xf32>
    %40 = arith.addf %36, %39 : vector<56x112xf32>
    %41 = arith.maximumf %29, %40 : vector<56x112xf32>
    %c0_37 = arith.constant 0 : index
    %c0_38 = arith.constant 0 : index
    %c0_39 = arith.constant 0 : index
    %42 = vector.load %arg5[%c0_37, %c0_38, %c0_39] : memref<6x90x112xbf16, #tpu.memory_space<vmem>>, vector<1x90x112xbf16>
    %43 = vector.shape_cast %42 : vector<1x90x112xbf16> to vector<90x112xbf16>
    %cst_40 = arith.constant dense<0.000000e+00> : vector<56x112xf32>
    %44 = tpu.matmul %8, %43, %cst_40 {dimension_numbers = #tpu.dot_dimension_numbers<[1], [0], [0], [1], [0, 0, 1, 1], [], []>} : vector<56x90xbf16>, vector<90x112xbf16>, vector<56x112xf32> -> vector<56x112xf32>
    %c1_41 = arith.constant 1 : index
    %c0_42 = arith.constant 0 : index
    %c0_43 = arith.constant 0 : index
    %45 = vector.load %arg5[%c1_41, %c0_42, %c0_43] : memref<6x90x112xbf16, #tpu.memory_space<vmem>>, vector<1x90x112xbf16>
    %46 = vector.shape_cast %45 : vector<1x90x112xbf16> to vector<90x112xbf16>
    %cst_44 = arith.constant dense<0.000000e+00> : vector<56x112xf32>
    %47 = tpu.matmul %14, %46, %cst_44 {dimension_numbers = #tpu.dot_dimension_numbers<[1], [0], [0], [1], [0, 0, 1, 1], [], []>} : vector<56x90xbf16>, vector<90x112xbf16>, vector<56x112xf32> -> vector<56x112xf32>
    %48 = arith.addf %44, %47 : vector<56x112xf32>
    %c2_45 = arith.constant 2 : index
    %c0_46 = arith.constant 0 : index
    %c0_47 = arith.constant 0 : index
    %49 = vector.load %arg5[%c2_45, %c0_46, %c0_47] : memref<6x90x112xbf16, #tpu.memory_space<vmem>>, vector<1x90x112xbf16>
    %50 = vector.shape_cast %49 : vector<1x90x112xbf16> to vector<90x112xbf16>
    %cst_48 = arith.constant dense<0.000000e+00> : vector<56x112xf32>
    %51 = tpu.matmul %17, %50, %cst_48 {dimension_numbers = #tpu.dot_dimension_numbers<[1], [0], [0], [1], [0, 0, 1, 1], [], []>} : vector<56x90xbf16>, vector<90x112xbf16>, vector<56x112xf32> -> vector<56x112xf32>
    %52 = arith.addf %48, %51 : vector<56x112xf32>
    %53 = arith.maximumf %41, %52 : vector<56x112xf32>
    %c3_49 = arith.constant 3 : index
    %c0_50 = arith.constant 0 : index
    %c0_51 = arith.constant 0 : index
    %54 = vector.load %arg5[%c3_49, %c0_50, %c0_51] : memref<6x90x112xbf16, #tpu.memory_space<vmem>>, vector<1x90x112xbf16>
    %55 = vector.shape_cast %54 : vector<1x90x112xbf16> to vector<90x112xbf16>
    %cst_52 = arith.constant dense<0.000000e+00> : vector<56x112xf32>
    %56 = tpu.matmul %8, %55, %cst_52 {dimension_numbers = #tpu.dot_dimension_numbers<[1], [0], [0], [1], [0, 0, 1, 1], [], []>} : vector<56x90xbf16>, vector<90x112xbf16>, vector<56x112xf32> -> vector<56x112xf32>
    %c4_53 = arith.constant 4 : index
    %c0_54 = arith.constant 0 : index
    %c0_55 = arith.constant 0 : index
    %57 = vector.load %arg5[%c4_53, %c0_54, %c0_55] : memref<6x90x112xbf16, #tpu.memory_space<vmem>>, vector<1x90x112xbf16>
    %58 = vector.shape_cast %57 : vector<1x90x112xbf16> to vector<90x112xbf16>
    %cst_56 = arith.constant dense<0.000000e+00> : vector<56x112xf32>
    %59 = tpu.matmul %14, %58, %cst_56 {dimension_numbers = #tpu.dot_dimension_numbers<[1], [0], [0], [1], [0, 0, 1, 1], [], []>} : vector<56x90xbf16>, vector<90x112xbf16>, vector<56x112xf32> -> vector<56x112xf32>
    %60 = arith.addf %56, %59 : vector<56x112xf32>
    %c5_57 = arith.constant 5 : index
    %c0_58 = arith.constant 0 : index
    %c0_59 = arith.constant 0 : index
    %61 = vector.load %arg5[%c5_57, %c0_58, %c0_59] : memref<6x90x112xbf16, #tpu.memory_space<vmem>>, vector<1x90x112xbf16>
    %62 = vector.shape_cast %61 : vector<1x90x112xbf16> to vector<90x112xbf16>
    %cst_60 = arith.constant dense<0.000000e+00> : vector<56x112xf32>
    %63 = tpu.matmul %17, %62, %cst_60 {dimension_numbers = #tpu.dot_dimension_numbers<[1], [0], [0], [1], [0, 0, 1, 1], [], []>} : vector<56x90xbf16>, vector<90x112xbf16>, vector<56x112xf32> -> vector<56x112xf32>
    %64 = arith.addf %60, %63 : vector<56x112xf32>
    %65 = arith.maximumf %53, %64 : vector<56x112xf32>
    %66 = vector.broadcast %18 : vector<1x112xf32> to vector<56x112xf32>
    %67 = arith.addf %65, %66 : vector<56x112xf32>
    %cst_61 = arith.constant 0.000000e+00 : f32
    %68 = vector.broadcast %cst_61 : f32 to vector<56x112xf32>
    %69 = arith.maximumf %67, %68 : vector<56x112xf32>
    %c0_62 = arith.constant 0 : index
    %c0_63 = arith.constant 0 : index
    %c0_64 = arith.constant 0 : index
    %70 = vector.load %arg5[%c0_62, %c0_63, %c0_64] : memref<6x90x112xbf16, #tpu.memory_space<vmem>>, vector<1x90x112xbf16>
    %71 = vector.shape_cast %70 : vector<1x90x112xbf16> to vector<90x112xbf16>
    %cst_65 = arith.constant dense<0.000000e+00> : vector<56x112xf32>
    %72 = tpu.matmul %14, %71, %cst_65 {dimension_numbers = #tpu.dot_dimension_numbers<[1], [0], [0], [1], [0, 0, 1, 1], [], []>} : vector<56x90xbf16>, vector<90x112xbf16>, vector<56x112xf32> -> vector<56x112xf32>
    %c1_66 = arith.constant 1 : index
    %c0_67 = arith.constant 0 : index
    %c0_68 = arith.constant 0 : index
    %73 = vector.load %arg5[%c1_66, %c0_67, %c0_68] : memref<6x90x112xbf16, #tpu.memory_space<vmem>>, vector<1x90x112xbf16>
    %74 = vector.shape_cast %73 : vector<1x90x112xbf16> to vector<90x112xbf16>
    %cst_69 = arith.constant dense<0.000000e+00> : vector<56x112xf32>
    %75 = tpu.matmul %17, %74, %cst_69 {dimension_numbers = #tpu.dot_dimension_numbers<[1], [0], [0], [1], [0, 0, 1, 1], [], []>} : vector<56x90xbf16>, vector<90x112xbf16>, vector<56x112xf32> -> vector<56x112xf32>
    %76 = arith.addf %72, %75 : vector<56x112xf32>
    %c2_70 = arith.constant 2 : index
    %c0_71 = arith.constant 0 : index
    %c0_72 = arith.constant 0 : index
    %77 = vector.load %arg5[%c2_70, %c0_71, %c0_72] : memref<6x90x112xbf16, #tpu.memory_space<vmem>>, vector<1x90x112xbf16>
    %78 = vector.shape_cast %77 : vector<1x90x112xbf16> to vector<90x112xbf16>
    %cst_73 = arith.constant dense<0.000000e+00> : vector<56x112xf32>
    %79 = tpu.matmul %5, %78, %cst_73 {dimension_numbers = #tpu.dot_dimension_numbers<[1], [0], [0], [1], [0, 0, 1, 1], [], []>} : vector<56x90xbf16>, vector<90x112xbf16>, vector<56x112xf32> -> vector<56x112xf32>
    %80 = arith.addf %76, %79 : vector<56x112xf32>
    %c3_74 = arith.constant 3 : index
    %c0_75 = arith.constant 0 : index
    %c0_76 = arith.constant 0 : index
    %81 = vector.load %arg5[%c3_74, %c0_75, %c0_76] : memref<6x90x112xbf16, #tpu.memory_space<vmem>>, vector<1x90x112xbf16>
    %82 = vector.shape_cast %81 : vector<1x90x112xbf16> to vector<90x112xbf16>
    %cst_77 = arith.constant dense<0.000000e+00> : vector<56x112xf32>
    %83 = tpu.matmul %14, %82, %cst_77 {dimension_numbers = #tpu.dot_dimension_numbers<[1], [0], [0], [1], [0, 0, 1, 1], [], []>} : vector<56x90xbf16>, vector<90x112xbf16>, vector<56x112xf32> -> vector<56x112xf32>
    %c4_78 = arith.constant 4 : index
    %c0_79 = arith.constant 0 : index
    %c0_80 = arith.constant 0 : index
    %84 = vector.load %arg5[%c4_78, %c0_79, %c0_80] : memref<6x90x112xbf16, #tpu.memory_space<vmem>>, vector<1x90x112xbf16>
    %85 = vector.shape_cast %84 : vector<1x90x112xbf16> to vector<90x112xbf16>
    %cst_81 = arith.constant dense<0.000000e+00> : vector<56x112xf32>
    %86 = tpu.matmul %17, %85, %cst_81 {dimension_numbers = #tpu.dot_dimension_numbers<[1], [0], [0], [1], [0, 0, 1, 1], [], []>} : vector<56x90xbf16>, vector<90x112xbf16>, vector<56x112xf32> -> vector<56x112xf32>
    %87 = arith.addf %83, %86 : vector<56x112xf32>
    %c5_82 = arith.constant 5 : index
    %c0_83 = arith.constant 0 : index
    %c0_84 = arith.constant 0 : index
    %88 = vector.load %arg5[%c5_82, %c0_83, %c0_84] : memref<6x90x112xbf16, #tpu.memory_space<vmem>>, vector<1x90x112xbf16>
    %89 = vector.shape_cast %88 : vector<1x90x112xbf16> to vector<90x112xbf16>
    %cst_85 = arith.constant dense<0.000000e+00> : vector<56x112xf32>
    %90 = tpu.matmul %5, %89, %cst_85 {dimension_numbers = #tpu.dot_dimension_numbers<[1], [0], [0], [1], [0, 0, 1, 1], [], []>} : vector<56x90xbf16>, vector<90x112xbf16>, vector<56x112xf32> -> vector<56x112xf32>
    %91 = arith.addf %87, %90 : vector<56x112xf32>
    %92 = arith.maximumf %80, %91 : vector<56x112xf32>
    %c0_86 = arith.constant 0 : index
    %c0_87 = arith.constant 0 : index
    %c0_88 = arith.constant 0 : index
    %93 = vector.load %arg5[%c0_86, %c0_87, %c0_88] : memref<6x90x112xbf16, #tpu.memory_space<vmem>>, vector<1x90x112xbf16>
    %94 = vector.shape_cast %93 : vector<1x90x112xbf16> to vector<90x112xbf16>
    %cst_89 = arith.constant dense<0.000000e+00> : vector<56x112xf32>
    %95 = tpu.matmul %17, %94, %cst_89 {dimension_numbers = #tpu.dot_dimension_numbers<[1], [0], [0], [1], [0, 0, 1, 1], [], []>} : vector<56x90xbf16>, vector<90x112xbf16>, vector<56x112xf32> -> vector<56x112xf32>
    %c1_90 = arith.constant 1 : index
    %c0_91 = arith.constant 0 : index
    %c0_92 = arith.constant 0 : index
    %96 = vector.load %arg5[%c1_90, %c0_91, %c0_92] : memref<6x90x112xbf16, #tpu.memory_space<vmem>>, vector<1x90x112xbf16>
    %97 = vector.shape_cast %96 : vector<1x90x112xbf16> to vector<90x112xbf16>
    %cst_93 = arith.constant dense<0.000000e+00> : vector<56x112xf32>
    %98 = tpu.matmul %5, %97, %cst_93 {dimension_numbers = #tpu.dot_dimension_numbers<[1], [0], [0], [1], [0, 0, 1, 1], [], []>} : vector<56x90xbf16>, vector<90x112xbf16>, vector<56x112xf32> -> vector<56x112xf32>
    %99 = arith.addf %95, %98 : vector<56x112xf32>
    %c2_94 = arith.constant 2 : index
    %c0_95 = arith.constant 0 : index
    %c0_96 = arith.constant 0 : index
    %100 = vector.load %arg5[%c2_94, %c0_95, %c0_96] : memref<6x90x112xbf16, #tpu.memory_space<vmem>>, vector<1x90x112xbf16>
    %101 = vector.shape_cast %100 : vector<1x90x112xbf16> to vector<90x112xbf16>
    %cst_97 = arith.constant dense<0.000000e+00> : vector<56x112xf32>
    %102 = tpu.matmul %11, %101, %cst_97 {dimension_numbers = #tpu.dot_dimension_numbers<[1], [0], [0], [1], [0, 0, 1, 1], [], []>} : vector<56x90xbf16>, vector<90x112xbf16>, vector<56x112xf32> -> vector<56x112xf32>
    %103 = arith.addf %99, %102 : vector<56x112xf32>
    %104 = arith.maximumf %92, %103 : vector<56x112xf32>
    %c3_98 = arith.constant 3 : index
    %c0_99 = arith.constant 0 : index
    %c0_100 = arith.constant 0 : index
    %105 = vector.load %arg5[%c3_98, %c0_99, %c0_100] : memref<6x90x112xbf16, #tpu.memory_space<vmem>>, vector<1x90x112xbf16>
    %106 = vector.shape_cast %105 : vector<1x90x112xbf16> to vector<90x112xbf16>
    %cst_101 = arith.constant dense<0.000000e+00> : vector<56x112xf32>
    %107 = tpu.matmul %17, %106, %cst_101 {dimension_numbers = #tpu.dot_dimension_numbers<[1], [0], [0], [1], [0, 0, 1, 1], [], []>} : vector<56x90xbf16>, vector<90x112xbf16>, vector<56x112xf32> -> vector<56x112xf32>
    %c4_102 = arith.constant 4 : index
    %c0_103 = arith.constant 0 : index
    %c0_104 = arith.constant 0 : index
    %108 = vector.load %arg5[%c4_102, %c0_103, %c0_104] : memref<6x90x112xbf16, #tpu.memory_space<vmem>>, vector<1x90x112xbf16>
    %109 = vector.shape_cast %108 : vector<1x90x112xbf16> to vector<90x112xbf16>
    %cst_105 = arith.constant dense<0.000000e+00> : vector<56x112xf32>
    %110 = tpu.matmul %5, %109, %cst_105 {dimension_numbers = #tpu.dot_dimension_numbers<[1], [0], [0], [1], [0, 0, 1, 1], [], []>} : vector<56x90xbf16>, vector<90x112xbf16>, vector<56x112xf32> -> vector<56x112xf32>
    %111 = arith.addf %107, %110 : vector<56x112xf32>
    %c5_106 = arith.constant 5 : index
    %c0_107 = arith.constant 0 : index
    %c0_108 = arith.constant 0 : index
    %112 = vector.load %arg5[%c5_106, %c0_107, %c0_108] : memref<6x90x112xbf16, #tpu.memory_space<vmem>>, vector<1x90x112xbf16>
    %113 = vector.shape_cast %112 : vector<1x90x112xbf16> to vector<90x112xbf16>
    %cst_109 = arith.constant dense<0.000000e+00> : vector<56x112xf32>
    %114 = tpu.matmul %11, %113, %cst_109 {dimension_numbers = #tpu.dot_dimension_numbers<[1], [0], [0], [1], [0, 0, 1, 1], [], []>} : vector<56x90xbf16>, vector<90x112xbf16>, vector<56x112xf32> -> vector<56x112xf32>
    %115 = arith.addf %111, %114 : vector<56x112xf32>
    %116 = arith.maximumf %104, %115 : vector<56x112xf32>
    %117 = vector.broadcast %18 : vector<1x112xf32> to vector<56x112xf32>
    %118 = arith.addf %116, %117 : vector<56x112xf32>
    %cst_110 = arith.constant 0.000000e+00 : f32
    %119 = vector.broadcast %cst_110 : f32 to vector<56x112xf32>
    %120 = arith.maximumf %118, %119 : vector<56x112xf32>
    %cst_111 = arith.constant 0.000000e+00 : f32
    %121 = vector.broadcast %cst_111 : f32 to vector<8x112xf32>
    %122 = vector.extract_strided_slice %120 {offsets = [0, 0], sizes = [48, 112], strides = [1, 1]} : vector<56x112xf32> to vector<48x112xf32>
    %123 = tpu.concatenate %121, %122 in 0 : vector<8x112xf32>, vector<48x112xf32> -> vector<56x112xf32>
    %124 = arith.truncf %123 : vector<56x112xf32> to vector<56x112xbf16>
    %125 = vector.extract_strided_slice %69 {offsets = [8, 0], sizes = [48, 112], strides = [1, 1]} : vector<56x112xf32> to vector<48x112xf32>
    %126 = tpu.concatenate %125, %121 in 0 : vector<48x112xf32>, vector<8x112xf32> -> vector<56x112xf32>
    %127 = arith.truncf %126 : vector<56x112xf32> to vector<56x112xbf16>
    %128 = arith.truncf %69 : vector<56x112xf32> to vector<56x112xbf16>
    %129 = arith.truncf %120 : vector<56x112xf32> to vector<56x112xbf16>
    %c0_112 = arith.constant 0 : index
    %c0_113 = arith.constant 0 : index
    %130 = vector.load %arg9[%c0_112, %c0_113] : memref<1x112xf32, #tpu.memory_space<vmem>>, vector<1x112xf32>
    %c0_114 = arith.constant 0 : index
    %c0_115 = arith.constant 0 : index
    %c0_116 = arith.constant 0 : index
    %131 = vector.load %arg6[%c0_114, %c0_115, %c0_116] : memref<6x112x112xbf16, #tpu.memory_space<vmem>>, vector<1x112x112xbf16>
    %132 = vector.shape_cast %131 : vector<1x112x112xbf16> to vector<112x112xbf16>
    %cst_117 = arith.constant dense<0.000000e+00> : vector<56x112xf32>
    %133 = tpu.matmul %124, %132, %cst_117 {dimension_numbers = #tpu.dot_dimension_numbers<[1], [0], [0], [1], [0, 0, 1, 1], [], []>} : vector<56x112xbf16>, vector<112x112xbf16>, vector<56x112xf32> -> vector<56x112xf32>
    %c1_118 = arith.constant 1 : index
    %c0_119 = arith.constant 0 : index
    %c0_120 = arith.constant 0 : index
    %134 = vector.load %arg6[%c1_118, %c0_119, %c0_120] : memref<6x112x112xbf16, #tpu.memory_space<vmem>>, vector<1x112x112xbf16>
    %135 = vector.shape_cast %134 : vector<1x112x112xbf16> to vector<112x112xbf16>
    %cst_121 = arith.constant dense<0.000000e+00> : vector<56x112xf32>
    %136 = tpu.matmul %128, %135, %cst_121 {dimension_numbers = #tpu.dot_dimension_numbers<[1], [0], [0], [1], [0, 0, 1, 1], [], []>} : vector<56x112xbf16>, vector<112x112xbf16>, vector<56x112xf32> -> vector<56x112xf32>
    %137 = arith.addf %133, %136 : vector<56x112xf32>
    %c2_122 = arith.constant 2 : index
    %c0_123 = arith.constant 0 : index
    %c0_124 = arith.constant 0 : index
    %138 = vector.load %arg6[%c2_122, %c0_123, %c0_124] : memref<6x112x112xbf16, #tpu.memory_space<vmem>>, vector<1x112x112xbf16>
    %139 = vector.shape_cast %138 : vector<1x112x112xbf16> to vector<112x112xbf16>
    %cst_125 = arith.constant dense<0.000000e+00> : vector<56x112xf32>
    %140 = tpu.matmul %129, %139, %cst_125 {dimension_numbers = #tpu.dot_dimension_numbers<[1], [0], [0], [1], [0, 0, 1, 1], [], []>} : vector<56x112xbf16>, vector<112x112xbf16>, vector<56x112xf32> -> vector<56x112xf32>
    %141 = arith.addf %137, %140 : vector<56x112xf32>
    %c3_126 = arith.constant 3 : index
    %c0_127 = arith.constant 0 : index
    %c0_128 = arith.constant 0 : index
    %142 = vector.load %arg6[%c3_126, %c0_127, %c0_128] : memref<6x112x112xbf16, #tpu.memory_space<vmem>>, vector<1x112x112xbf16>
    %143 = vector.shape_cast %142 : vector<1x112x112xbf16> to vector<112x112xbf16>
    %cst_129 = arith.constant dense<0.000000e+00> : vector<56x112xf32>
    %144 = tpu.matmul %124, %143, %cst_129 {dimension_numbers = #tpu.dot_dimension_numbers<[1], [0], [0], [1], [0, 0, 1, 1], [], []>} : vector<56x112xbf16>, vector<112x112xbf16>, vector<56x112xf32> -> vector<56x112xf32>
    %c4_130 = arith.constant 4 : index
    %c0_131 = arith.constant 0 : index
    %c0_132 = arith.constant 0 : index
    %145 = vector.load %arg6[%c4_130, %c0_131, %c0_132] : memref<6x112x112xbf16, #tpu.memory_space<vmem>>, vector<1x112x112xbf16>
    %146 = vector.shape_cast %145 : vector<1x112x112xbf16> to vector<112x112xbf16>
    %cst_133 = arith.constant dense<0.000000e+00> : vector<56x112xf32>
    %147 = tpu.matmul %128, %146, %cst_133 {dimension_numbers = #tpu.dot_dimension_numbers<[1], [0], [0], [1], [0, 0, 1, 1], [], []>} : vector<56x112xbf16>, vector<112x112xbf16>, vector<56x112xf32> -> vector<56x112xf32>
    %148 = arith.addf %144, %147 : vector<56x112xf32>
    %c5_134 = arith.constant 5 : index
    %c0_135 = arith.constant 0 : index
    %c0_136 = arith.constant 0 : index
    %149 = vector.load %arg6[%c5_134, %c0_135, %c0_136] : memref<6x112x112xbf16, #tpu.memory_space<vmem>>, vector<1x112x112xbf16>
    %150 = vector.shape_cast %149 : vector<1x112x112xbf16> to vector<112x112xbf16>
    %cst_137 = arith.constant dense<0.000000e+00> : vector<56x112xf32>
    %151 = tpu.matmul %129, %150, %cst_137 {dimension_numbers = #tpu.dot_dimension_numbers<[1], [0], [0], [1], [0, 0, 1, 1], [], []>} : vector<56x112xbf16>, vector<112x112xbf16>, vector<56x112xf32> -> vector<56x112xf32>
    %152 = arith.addf %148, %151 : vector<56x112xf32>
    %153 = arith.maximumf %141, %152 : vector<56x112xf32>
    %c0_138 = arith.constant 0 : index
    %c0_139 = arith.constant 0 : index
    %c0_140 = arith.constant 0 : index
    %154 = vector.load %arg6[%c0_138, %c0_139, %c0_140] : memref<6x112x112xbf16, #tpu.memory_space<vmem>>, vector<1x112x112xbf16>
    %155 = vector.shape_cast %154 : vector<1x112x112xbf16> to vector<112x112xbf16>
    %cst_141 = arith.constant dense<0.000000e+00> : vector<56x112xf32>
    %156 = tpu.matmul %128, %155, %cst_141 {dimension_numbers = #tpu.dot_dimension_numbers<[1], [0], [0], [1], [0, 0, 1, 1], [], []>} : vector<56x112xbf16>, vector<112x112xbf16>, vector<56x112xf32> -> vector<56x112xf32>
    %c1_142 = arith.constant 1 : index
    %c0_143 = arith.constant 0 : index
    %c0_144 = arith.constant 0 : index
    %157 = vector.load %arg6[%c1_142, %c0_143, %c0_144] : memref<6x112x112xbf16, #tpu.memory_space<vmem>>, vector<1x112x112xbf16>
    %158 = vector.shape_cast %157 : vector<1x112x112xbf16> to vector<112x112xbf16>
    %cst_145 = arith.constant dense<0.000000e+00> : vector<56x112xf32>
    %159 = tpu.matmul %129, %158, %cst_145 {dimension_numbers = #tpu.dot_dimension_numbers<[1], [0], [0], [1], [0, 0, 1, 1], [], []>} : vector<56x112xbf16>, vector<112x112xbf16>, vector<56x112xf32> -> vector<56x112xf32>
    %160 = arith.addf %156, %159 : vector<56x112xf32>
    %c2_146 = arith.constant 2 : index
    %c0_147 = arith.constant 0 : index
    %c0_148 = arith.constant 0 : index
    %161 = vector.load %arg6[%c2_146, %c0_147, %c0_148] : memref<6x112x112xbf16, #tpu.memory_space<vmem>>, vector<1x112x112xbf16>
    %162 = vector.shape_cast %161 : vector<1x112x112xbf16> to vector<112x112xbf16>
    %cst_149 = arith.constant dense<0.000000e+00> : vector<56x112xf32>
    %163 = tpu.matmul %127, %162, %cst_149 {dimension_numbers = #tpu.dot_dimension_numbers<[1], [0], [0], [1], [0, 0, 1, 1], [], []>} : vector<56x112xbf16>, vector<112x112xbf16>, vector<56x112xf32> -> vector<56x112xf32>
    %164 = arith.addf %160, %163 : vector<56x112xf32>
    %165 = arith.maximumf %153, %164 : vector<56x112xf32>
    %c3_150 = arith.constant 3 : index
    %c0_151 = arith.constant 0 : index
    %c0_152 = arith.constant 0 : index
    %166 = vector.load %arg6[%c3_150, %c0_151, %c0_152] : memref<6x112x112xbf16, #tpu.memory_space<vmem>>, vector<1x112x112xbf16>
    %167 = vector.shape_cast %166 : vector<1x112x112xbf16> to vector<112x112xbf16>
    %cst_153 = arith.constant dense<0.000000e+00> : vector<56x112xf32>
    %168 = tpu.matmul %128, %167, %cst_153 {dimension_numbers = #tpu.dot_dimension_numbers<[1], [0], [0], [1], [0, 0, 1, 1], [], []>} : vector<56x112xbf16>, vector<112x112xbf16>, vector<56x112xf32> -> vector<56x112xf32>
    %c4_154 = arith.constant 4 : index
    %c0_155 = arith.constant 0 : index
    %c0_156 = arith.constant 0 : index
    %169 = vector.load %arg6[%c4_154, %c0_155, %c0_156] : memref<6x112x112xbf16, #tpu.memory_space<vmem>>, vector<1x112x112xbf16>
    %170 = vector.shape_cast %169 : vector<1x112x112xbf16> to vector<112x112xbf16>
    %cst_157 = arith.constant dense<0.000000e+00> : vector<56x112xf32>
    %171 = tpu.matmul %129, %170, %cst_157 {dimension_numbers = #tpu.dot_dimension_numbers<[1], [0], [0], [1], [0, 0, 1, 1], [], []>} : vector<56x112xbf16>, vector<112x112xbf16>, vector<56x112xf32> -> vector<56x112xf32>
    %172 = arith.addf %168, %171 : vector<56x112xf32>
    %c5_158 = arith.constant 5 : index
    %c0_159 = arith.constant 0 : index
    %c0_160 = arith.constant 0 : index
    %173 = vector.load %arg6[%c5_158, %c0_159, %c0_160] : memref<6x112x112xbf16, #tpu.memory_space<vmem>>, vector<1x112x112xbf16>
    %174 = vector.shape_cast %173 : vector<1x112x112xbf16> to vector<112x112xbf16>
    %cst_161 = arith.constant dense<0.000000e+00> : vector<56x112xf32>
    %175 = tpu.matmul %127, %174, %cst_161 {dimension_numbers = #tpu.dot_dimension_numbers<[1], [0], [0], [1], [0, 0, 1, 1], [], []>} : vector<56x112xbf16>, vector<112x112xbf16>, vector<56x112xf32> -> vector<56x112xf32>
    %176 = arith.addf %172, %175 : vector<56x112xf32>
    %177 = arith.maximumf %165, %176 : vector<56x112xf32>
    %178 = vector.broadcast %130 : vector<1x112xf32> to vector<56x112xf32>
    %179 = arith.addf %177, %178 : vector<56x112xf32>
    %cst_162 = arith.constant 0.000000e+00 : f32
    %180 = vector.broadcast %cst_162 : f32 to vector<56x112xf32>
    %181 = arith.maximumf %179, %180 : vector<56x112xf32>
    %cst_163 = arith.constant 0.000000e+00 : f32
    %182 = vector.broadcast %cst_163 : f32 to vector<8x10xf32>
    %183 = vector.extract_strided_slice %181 {offsets = [0, 0], sizes = [8, 112], strides = [1, 1]} : vector<56x112xf32> to vector<8x112xf32>
    %184 = arith.truncf %183 : vector<8x112xf32> to vector<8x112xbf16>
    %c0_164 = arith.constant 0 : index
    %c0_165 = arith.constant 0 : index
    %c0_166 = arith.constant 0 : index
    %185 = vector.load %arg7[%c0_164, %c0_165, %c0_166] : memref<7x112x10xbf16, #tpu.memory_space<vmem>>, vector<1x112x10xbf16>
    %186 = vector.shape_cast %185 : vector<1x112x10xbf16> to vector<112x10xbf16>
    %cst_167 = arith.constant dense<0.000000e+00> : vector<8x10xf32>
    %187 = tpu.matmul %184, %186, %cst_167 {dimension_numbers = #tpu.dot_dimension_numbers<[1], [0], [0], [1], [0, 0, 1, 1], [], []>} : vector<8x112xbf16>, vector<112x10xbf16>, vector<8x10xf32> -> vector<8x10xf32>
    %188 = arith.addf %182, %187 : vector<8x10xf32>
    %189 = vector.extract_strided_slice %181 {offsets = [8, 0], sizes = [8, 112], strides = [1, 1]} : vector<56x112xf32> to vector<8x112xf32>
    %190 = arith.truncf %189 : vector<8x112xf32> to vector<8x112xbf16>
    %c1_168 = arith.constant 1 : index
    %c0_169 = arith.constant 0 : index
    %c0_170 = arith.constant 0 : index
    %191 = vector.load %arg7[%c1_168, %c0_169, %c0_170] : memref<7x112x10xbf16, #tpu.memory_space<vmem>>, vector<1x112x10xbf16>
    %192 = vector.shape_cast %191 : vector<1x112x10xbf16> to vector<112x10xbf16>
    %cst_171 = arith.constant dense<0.000000e+00> : vector<8x10xf32>
    %193 = tpu.matmul %190, %192, %cst_171 {dimension_numbers = #tpu.dot_dimension_numbers<[1], [0], [0], [1], [0, 0, 1, 1], [], []>} : vector<8x112xbf16>, vector<112x10xbf16>, vector<8x10xf32> -> vector<8x10xf32>
    %194 = arith.addf %188, %193 : vector<8x10xf32>
    %195 = vector.extract_strided_slice %181 {offsets = [16, 0], sizes = [8, 112], strides = [1, 1]} : vector<56x112xf32> to vector<8x112xf32>
    %196 = arith.truncf %195 : vector<8x112xf32> to vector<8x112xbf16>
    %c2_172 = arith.constant 2 : index
    %c0_173 = arith.constant 0 : index
    %c0_174 = arith.constant 0 : index
    %197 = vector.load %arg7[%c2_172, %c0_173, %c0_174] : memref<7x112x10xbf16, #tpu.memory_space<vmem>>, vector<1x112x10xbf16>
    %198 = vector.shape_cast %197 : vector<1x112x10xbf16> to vector<112x10xbf16>
    %cst_175 = arith.constant dense<0.000000e+00> : vector<8x10xf32>
    %199 = tpu.matmul %196, %198, %cst_175 {dimension_numbers = #tpu.dot_dimension_numbers<[1], [0], [0], [1], [0, 0, 1, 1], [], []>} : vector<8x112xbf16>, vector<112x10xbf16>, vector<8x10xf32> -> vector<8x10xf32>
    %200 = arith.addf %194, %199 : vector<8x10xf32>
    %201 = vector.extract_strided_slice %181 {offsets = [24, 0], sizes = [8, 112], strides = [1, 1]} : vector<56x112xf32> to vector<8x112xf32>
    %202 = arith.truncf %201 : vector<8x112xf32> to vector<8x112xbf16>
    %c3_176 = arith.constant 3 : index
    %c0_177 = arith.constant 0 : index
    %c0_178 = arith.constant 0 : index
    %203 = vector.load %arg7[%c3_176, %c0_177, %c0_178] : memref<7x112x10xbf16, #tpu.memory_space<vmem>>, vector<1x112x10xbf16>
    %204 = vector.shape_cast %203 : vector<1x112x10xbf16> to vector<112x10xbf16>
    %cst_179 = arith.constant dense<0.000000e+00> : vector<8x10xf32>
    %205 = tpu.matmul %202, %204, %cst_179 {dimension_numbers = #tpu.dot_dimension_numbers<[1], [0], [0], [1], [0, 0, 1, 1], [], []>} : vector<8x112xbf16>, vector<112x10xbf16>, vector<8x10xf32> -> vector<8x10xf32>
    %206 = arith.addf %200, %205 : vector<8x10xf32>
    %207 = vector.extract_strided_slice %181 {offsets = [32, 0], sizes = [8, 112], strides = [1, 1]} : vector<56x112xf32> to vector<8x112xf32>
    %208 = arith.truncf %207 : vector<8x112xf32> to vector<8x112xbf16>
    %c4_180 = arith.constant 4 : index
    %c0_181 = arith.constant 0 : index
    %c0_182 = arith.constant 0 : index
    %209 = vector.load %arg7[%c4_180, %c0_181, %c0_182] : memref<7x112x10xbf16, #tpu.memory_space<vmem>>, vector<1x112x10xbf16>
    %210 = vector.shape_cast %209 : vector<1x112x10xbf16> to vector<112x10xbf16>
    %cst_183 = arith.constant dense<0.000000e+00> : vector<8x10xf32>
    %211 = tpu.matmul %208, %210, %cst_183 {dimension_numbers = #tpu.dot_dimension_numbers<[1], [0], [0], [1], [0, 0, 1, 1], [], []>} : vector<8x112xbf16>, vector<112x10xbf16>, vector<8x10xf32> -> vector<8x10xf32>
    %212 = arith.addf %206, %211 : vector<8x10xf32>
    %213 = vector.extract_strided_slice %181 {offsets = [40, 0], sizes = [8, 112], strides = [1, 1]} : vector<56x112xf32> to vector<8x112xf32>
    %214 = arith.truncf %213 : vector<8x112xf32> to vector<8x112xbf16>
    %c5_184 = arith.constant 5 : index
    %c0_185 = arith.constant 0 : index
    %c0_186 = arith.constant 0 : index
    %215 = vector.load %arg7[%c5_184, %c0_185, %c0_186] : memref<7x112x10xbf16, #tpu.memory_space<vmem>>, vector<1x112x10xbf16>
    %216 = vector.shape_cast %215 : vector<1x112x10xbf16> to vector<112x10xbf16>
    %cst_187 = arith.constant dense<0.000000e+00> : vector<8x10xf32>
    %217 = tpu.matmul %214, %216, %cst_187 {dimension_numbers = #tpu.dot_dimension_numbers<[1], [0], [0], [1], [0, 0, 1, 1], [], []>} : vector<8x112xbf16>, vector<112x10xbf16>, vector<8x10xf32> -> vector<8x10xf32>
    %218 = arith.addf %212, %217 : vector<8x10xf32>
    %219 = vector.extract_strided_slice %181 {offsets = [48, 0], sizes = [8, 112], strides = [1, 1]} : vector<56x112xf32> to vector<8x112xf32>
    %220 = arith.truncf %219 : vector<8x112xf32> to vector<8x112xbf16>
    %c6 = arith.constant 6 : index
    %c0_188 = arith.constant 0 : index
    %c0_189 = arith.constant 0 : index
    %221 = vector.load %arg7[%c6, %c0_188, %c0_189] : memref<7x112x10xbf16, #tpu.memory_space<vmem>>, vector<1x112x10xbf16>
    %222 = vector.shape_cast %221 : vector<1x112x10xbf16> to vector<112x10xbf16>
    %cst_190 = arith.constant dense<0.000000e+00> : vector<8x10xf32>
    %223 = tpu.matmul %220, %222, %cst_190 {dimension_numbers = #tpu.dot_dimension_numbers<[1], [0], [0], [1], [0, 0, 1, 1], [], []>} : vector<8x112xbf16>, vector<112x10xbf16>, vector<8x10xf32> -> vector<8x10xf32>
    %224 = arith.addf %218, %223 : vector<8x10xf32>
    %c0_191 = arith.constant 0 : index
    %c0_192 = arith.constant 0 : index
    %225 = vector.load %arg10[%c0_191, %c0_192] : memref<1x10xf32, #tpu.memory_space<vmem>>, vector<1x10xf32>
    %226 = vector.broadcast %225 : vector<1x10xf32> to vector<8x10xf32>
    %227 = arith.addf %224, %226 : vector<8x10xf32>
    %c0_193 = arith.constant 0 : index
    %c0_194 = arith.constant 0 : index
    %228 = vector.load %arg11[%c0_193, %c0_194] : memref<8x10xf32, #tpu.memory_space<vmem>>, vector<8x10xf32>
    tpu.vector_store %arg11[%c0_193, %c0_194], %227 {strides = array<i32>} : memref<8x10xf32, #tpu.memory_space<vmem>>, vector<8x10xf32>,
    return
  }
  func.func @transform_0(%arg0: i32) -> (i32, i32, i32) {
    %c0_i32 = arith.constant 0 : i32
    %c0_i32_0 = arith.constant 0 : i32
    %c0_i32_1 = arith.constant 0 : i32
    return %c0_i32, %arg0, %c0_i32_0 : i32, i32, i32
  }
  func.func @transform_1(%arg0: i32) -> (i32, i32, i32) {
    %c0_i32 = arith.constant 0 : i32
    %c0_i32_0 = arith.constant 0 : i32
    %c0_i32_1 = arith.constant 0 : i32
    return %c0_i32, %arg0, %c0_i32_0 : i32, i32, i32
  }
  func.func @transform_2(%arg0: i32) -> (i32, i32, i32) {
    %c0_i32 = arith.constant 0 : i32
    %c0_i32_0 = arith.constant 0 : i32
    %c0_i32_1 = arith.constant 0 : i32
    return %c0_i32, %arg0, %c0_i32_0 : i32, i32, i32
  }
  func.func @transform_3(%arg0: i32) -> (i32, i32, i32) {
    %c0_i32 = arith.constant 0 : i32
    %c0_i32_0 = arith.constant 0 : i32
    %c0_i32_1 = arith.constant 0 : i32
    return %c0_i32, %arg0, %c0_i32_0 : i32, i32, i32
  }
  func.func @transform_4(%arg0: i32) -> (i32, i32, i32) {
    %c0_i32 = arith.constant 0 : i32
    %c0_i32_0 = arith.constant 0 : i32
    %c0_i32_1 = arith.constant 0 : i32
    %c0_i32_2 = arith.constant 0 : i32
    return %c0_i32, %c0_i32_0, %c0_i32_1 : i32, i32, i32
  }
  func.func @transform_5(%arg0: i32) -> (i32, i32, i32) {
    %c0_i32 = arith.constant 0 : i32
    %c0_i32_0 = arith.constant 0 : i32
    %c0_i32_1 = arith.constant 0 : i32
    %c0_i32_2 = arith.constant 0 : i32
    return %c0_i32, %c0_i32_0, %c0_i32_1 : i32, i32, i32
  }
  func.func @transform_6(%arg0: i32) -> (i32, i32, i32) {
    %c0_i32 = arith.constant 0 : i32
    %c0_i32_0 = arith.constant 0 : i32
    %c0_i32_1 = arith.constant 0 : i32
    %c0_i32_2 = arith.constant 0 : i32
    return %c0_i32, %c0_i32_0, %c0_i32_1 : i32, i32, i32
  }
  func.func @transform_7(%arg0: i32) -> (i32, i32) {
    %c0_i32 = arith.constant 0 : i32
    %c0_i32_0 = arith.constant 0 : i32
    %c0_i32_1 = arith.constant 0 : i32
    return %c0_i32, %c0_i32_0 : i32, i32
  }
  func.func @transform_8(%arg0: i32) -> (i32, i32) {
    %c0_i32 = arith.constant 0 : i32
    %c0_i32_0 = arith.constant 0 : i32
    %c0_i32_1 = arith.constant 0 : i32
    return %c0_i32, %c0_i32_0 : i32, i32
  }
  func.func @transform_9(%arg0: i32) -> (i32, i32) {
    %c0_i32 = arith.constant 0 : i32
    %c0_i32_0 = arith.constant 0 : i32
    %c0_i32_1 = arith.constant 0 : i32
    return %c0_i32, %c0_i32_0 : i32, i32
  }
  func.func @transform_10(%arg0: i32) -> (i32, i32) {
    %c0_i32 = arith.constant 0 : i32
    %c0_i32_0 = arith.constant 0 : i32
    return %arg0, %c0_i32 : i32, i32
  }
}

</mosaic_0001>

<llo_original>
// kernel: cnn_forward.1
$region0: #{cnn_forward.1}
  #allocation0 [shape = 'u32[]', space=smem, size = 0x4, offset = 0x4, fixed_abs, tag = 'smem constant byte address 0x4 - core index']
  #allocation1 [shape = 'u32[144,128]{1,0:T(1,128)}', space=vmem, size = 0x12000, scoped, tag = 'internal scratch']
  %s0 = inlined_call_operand.vmem [shape: f32[8,8,90], index: 0, kind: input, shape index: {}]
  %s1 = inlined_call_operand.vmem [shape: f32[8,8,90], index: 1, kind: input, shape index: {}]
  %s2 = inlined_call_operand.vmem [shape: f32[7,8,90], index: 2, kind: input, shape index: {}]
  %s3 = inlined_call_operand.vmem [shape: f32[7,8,90], index: 3, kind: input, shape index: {}]
  %s4 = inlined_call_operand.vmem [shape: bf16[6,90,112], index: 4, kind: input, shape index: {}]
  %s5 = inlined_call_operand.vmem [shape: bf16[6,112,112], index: 5, kind: input, shape index: {}]
  %s6 = inlined_call_operand.vmem [shape: bf16[7,112,10], index: 6, kind: input, shape index: {}]
  %s7 = inlined_call_operand.vmem [shape: f32[1,112], index: 7, kind: input, shape index: {}]
  %s8 = inlined_call_operand.vmem [shape: f32[1,112], index: 8, kind: input, shape index: {}]
  %s9 = inlined_call_operand.vmem [shape: f32[1,10], index: 9, kind: input, shape index: {}]
  %s10 = inlined_call_operand.vmem [shape: f32[8,10], index: 10, kind: output, shape index: {}]
  %s11 = sld [smem:[#allocation0]]
  $region50: #{cnn_forward.1} parent=0
    _
  %s13 = ssub.s32 1, %s11
  %s14 = scalar_select 0, %s13, %s11
  // Predicated region
  $region2: #{cnn_forward.1} parent=0 // pred_check
    _
  $region3: #{cnn_forward.1} parent=0 // pred_check_branch
    %16 = sbr.rel (0) target = $region5
  $region4: #{cnn_forward.1} parent=0 // pred_region
    _
  $region5: #{cnn_forward.1} parent=0 // pred_fallthru
    _
  // Predicated region
  $region6: #{cnn_forward.1} parent=0 // pred_check
    _
  $region7: #{cnn_forward.1} parent=0 // pred_check_branch
    %18 = sbr.rel (0) target = $region9
  $region8: #{cnn_forward.1} parent=0 // pred_region
    _
  $region9: #{cnn_forward.1} parent=0 // pred_fallthru
    _
  // Predicated region
  $region10: #{cnn_forward.1} parent=0 // pred_check
    _
  $region11: #{cnn_forward.1} parent=0 // pred_check_branch
    %20 = sbr.rel (0) target = $region13
  $region12: #{cnn_forward.1} parent=0 // pred_region
    _
  $region13: #{cnn_forward.1} parent=0 // pred_fallthru
    _
  // Predicated region
  $region14: #{cnn_forward.1} parent=0 // pred_check
    _
  $region15: #{cnn_forward.1} parent=0 // pred_check_branch
    %22 = sbr.rel (0) target = $region17
  $region16: #{cnn_forward.1} parent=0 // pred_region
    _
  $region17: #{cnn_forward.1} parent=0 // pred_fallthru
    _
  // Predicated region
  $region18: #{cnn_forward.1} parent=0 // pred_check
    _
  $region19: #{cnn_forward.1} parent=0 // pred_check_branch
    %24 = sbr.rel (0) target = $region21
  $region20: #{cnn_forward.1} parent=0 // pred_region
    _
  $region21: #{cnn_forward.1} parent=0 // pred_fallthru
    _
  // Predicated region
  $region22: #{cnn_forward.1} parent=0 // pred_check
    _
  $region23: #{cnn_forward.1} parent=0 // pred_check_branch
    %26 = sbr.rel (0) target = $region25
  $region24: #{cnn_forward.1} parent=0 // pred_region
    _
  $region25: #{cnn_forward.1} parent=0 // pred_fallthru
    _
  // Predicated region
  $region26: #{cnn_forward.1} parent=0 // pred_check
    _
  $region27: #{cnn_forward.1} parent=0 // pred_check_branch
    %28 = sbr.rel (0) target = $region29
  $region28: #{cnn_forward.1} parent=0 // pred_region
    _
  $region29: #{cnn_forward.1} parent=0 // pred_fallthru
    _
  // Predicated region
  $region30: #{cnn_forward.1} parent=0 // pred_check
    _
  $region31: #{cnn_forward.1} parent=0 // pred_check_branch
    %30 = sbr.rel (0) target = $region33
  $region32: #{cnn_forward.1} parent=0 // pred_region
    _
  $region33: #{cnn_forward.1} parent=0 // pred_fallthru
    _
  // Predicated region
  $region34: #{cnn_forward.1} parent=0 // pred_check
    _
  $region35: #{cnn_forward.1} parent=0 // pred_check_branch
    %32 = sbr.rel (0) target = $region37
  $region36: #{cnn_forward.1} parent=0 // pred_region
    _
  $region37: #{cnn_forward.1} parent=0 // pred_fallthru
    _
  // Predicated region
  $region38: #{cnn_forward.1} parent=0 // pred_check
    _
  $region39: #{cnn_forward.1} parent=0 // pred_check_branch
    %34 = sbr.rel (0) target = $region41
  $region40: #{cnn_forward.1} parent=0 // pred_region
    _
  $region41: #{cnn_forward.1} parent=0 // pred_fallthru
    _
  %v36 = vld [vmem:[%s0] sm:$0xff]
  %v37 = vld [vmem:[%s0 + $0x8] sm:$0xff]
  %v38 = vld [vmem:[%s0 + $0x10] sm:$0xff]
  %v39 = vld [vmem:[%s0 + $0x18] sm:$0xff]
  %v40 = vld [vmem:[%s0 + $0x20] sm:$0xff]
  %v41 = vld [vmem:[%s0 + $0x28] sm:$0xff]
  %v42 = vld [vmem:[%s0 + $0x30] sm:$0xff]
  %v43 = vpack.c.bf16 %v37, %v36
  %v44 = vpack.c.bf16 %v39, %v38
  %v45 = vpack.c.bf16 %v41, %v40
  %v46 = vpack.c.bf16 %v42, %v42
  %s47 = scalar_lea.vmem %s0, 8
  %v48 = vld [vmem:[%s47] sm:$0xff]
  %v49 = vld [vmem:[%s47 + $0x8] sm:$0xff]
  %v50 = vld [vmem:[%s47 + $0x10] sm:$0xff]
  %v51 = vld [vmem:[%s47 + $0x18] sm:$0xff]
  %v52 = vld [vmem:[%s47 + $0x20] sm:$0xff]
  %v53 = vld [vmem:[%s47 + $0x28] sm:$0xff]
  %v54 = vld [vmem:[%s47 + $0x30] sm:$0xff]
  %v55 = vpack.c.bf16 %v49, %v48
  %v56 = vpack.c.bf16 %v51, %v50
  %v57 = vpack.c.bf16 %v53, %v52
  %v58 = vpack.c.bf16 %v54, %v54
  %v59 = vld [vmem:[%s1] sm:$0xff]
  %v60 = vld [vmem:[%s1 + $0x8] sm:$0xff]
  %v61 = vld [vmem:[%s1 + $0x10] sm:$0xff]
  %v62 = vld [vmem:[%s1 + $0x18] sm:$0xff]
  %v63 = vld [vmem:[%s1 + $0x20] sm:$0xff]
  %v64 = vld [vmem:[%s1 + $0x28] sm:$0xff]
  %v65 = vld [vmem:[%s1 + $0x30] sm:$0xff]
  %v66 = vpack.c.bf16 %v60, %v59
  %v67 = vpack.c.bf16 %v62, %v61
  %v68 = vpack.c.bf16 %v64, %v63
  %v69 = vpack.c.bf16 %v65, %v65
  %s70 = scalar_lea.vmem %s1, 8
  %v71 = vld [vmem:[%s70] sm:$0xff]
  %v72 = vld [vmem:[%s70 + $0x8] sm:$0xff]
  %v73 = vld [vmem:[%s70 + $0x10] sm:$0xff]
  %v74 = vld [vmem:[%s70 + $0x18] sm:$0xff]
  %v75 = vld [vmem:[%s70 + $0x20] sm:$0xff]
  %v76 = vld [vmem:[%s70 + $0x28] sm:$0xff]
  %v77 = vld [vmem:[%s70 + $0x30] sm:$0xff]
  %v78 = vpack.c.bf16 %v72, %v71
  %v79 = vpack.c.bf16 %v74, %v73
  %v80 = vpack.c.bf16 %v76, %v75
  %v81 = vpack.c.bf16 %v77, %v77
  %v82 = vld [vmem:[%s2] sm:$0xff]
  %v83 = vld [vmem:[%s2 + $0x8] sm:$0xff]
  %v84 = vld [vmem:[%s2 + $0x10] sm:$0xff]
  %v85 = vld [vmem:[%s2 + $0x18] sm:$0xff]
  %v86 = vld [vmem:[%s2 + $0x20] sm:$0xff]
  %v87 = vld [vmem:[%s2 + $0x28] sm:$0xff]
  %v88 = vld [vmem:[%s2 + $0x30] sm:$0xff]
  %v89 = vpack.c.bf16 %v83, %v82
  %v90 = vpack.c.bf16 %v85, %v84
  %v91 = vpack.c.bf16 %v87, %v86
  %v92 = vpack.c.bf16 %v88, %v88
  %v93 = vld [vmem:[%s3] sm:$0xff]
  %v94 = vld [vmem:[%s3 + $0x8] sm:$0xff]
  %v95 = vld [vmem:[%s3 + $0x10] sm:$0xff]
  %v96 = vld [vmem:[%s3 + $0x18] sm:$0xff]
  %v97 = vld [vmem:[%s3 + $0x20] sm:$0xff]
  %v98 = vld [vmem:[%s3 + $0x28] sm:$0xff]
  %v99 = vld [vmem:[%s3 + $0x30] sm:$0xff]
  %v100 = vpack.c.bf16 %v94, %v93
  %v101 = vpack.c.bf16 %v96, %v95
  %v102 = vpack.c.bf16 %v98, %v97
  %v103 = vpack.c.bf16 %v99, %v99
  %v104 = vld [vmem:[%s7] sm:$0x1]
  %v105 = vld [vmem:[%s4] sm:$0xf]
  %v106 = vld [vmem:[%s4 + $0x4] sm:$0xf]
  %v107 = vld [vmem:[%s4 + $0x8] sm:$0xf]
  %v108 = vld [vmem:[%s4 + $0xc] sm:$0xf]
  %v109 = vld [vmem:[%s4 + $0x10] sm:$0xf]
  %v110 = vld [vmem:[%s4 + $0x14] sm:$0xf]
  %v111 = vld [vmem:[%s4 + $0x18] sm:$0xf]
  %v112 = vld [vmem:[%s4 + $0x1c] sm:$0xf]
  %v113 = vld [vmem:[%s4 + $0x20] sm:$0xf]
  %v114 = vld [vmem:[%s4 + $0x24] sm:$0xf]
  %v115 = vld [vmem:[%s4 + $0x28] sm:$0xf]
  %v116 = vld [vmem:[%s4 + $0x2c] sm:$0x1]
  %s117 = scalar_lea.vmem %s4, 48
  %v118 = vld [vmem:[%s117] sm:$0xf]
  %v119 = vld [vmem:[%s117 + $0x4] sm:$0xf]
  %v120 = vld [vmem:[%s117 + $0x8] sm:$0xf]
  %v121 = vld [vmem:[%s117 + $0xc] sm:$0xf]
  %v122 = vld [vmem:[%s117 + $0x10] sm:$0xf]
  %v123 = vld [vmem:[%s117 + $0x14] sm:$0xf]
  %v124 = vld [vmem:[%s117 + $0x18] sm:$0xf]
  %v125 = vld [vmem:[%s117 + $0x1c] sm:$0xf]
  %v126 = vld [vmem:[%s117 + $0x20] sm:$0xf]
  %v127 = vld [vmem:[%s117 + $0x24] sm:$0xf]
  %v128 = vld [vmem:[%s117 + $0x28] sm:$0xf]
  %v129 = vld [vmem:[%s117 + $0x2c] sm:$0x1]
  %v142 = vunpack.c.l.b16 %v118
  %v143 = vunpack.c.l.b16 %v119
  %v144 = vunpack.c.l.b16 %v120
  %v145 = vunpack.c.l.b16 %v121
  %v146 = vunpack.c.l.b16 %v122
  %v147 = vunpack.c.l.b16 %v123
  %v148 = vunpack.c.l.b16 %v124
  %v149 = vunpack.c.l.b16 %v125
  %v150 = vunpack.c.l.b16 %v126
  %v151 = vunpack.c.l.b16 %v127
  %v152 = vunpack.c.l.b16 %v128
  %v153 = vunpack.c.l.b16 %v129
  %v154 = vpack.c.b16 %v143, %v142
  %v155 = vpack.c.b16 %v145, %v144
  %v156 = vpack.c.b16 %v147, %v146
  %v157 = vpack.c.b16 %v149, %v148
  %v158 = vpack.c.b16 %v151, %v150
  %v159 = vpack.c.b16 %v153, %v152
  %vm165 = vcmask 736256
  %v167 = vsel %vm165, %v66, 0
  %v170 = vsel %vm165, %v67, 0
  %v173 = vsel %vm165, %v68, 0
  %v176 = vsel %vm165, %v69, 0
  %vm178 = vcmask 1044480
  %v180 = vsel %vm178, %v159, 0
  %182 = vmatprep.subr.bf16.mxu0 0
  %183 = vmatpush1.bf16.msra.mxu0 0
  %184 = vmatprep.subr.bf16.mxu0 0
  %185 = vmatpush1.bf16.msra.mxu0 0
  %186 = vmatprep.subr.bf16.mxu0 0
  %187 = vmatpush1.bf16.msra.mxu0 %v180
  %188 = vmatprep.subr.bf16.mxu0 0
  %189 = vmatpush1.bf16.msra.mxu0 %v158
  %190 = vmatprep.subr.bf16.mxu0 0
  %191 = vmatpush1.bf16.msra.mxu0 %v157
  %192 = vmatprep.subr.bf16.mxu0 0
  %193 = vmatpush1.bf16.msra.mxu0 %v156
  %194 = vmatprep.subr.bf16.mxu0 0
  %195 = vmatpush1.bf16.msra.mxu0 %v155
  %196 = vmatprep.subr.bf16.mxu0 0
  %197 = vmatpush1.bf16.msra.mxu0 %v154
  %198 = vmatprep.subr.bf16.mxu0 0
  %199 = vmatpush2.bf16.msra.mxu0 0
  %200 = vmatprep.subr.bf16.mxu0 0
  %201 = vmatpush2.bf16.msra.mxu0 0
  %202 = vmatprep.subr.bf16.mxu0 0
  %203 = vmatpush2.bf16.msra.mxu0 0
  %204 = vmatprep.subr.bf16.mxu0 0
  %205 = vmatpush2.bf16.msra.mxu0 0
  %206 = vmatprep.subr.bf16.mxu0 0
  %207 = vmatpush2.bf16.msra.mxu0 0
  %208 = vmatprep.subr.bf16.mxu0 0
  %209 = vmatpush2.bf16.msra.mxu0 0
  %210 = vmatprep.subr.bf16.mxu0 0
  %211 = vmatpush2.bf16.msra.mxu0 0
  %212 = vmatprep.subr.bf16.mxu0 0
  %213 = vmatpush2.bf16.msra.mxu0 0
  %214 = vmatprep.mubr.bf16.mxu0 0
  %215 = vmatmul.mubr.bf16.gmra.mxu0 %v167
  %v216 = vpop.f32.mrf.mxu0
  %v217 = vadd.f32 0.0, %v216
  %v218 = vpop.f32.mrf.mxu0
  %v219 = vpop.f32.mrf.mxu0
  %v220 = vadd.f32 0.0, %v219
  %v221 = vpop.f32.mrf.mxu0
  %222 = vmatprep.mubr.bf16.mxu0 0
  %223 = vmatmul.mubr.bf16.gmra.mxu0 %v170
  %v224 = vpop.f32.mrf.mxu0
  %v225 = vadd.f32 0.0, %v224
  %v226 = vpop.f32.mrf.mxu0
  %v227 = vpop.f32.mrf.mxu0
  %v228 = vadd.f32 0.0, %v227
  %v229 = vpop.f32.mrf.mxu0
  %230 = vmatprep.mubr.bf16.mxu0 0
  %231 = vmatmul.mubr.bf16.gmra.mxu0 %v173
  %v232 = vpop.f32.mrf.mxu0
  %v233 = vadd.f32 0.0, %v232
  %v234 = vpop.f32.mrf.mxu0
  %v235 = vpop.f32.mrf.mxu0
  %v236 = vadd.f32 0.0, %v235
  %v237 = vpop.f32.mrf.mxu0
  %238 = vmatprep.mubr.bf16.mxu0 0
  %239 = vmatmul.mubr.bf16.gmra.mxu0 %v176
  %v240 = vpop.f32.mrf.mxu0
  %v241 = vadd.f32 0.0, %v240
  %v242 = vpop.f32.mrf.mxu0
  %v243 = vpop.f32.mrf.mxu0
  %v244 = vpop.f32.mrf.mxu0
  %245 = vdwg.mxu0
  %v258 = vunpack.c.l.b16 %v105
  %v259 = vunpack.c.l.b16 %v106
  %v260 = vunpack.c.l.b16 %v107
  %v261 = vunpack.c.l.b16 %v108
  %v262 = vunpack.c.l.b16 %v109
  %v263 = vunpack.c.l.b16 %v110
  %v264 = vunpack.c.l.b16 %v111
  %v265 = vunpack.c.l.b16 %v112
  %v266 = vunpack.c.l.b16 %v113
  %v267 = vunpack.c.l.b16 %v114
  %v268 = vunpack.c.l.b16 %v115
  %v269 = vunpack.c.l.b16 %v116
  %v270 = vpack.c.b16 %v259, %v258
  %v271 = vpack.c.b16 %v261, %v260
  %v272 = vpack.c.b16 %v263, %v262
  %v273 = vpack.c.b16 %v265, %v264
  %v274 = vpack.c.b16 %v267, %v266
  %v275 = vpack.c.b16 %v269, %v268
  %v282 = vsel %vm165, %v43, 0
  %v285 = vsel %vm165, %v44, 0
  %v288 = vsel %vm165, %v45, 0
  %v291 = vsel %vm165, %v46, 0
  %v294 = vsel %vm178, %v275, 0
  %296 = vmatprep.subr.bf16.mxu0 0
  %297 = vmatpush1.bf16.msra.mxu0 0
  %298 = vmatprep.subr.bf16.mxu0 0
  %299 = vmatpush1.bf16.msra.mxu0 0
  %300 = vmatprep.subr.bf16.mxu0 0
  %301 = vmatpush1.bf16.msra.mxu0 %v294
  %302 = vmatprep.subr.bf16.mxu0 0
  %303 = vmatpush1.bf16.msra.mxu0 %v274
  %304 = vmatprep.subr.bf16.mxu0 0
  %305 = vmatpush1.bf16.msra.mxu0 %v273
  %306 = vmatprep.subr.bf16.mxu0 0
  %307 = vmatpush1.bf16.msra.mxu0 %v272
  %308 = vmatprep.subr.bf16.mxu0 0
  %309 = vmatpush1.bf16.msra.mxu0 %v271
  %310 = vmatprep.subr.bf16.mxu0 0
  %311 = vmatpush1.bf16.msra.mxu0 %v270
  %312 = vmatprep.subr.bf16.mxu0 0
  %313 = vmatpush2.bf16.msra.mxu0 0
  %314 = vmatprep.subr.bf16.mxu0 0
  %315 = vmatpush2.bf16.msra.mxu0 0
  %316 = vmatprep.subr.bf16.mxu0 0
  %317 = vmatpush2.bf16.msra.mxu0 0
  %318 = vmatprep.subr.bf16.mxu0 0
  %319 = vmatpush2.bf16.msra.mxu0 0
  %320 = vmatprep.subr.bf16.mxu0 0
  %321 = vmatpush2.bf16.msra.mxu0 0
  %322 = vmatprep.subr.bf16.mxu0 0
  %323 = vmatpush2.bf16.msra.mxu0 0
  %324 = vmatprep.subr.bf16.mxu0 0
  %325 = vmatpush2.bf16.msra.mxu0 0
  %326 = vmatprep.subr.bf16.mxu0 0
  %327 = vmatpush2.bf16.msra.mxu0 0
  %328 = vmatprep.mubr.bf16.mxu0 0
  %329 = vmatmul.mubr.bf16.gmra.mxu0 %v282
  %v330 = vpop.f32.mrf.mxu0
  %v331 = vadd.f32 %v217, %v330
  %v332 = vpop.f32.mrf.mxu0
  %v333 = vpop.f32.mrf.mxu0
  %v334 = vadd.f32 %v220, %v333
  %v335 = vpop.f32.mrf.mxu0
  %336 = vmatprep.mubr.bf16.mxu0 0
  %337 = vmatmul.mubr.bf16.gmra.mxu0 %v285
  %v338 = vpop.f32.mrf.mxu0
  %v339 = vadd.f32 %v225, %v338
  %v340 = vpop.f32.mrf.mxu0
  %v341 = vpop.f32.mrf.mxu0
  %v342 = vadd.f32 %v228, %v341
  %v343 = vpop.f32.mrf.mxu0
  %344 = vmatprep.mubr.bf16.mxu0 0
  %345 = vmatmul.mubr.bf16.gmra.mxu0 %v288
  %v346 = vpop.f32.mrf.mxu0
  %v347 = vadd.f32 %v233, %v346
  %v348 = vpop.f32.mrf.mxu0
  %v349 = vpop.f32.mrf.mxu0
  %v350 = vadd.f32 %v236, %v349
  %v351 = vpop.f32.mrf.mxu0
  %352 = vmatprep.mubr.bf16.mxu0 0
  %353 = vmatmul.mubr.bf16.gmra.mxu0 %v291
  %v354 = vpop.f32.mrf.mxu0
  %v355 = vadd.f32 %v241, %v354
  %v356 = vpop.f32.mrf.mxu0
  %v357 = vpop.f32.mrf.mxu0
  %v358 = vpop.f32.mrf.mxu0
  %359 = vdwg.mxu0
  %s360 = scalar_lea.vmem %s4, 96
  %v361 = vld [vmem:[%s360] sm:$0xf]
  %v362 = vld [vmem:[%s360 + $0x4] sm:$0xf]
  %v363 = vld [vmem:[%s360 + $0x8] sm:$0xf]
  %v364 = vld [vmem:[%s360 + $0xc] sm:$0xf]
  %v365 = vld [vmem:[%s360 + $0x10] sm:$0xf]
  %v366 = vld [vmem:[%s360 + $0x14] sm:$0xf]
  %v367 = vld [vmem:[%s360 + $0x18] sm:$0xf]
  %v368 = vld [vmem:[%s360 + $0x1c] sm:$0xf]
  %v369 = vld [vmem:[%s360 + $0x20] sm:$0xf]
  %v370 = vld [vmem:[%s360 + $0x24] sm:$0xf]
  %v371 = vld [vmem:[%s360 + $0x28] sm:$0xf]
  %v372 = vld [vmem:[%s360 + $0x2c] sm:$0x1]
  %v385 = vunpack.c.l.b16 %v361
  %v386 = vunpack.c.l.b16 %v362
  %v387 = vunpack.c.l.b16 %v363
  %v388 = vunpack.c.l.b16 %v364
  %v389 = vunpack.c.l.b16 %v365
  %v390 = vunpack.c.l.b16 %v366
  %v391 = vunpack.c.l.b16 %v367
  %v392 = vunpack.c.l.b16 %v368
  %v393 = vunpack.c.l.b16 %v369
  %v394 = vunpack.c.l.b16 %v370
  %v395 = vunpack.c.l.b16 %v371
  %v396 = vunpack.c.l.b16 %v372
  %v397 = vpack.c.b16 %v386, %v385
  %v398 = vpack.c.b16 %v388, %v387
  %v399 = vpack.c.b16 %v390, %v389
  %v400 = vpack.c.b16 %v392, %v391
  %v401 = vpack.c.b16 %v394, %v393
  %v402 = vpack.c.b16 %v396, %v395
  %v409 = vsel %vm165, %v89, 0
  %v412 = vsel %vm165, %v90, 0
  %v415 = vsel %vm165, %v91, 0
  %v418 = vsel %vm165, %v92, 0
  %v421 = vsel %vm178, %v402, 0
  %423 = vmatprep.subr.bf16.mxu0 0
  %424 = vmatpush1.bf16.msra.mxu0 0
  %425 = vmatprep.subr.bf16.mxu0 0
  %426 = vmatpush1.bf16.msra.mxu0 0
  %427 = vmatprep.subr.bf16.mxu0 0
  %428 = vmatpush1.bf16.msra.mxu0 %v421
  %429 = vmatprep.subr.bf16.mxu0 0
  %430 = vmatpush1.bf16.msra.mxu0 %v401
  %431 = vmatprep.subr.bf16.mxu0 0
  %432 = vmatpush1.bf16.msra.mxu0 %v400
  %433 = vmatprep.subr.bf16.mxu0 0
  %434 = vmatpush1.bf16.msra.mxu0 %v399
  %435 = vmatprep.subr.bf16.mxu0 0
  %436 = vmatpush1.bf16.msra.mxu0 %v398
  %437 = vmatprep.subr.bf16.mxu0 0
  %438 = vmatpush1.bf16.msra.mxu0 %v397
  %439 = vmatprep.subr.bf16.mxu0 0
  %440 = vmatpush2.bf16.msra.mxu0 0
  %441 = vmatprep.subr.bf16.mxu0 0
  %442 = vmatpush2.bf16.msra.mxu0 0
  %443 = vmatprep.subr.bf16.mxu0 0
  %444 = vmatpush2.bf16.msra.mxu0 0
  %445 = vmatprep.subr.bf16.mxu0 0
  %446 = vmatpush2.bf16.msra.mxu0 0
  %447 = vmatprep.subr.bf16.mxu0 0
  %448 = vmatpush2.bf16.msra.mxu0 0
  %449 = vmatprep.subr.bf16.mxu0 0
  %450 = vmatpush2.bf16.msra.mxu0 0
  %451 = vmatprep.subr.bf16.mxu0 0
  %452 = vmatpush2.bf16.msra.mxu0 0
  %453 = vmatprep.subr.bf16.mxu0 0
  %454 = vmatpush2.bf16.msra.mxu0 0
  %455 = vmatprep.mubr.bf16.mxu0 0
  %456 = vmatmul.mubr.bf16.gmra.mxu0 %v409
  %v457 = vpop.f32.mrf.mxu0
  %v458 = vadd.f32 0.0, %v457
  %v459 = vpop.f32.mrf.mxu0
  %v460 = vpop.f32.mrf.mxu0
  %v461 = vadd.f32 0.0, %v460
  %v462 = vpop.f32.mrf.mxu0
  %463 = vmatprep.mubr.bf16.mxu0 0
  %464 = vmatmul.mubr.bf16.gmra.mxu0 %v412
  %v465 = vpop.f32.mrf.mxu0
  %v466 = vadd.f32 0.0, %v465
  %v467 = vpop.f32.mrf.mxu0
  %v468 = vpop.f32.mrf.mxu0
  %v469 = vadd.f32 0.0, %v468
  %v470 = vpop.f32.mrf.mxu0
  %471 = vmatprep.mubr.bf16.mxu0 0
  %472 = vmatmul.mubr.bf16.gmra.mxu0 %v415
  %v473 = vpop.f32.mrf.mxu0
  %v474 = vadd.f32 0.0, %v473
  %v475 = vpop.f32.mrf.mxu0
  %v476 = vpop.f32.mrf.mxu0
  %v477 = vadd.f32 0.0, %v476
  %v478 = vpop.f32.mrf.mxu0
  %479 = vmatprep.mubr.bf16.mxu0 0
  %480 = vmatmul.mubr.bf16.gmra.mxu0 %v418
  %v481 = vpop.f32.mrf.mxu0
  %v482 = vadd.f32 0.0, %v481
  %v483 = vpop.f32.mrf.mxu0
  %v484 = vpop.f32.mrf.mxu0
  %v485 = vpop.f32.mrf.mxu0
  %486 = vdwg.mxu0
  %v487 = vadd.f32 %v331, %v458
  %v488 = vadd.f32 %v334, %v461
  %v489 = vadd.f32 %v339, %v466
  %v490 = vadd.f32 %v342, %v469
  %v491 = vadd.f32 %v347, %v474
  %v492 = vadd.f32 %v350, %v477
  %v493 = vadd.f32 %v355, %v482
  %s494 = scalar_lea.vmem %s4, 144
  %v495 = vld [vmem:[%s494] sm:$0xf]
  %v496 = vld [vmem:[%s494 + $0x4] sm:$0xf]
  %v497 = vld [vmem:[%s494 + $0x8] sm:$0xf]
  %v498 = vld [vmem:[%s494 + $0xc] sm:$0xf]
  %v499 = vld [vmem:[%s494 + $0x10] sm:$0xf]
  %v500 = vld [vmem:[%s494 + $0x14] sm:$0xf]
  %v501 = vld [vmem:[%s494 + $0x18] sm:$0xf]
  %v502 = vld [vmem:[%s494 + $0x1c] sm:$0xf]
  %v503 = vld [vmem:[%s494 + $0x20] sm:$0xf]
  %v504 = vld [vmem:[%s494 + $0x24] sm:$0xf]
  %v505 = vld [vmem:[%s494 + $0x28] sm:$0xf]
  %v506 = vld [vmem:[%s494 + $0x2c] sm:$0x1]
  %s507 = scalar_lea.vmem %s4, 192
  %v508 = vld [vmem:[%s507] sm:$0xf]
  %v509 = vld [vmem:[%s507 + $0x4] sm:$0xf]
  %v510 = vld [vmem:[%s507 + $0x8] sm:$0xf]
  %v511 = vld [vmem:[%s507 + $0xc] sm:$0xf]
  %v512 = vld [vmem:[%s507 + $0x10] sm:$0xf]
  %v513 = vld [vmem:[%s507 + $0x14] sm:$0xf]
  %v514 = vld [vmem:[%s507 + $0x18] sm:$0xf]
  %v515 = vld [vmem:[%s507 + $0x1c] sm:$0xf]
  %v516 = vld [vmem:[%s507 + $0x20] sm:$0xf]
  %v517 = vld [vmem:[%s507 + $0x24] sm:$0xf]
  %v518 = vld [vmem:[%s507 + $0x28] sm:$0xf]
  %v519 = vld [vmem:[%s507 + $0x2c] sm:$0x1]
  %v532 = vunpack.c.l.b16 %v508
  %v533 = vunpack.c.l.b16 %v509
  %v534 = vunpack.c.l.b16 %v510
  %v535 = vunpack.c.l.b16 %v511
  %v536 = vunpack.c.l.b16 %v512
  %v537 = vunpack.c.l.b16 %v513
  %v538 = vunpack.c.l.b16 %v514
  %v539 = vunpack.c.l.b16 %v515
  %v540 = vunpack.c.l.b16 %v516
  %v541 = vunpack.c.l.b16 %v517
  %v542 = vunpack.c.l.b16 %v518
  %v543 = vunpack.c.l.b16 %v519
  %v544 = vpack.c.b16 %v533, %v532
  %v545 = vpack.c.b16 %v535, %v534
  %v546 = vpack.c.b16 %v537, %v536
  %v547 = vpack.c.b16 %v539, %v538
  %v548 = vpack.c.b16 %v541, %v540
  %v549 = vpack.c.b16 %v543, %v542
  %v556 = vsel %vm178, %v549, 0
  %558 = vmatprep.subr.bf16.mxu0 0
  %559 = vmatpush1.bf16.msra.mxu0 0
  %560 = vmatprep.subr.bf16.mxu0 0
  %561 = vmatpush1.bf16.msra.mxu0 0
  %562 = vmatprep.subr.bf16.mxu0 0
  %563 = vmatpush1.bf16.msra.mxu0 %v556
  %564 = vmatprep.subr.bf16.mxu0 0
  %565 = vmatpush1.bf16.msra.mxu0 %v548
  %566 = vmatprep.subr.bf16.mxu0 0
  %567 = vmatpush1.bf16.msra.mxu0 %v547
  %568 = vmatprep.subr.bf16.mxu0 0
  %569 = vmatpush1.bf16.msra.mxu0 %v546
  %570 = vmatprep.subr.bf16.mxu0 0
  %571 = vmatpush1.bf16.msra.mxu0 %v545
  %572 = vmatprep.subr.bf16.mxu0 0
  %573 = vmatpush1.bf16.msra.mxu0 %v544
  %574 = vmatprep.subr.bf16.mxu0 0
  %575 = vmatpush2.bf16.msra.mxu0 0
  %576 = vmatprep.subr.bf16.mxu0 0
  %577 = vmatpush2.bf16.msra.mxu0 0
  %578 = vmatprep.subr.bf16.mxu0 0
  %579 = vmatpush2.bf16.msra.mxu0 0
  %580 = vmatprep.subr.bf16.mxu0 0
  %581 = vmatpush2.bf16.msra.mxu0 0
  %582 = vmatprep.subr.bf16.mxu0 0
  %583 = vmatpush2.bf16.msra.mxu0 0
  %584 = vmatprep.subr.bf16.mxu0 0
  %585 = vmatpush2.bf16.msra.mxu0 0
  %586 = vmatprep.subr.bf16.mxu0 0
  %587 = vmatpush2.bf16.msra.mxu0 0
  %588 = vmatprep.subr.bf16.mxu0 0
  %589 = vmatpush2.bf16.msra.mxu0 0
  %590 = vmatprep.mubr.bf16.mxu0 0
  %591 = vmatmul.mubr.bf16.gmra.mxu0 %v167
  %v592 = vpop.f32.mrf.mxu0
  %v593 = vadd.f32 0.0, %v592
  %v594 = vpop.f32.mrf.mxu0
  %v595 = vpop.f32.mrf.mxu0
  %v596 = vadd.f32 0.0, %v595
  %v597 = vpop.f32.mrf.mxu0
  %598 = vmatprep.mubr.bf16.mxu0 0
  %599 = vmatmul.mubr.bf16.gmra.mxu0 %v170
  %v600 = vpop.f32.mrf.mxu0
  %v601 = vadd.f32 0.0, %v600
  %v602 = vpop.f32.mrf.mxu0
  %v603 = vpop.f32.mrf.mxu0
  %v604 = vadd.f32 0.0, %v603
  %v605 = vpop.f32.mrf.mxu0
  %606 = vmatprep.mubr.bf16.mxu0 0
  %607 = vmatmul.mubr.bf16.gmra.mxu0 %v173
  %v608 = vpop.f32.mrf.mxu0
  %v609 = vadd.f32 0.0, %v608
  %v610 = vpop.f32.mrf.mxu0
  %v611 = vpop.f32.mrf.mxu0
  %v612 = vadd.f32 0.0, %v611
  %v613 = vpop.f32.mrf.mxu0
  %614 = vmatprep.mubr.bf16.mxu0 0
  %615 = vmatmul.mubr.bf16.gmra.mxu0 %v176
  %v616 = vpop.f32.mrf.mxu0
  %v617 = vadd.f32 0.0, %v616
  %v618 = vpop.f32.mrf.mxu0
  %v619 = vpop.f32.mrf.mxu0
  %v620 = vpop.f32.mrf.mxu0
  %621 = vdwg.mxu0
  %v634 = vunpack.c.l.b16 %v495
  %v635 = vunpack.c.l.b16 %v496
  %v636 = vunpack.c.l.b16 %v497
  %v637 = vunpack.c.l.b16 %v498
  %v638 = vunpack.c.l.b16 %v499
  %v639 = vunpack.c.l.b16 %v500
  %v640 = vunpack.c.l.b16 %v501
  %v641 = vunpack.c.l.b16 %v502
  %v642 = vunpack.c.l.b16 %v503
  %v643 = vunpack.c.l.b16 %v504
  %v644 = vunpack.c.l.b16 %v505
  %v645 = vunpack.c.l.b16 %v506
  %v646 = vpack.c.b16 %v635, %v634
  %v647 = vpack.c.b16 %v637, %v636
  %v648 = vpack.c.b16 %v639, %v638
  %v649 = vpack.c.b16 %v641, %v640
  %v650 = vpack.c.b16 %v643, %v642
  %v651 = vpack.c.b16 %v645, %v644
  %v658 = vsel %vm178, %v651, 0
  %660 = vmatprep.subr.bf16.mxu0 0
  %661 = vmatpush1.bf16.msra.mxu0 0
  %662 = vmatprep.subr.bf16.mxu0 0
  %663 = vmatpush1.bf16.msra.mxu0 0
  %664 = vmatprep.subr.bf16.mxu0 0
  %665 = vmatpush1.bf16.msra.mxu0 %v658
  %666 = vmatprep.subr.bf16.mxu0 0
  %667 = vmatpush1.bf16.msra.mxu0 %v650
  %668 = vmatprep.subr.bf16.mxu0 0
  %669 = vmatpush1.bf16.msra.mxu0 %v649
  %670 = vmatprep.subr.bf16.mxu0 0
  %671 = vmatpush1.bf16.msra.mxu0 %v648
  %672 = vmatprep.subr.bf16.mxu0 0
  %673 = vmatpush1.bf16.msra.mxu0 %v647
  %674 = vmatprep.subr.bf16.mxu0 0
  %675 = vmatpush1.bf16.msra.mxu0 %v646
  %676 = vmatprep.subr.bf16.mxu0 0
  %677 = vmatpush2.bf16.msra.mxu0 0
  %678 = vmatprep.subr.bf16.mxu0 0
  %679 = vmatpush2.bf16.msra.mxu0 0
  %680 = vmatprep.subr.bf16.mxu0 0
  %681 = vmatpush2.bf16.msra.mxu0 0
  %682 = vmatprep.subr.bf16.mxu0 0
  %683 = vmatpush2.bf16.msra.mxu0 0
  %684 = vmatprep.subr.bf16.mxu0 0
  %685 = vmatpush2.bf16.msra.mxu0 0
  %686 = vmatprep.subr.bf16.mxu0 0
  %687 = vmatpush2.bf16.msra.mxu0 0
  %688 = vmatprep.subr.bf16.mxu0 0
  %689 = vmatpush2.bf16.msra.mxu0 0
  %690 = vmatprep.subr.bf16.mxu0 0
  %691 = vmatpush2.bf16.msra.mxu0 0
  %692 = vmatprep.mubr.bf16.mxu0 0
  %693 = vmatmul.mubr.bf16.gmra.mxu0 %v282
  %v694 = vpop.f32.mrf.mxu0
  %v695 = vadd.f32 %v593, %v694
  %v696 = vpop.f32.mrf.mxu0
  %v697 = vpop.f32.mrf.mxu0
  %v698 = vadd.f32 %v596, %v697
  %v699 = vpop.f32.mrf.mxu0
  %700 = vmatprep.mubr.bf16.mxu0 0
  %701 = vmatmul.mubr.bf16.gmra.mxu0 %v285
  %v702 = vpop.f32.mrf.mxu0
  %v703 = vadd.f32 %v601, %v702
  %v704 = vpop.f32.mrf.mxu0
  %v705 = vpop.f32.mrf.mxu0
  %v706 = vadd.f32 %v604, %v705
  %v707 = vpop.f32.mrf.mxu0
  %708 = vmatprep.mubr.bf16.mxu0 0
  %709 = vmatmul.mubr.bf16.gmra.mxu0 %v288
  %v710 = vpop.f32.mrf.mxu0
  %v711 = vadd.f32 %v609, %v710
  %v712 = vpop.f32.mrf.mxu0
  %v713 = vpop.f32.mrf.mxu0
  %v714 = vadd.f32 %v612, %v713
  %v715 = vpop.f32.mrf.mxu0
  %716 = vmatprep.mubr.bf16.mxu0 0
  %717 = vmatmul.mubr.bf16.gmra.mxu0 %v291
  %v718 = vpop.f32.mrf.mxu0
  %v719 = vadd.f32 %v617, %v718
  %v720 = vpop.f32.mrf.mxu0
  %v721 = vpop.f32.mrf.mxu0
  %v722 = vpop.f32.mrf.mxu0
  %723 = vdwg.mxu0
  %s724 = scalar_lea.vmem %s4, 240
  %v725 = vld [vmem:[%s724] sm:$0xf]
  %v726 = vld [vmem:[%s724 + $0x4] sm:$0xf]
  %v727 = vld [vmem:[%s724 + $0x8] sm:$0xf]
  %v728 = vld [vmem:[%s724 + $0xc] sm:$0xf]
  %v729 = vld [vmem:[%s724 + $0x10] sm:$0xf]
  %v730 = vld [vmem:[%s724 + $0x14] sm:$0xf]
  %v731 = vld [vmem:[%s724 + $0x18] sm:$0xf]
  %v732 = vld [vmem:[%s724 + $0x1c] sm:$0xf]
  %v733 = vld [vmem:[%s724 + $0x20] sm:$0xf]
  %v734 = vld [vmem:[%s724 + $0x24] sm:$0xf]
  %v735 = vld [vmem:[%s724 + $0x28] sm:$0xf]
  %v736 = vld [vmem:[%s724 + $0x2c] sm:$0x1]
  %v749 = vunpack.c.l.b16 %v725
  %v750 = vunpack.c.l.b16 %v726
  %v751 = vunpack.c.l.b16 %v727
  %v752 = vunpack.c.l.b16 %v728
  %v753 = vunpack.c.l.b16 %v729
  %v754 = vunpack.c.l.b16 %v730
  %v755 = vunpack.c.l.b16 %v731
  %v756 = vunpack.c.l.b16 %v732
  %v757 = vunpack.c.l.b16 %v733
  %v758 = vunpack.c.l.b16 %v734
  %v759 = vunpack.c.l.b16 %v735
  %v760 = vunpack.c.l.b16 %v736
  %v761 = vpack.c.b16 %v750, %v749
  %v762 = vpack.c.b16 %v752, %v751
  %v763 = vpack.c.b16 %v754, %v753
  %v764 = vpack.c.b16 %v756, %v755
  %v765 = vpack.c.b16 %v758, %v757
  %v766 = vpack.c.b16 %v760, %v759
  %v773 = vsel %vm178, %v766, 0
  %775 = vmatprep.subr.bf16.mxu0 0
  %776 = vmatpush1.bf16.msra.mxu0 0
  %777 = vmatprep.subr.bf16.mxu0 0
  %778 = vmatpush1.bf16.msra.mxu0 0
  %779 = vmatprep.subr.bf16.mxu0 0
  %780 = vmatpush1.bf16.msra.mxu0 %v773
  %781 = vmatprep.subr.bf16.mxu0 0
  %782 = vmatpush1.bf16.msra.mxu0 %v765
  %783 = vmatprep.subr.bf16.mxu0 0
  %784 = vmatpush1.bf16.msra.mxu0 %v764
  %785 = vmatprep.subr.bf16.mxu0 0
  %786 = vmatpush1.bf16.msra.mxu0 %v763
  %787 = vmatprep.subr.bf16.mxu0 0
  %788 = vmatpush1.bf16.msra.mxu0 %v762
  %789 = vmatprep.subr.bf16.mxu0 0
  %790 = vmatpush1.bf16.msra.mxu0 %v761
  %791 = vmatprep.subr.bf16.mxu0 0
  %792 = vmatpush2.bf16.msra.mxu0 0
  %793 = vmatprep.subr.bf16.mxu0 0
  %794 = vmatpush2.bf16.msra.mxu0 0
  %795 = vmatprep.subr.bf16.mxu0 0
  %796 = vmatpush2.bf16.msra.mxu0 0
  %797 = vmatprep.subr.bf16.mxu0 0
  %798 = vmatpush2.bf16.msra.mxu0 0
  %799 = vmatprep.subr.bf16.mxu0 0
  %800 = vmatpush2.bf16.msra.mxu0 0
  %801 = vmatprep.subr.bf16.mxu0 0
  %802 = vmatpush2.bf16.msra.mxu0 0
  %803 = vmatprep.subr.bf16.mxu0 0
  %804 = vmatpush2.bf16.msra.mxu0 0
  %805 = vmatprep.subr.bf16.mxu0 0
  %806 = vmatpush2.bf16.msra.mxu0 0
  %807 = vmatprep.mubr.bf16.mxu0 0
  %808 = vmatmul.mubr.bf16.gmra.mxu0 %v409
  %v809 = vpop.f32.mrf.mxu0
  %v810 = vadd.f32 0.0, %v809
  %v811 = vpop.f32.mrf.mxu0
  %v812 = vpop.f32.mrf.mxu0
  %v813 = vadd.f32 0.0, %v812
  %v814 = vpop.f32.mrf.mxu0
  %815 = vmatprep.mubr.bf16.mxu0 0
  %816 = vmatmul.mubr.bf16.gmra.mxu0 %v412
  %v817 = vpop.f32.mrf.mxu0
  %v818 = vadd.f32 0.0, %v817
  %v819 = vpop.f32.mrf.mxu0
  %v820 = vpop.f32.mrf.mxu0
  %v821 = vadd.f32 0.0, %v820
  %v822 = vpop.f32.mrf.mxu0
  %823 = vmatprep.mubr.bf16.mxu0 0
  %824 = vmatmul.mubr.bf16.gmra.mxu0 %v415
  %v825 = vpop.f32.mrf.mxu0
  %v826 = vadd.f32 0.0, %v825
  %v827 = vpop.f32.mrf.mxu0
  %v828 = vpop.f32.mrf.mxu0
  %v829 = vadd.f32 0.0, %v828
  %v830 = vpop.f32.mrf.mxu0
  %831 = vmatprep.mubr.bf16.mxu0 0
  %832 = vmatmul.mubr.bf16.gmra.mxu0 %v418
  %v833 = vpop.f32.mrf.mxu0
  %v834 = vadd.f32 0.0, %v833
  %v835 = vpop.f32.mrf.mxu0
  %v836 = vpop.f32.mrf.mxu0
  %v837 = vpop.f32.mrf.mxu0
  %838 = vdwg.mxu0
  %v839 = vadd.f32 %v695, %v810
  %v840 = vadd.f32 %v698, %v813
  %v841 = vadd.f32 %v703, %v818
  %v842 = vadd.f32 %v706, %v821
  %v843 = vadd.f32 %v711, %v826
  %v844 = vadd.f32 %v714, %v829
  %v845 = vadd.f32 %v719, %v834
  %v846 = vmax.f32 %v487, %v839
  %v847 = vmax.f32 %v488, %v840
  %v848 = vmax.f32 %v489, %v841
  %v849 = vmax.f32 %v490, %v842
  %v850 = vmax.f32 %v491, %v843
  %v851 = vmax.f32 %v492, %v844
  %v852 = vmax.f32 %v493, %v845
  %853 = vmatprep.subr.bf16.mxu0 0
  %854 = vmatpush1.bf16.msra.mxu0 0
  %855 = vmatprep.subr.bf16.mxu0 0
  %856 = vmatpush1.bf16.msra.mxu0 0
  %857 = vmatprep.subr.bf16.mxu0 0
  %858 = vmatpush1.bf16.msra.mxu0 %v180
  %859 = vmatprep.subr.bf16.mxu0 0
  %860 = vmatpush1.bf16.msra.mxu0 %v158
  %861 = vmatprep.subr.bf16.mxu0 0
  %862 = vmatpush1.bf16.msra.mxu0 %v157
  %863 = vmatprep.subr.bf16.mxu0 0
  %864 = vmatpush1.bf16.msra.mxu0 %v156
  %865 = vmatprep.subr.bf16.mxu0 0
  %866 = vmatpush1.bf16.msra.mxu0 %v155
  %867 = vmatprep.subr.bf16.mxu0 0
  %868 = vmatpush1.bf16.msra.mxu0 %v154
  %869 = vmatprep.subr.bf16.mxu0 0
  %870 = vmatpush2.bf16.msra.mxu0 0
  %871 = vmatprep.subr.bf16.mxu0 0
  %872 = vmatpush2.bf16.msra.mxu0 0
  %873 = vmatprep.subr.bf16.mxu0 0
  %874 = vmatpush2.bf16.msra.mxu0 0
  %875 = vmatprep.subr.bf16.mxu0 0
  %876 = vmatpush2.bf16.msra.mxu0 0
  %877 = vmatprep.subr.bf16.mxu0 0
  %878 = vmatpush2.bf16.msra.mxu0 0
  %879 = vmatprep.subr.bf16.mxu0 0
  %880 = vmatpush2.bf16.msra.mxu0 0
  %881 = vmatprep.subr.bf16.mxu0 0
  %882 = vmatpush2.bf16.msra.mxu0 0
  %883 = vmatprep.subr.bf16.mxu0 0
  %884 = vmatpush2.bf16.msra.mxu0 0
  %885 = vmatprep.mubr.bf16.mxu0 0
  %886 = vmatmul.mubr.bf16.gmra.mxu0 %v409
  %v887 = vpop.f32.mrf.mxu0
  %v888 = vadd.f32 0.0, %v887
  %v889 = vpop.f32.mrf.mxu0
  %v890 = vpop.f32.mrf.mxu0
  %v891 = vadd.f32 0.0, %v890
  %v892 = vpop.f32.mrf.mxu0
  %893 = vmatprep.mubr.bf16.mxu0 0
  %894 = vmatmul.mubr.bf16.gmra.mxu0 %v412
  %v895 = vpop.f32.mrf.mxu0
  %v896 = vadd.f32 0.0, %v895
  %v897 = vpop.f32.mrf.mxu0
  %v898 = vpop.f32.mrf.mxu0
  %v899 = vadd.f32 0.0, %v898
  %v900 = vpop.f32.mrf.mxu0
  %901 = vmatprep.mubr.bf16.mxu0 0
  %902 = vmatmul.mubr.bf16.gmra.mxu0 %v415
  %v903 = vpop.f32.mrf.mxu0
  %v904 = vadd.f32 0.0, %v903
  %v905 = vpop.f32.mrf.mxu0
  %v906 = vpop.f32.mrf.mxu0
  %v907 = vadd.f32 0.0, %v906
  %v908 = vpop.f32.mrf.mxu0
  %909 = vmatprep.mubr.bf16.mxu0 0
  %910 = vmatmul.mubr.bf16.gmra.mxu0 %v418
  %v911 = vpop.f32.mrf.mxu0
  %v912 = vadd.f32 0.0, %v911
  %v913 = vpop.f32.mrf.mxu0
  %v914 = vpop.f32.mrf.mxu0
  %v915 = vpop.f32.mrf.mxu0
  %916 = vdwg.mxu0
  %917 = vmatprep.subr.bf16.mxu0 0
  %918 = vmatpush1.bf16.msra.mxu0 0
  %919 = vmatprep.subr.bf16.mxu0 0
  %920 = vmatpush1.bf16.msra.mxu0 0
  %921 = vmatprep.subr.bf16.mxu0 0
  %922 = vmatpush1.bf16.msra.mxu0 %v294
  %923 = vmatprep.subr.bf16.mxu0 0
  %924 = vmatpush1.bf16.msra.mxu0 %v274
  %925 = vmatprep.subr.bf16.mxu0 0
  %926 = vmatpush1.bf16.msra.mxu0 %v273
  %927 = vmatprep.subr.bf16.mxu0 0
  %928 = vmatpush1.bf16.msra.mxu0 %v272
  %929 = vmatprep.subr.bf16.mxu0 0
  %930 = vmatpush1.bf16.msra.mxu0 %v271
  %931 = vmatprep.subr.bf16.mxu0 0
  %932 = vmatpush1.bf16.msra.mxu0 %v270
  %933 = vmatprep.subr.bf16.mxu0 0
  %934 = vmatpush2.bf16.msra.mxu0 0
  %935 = vmatprep.subr.bf16.mxu0 0
  %936 = vmatpush2.bf16.msra.mxu0 0
  %937 = vmatprep.subr.bf16.mxu0 0
  %938 = vmatpush2.bf16.msra.mxu0 0
  %939 = vmatprep.subr.bf16.mxu0 0
  %940 = vmatpush2.bf16.msra.mxu0 0
  %941 = vmatprep.subr.bf16.mxu0 0
  %942 = vmatpush2.bf16.msra.mxu0 0
  %943 = vmatprep.subr.bf16.mxu0 0
  %944 = vmatpush2.bf16.msra.mxu0 0
  %945 = vmatprep.subr.bf16.mxu0 0
  %946 = vmatpush2.bf16.msra.mxu0 0
  %947 = vmatprep.subr.bf16.mxu0 0
  %948 = vmatpush2.bf16.msra.mxu0 0
  %949 = vmatprep.mubr.bf16.mxu0 0
  %950 = vmatmul.mubr.bf16.gmra.mxu0 %v167
  %v951 = vpop.f32.mrf.mxu0
  %v952 = vadd.f32 %v888, %v951
  %v953 = vpop.f32.mrf.mxu0
  %v954 = vpop.f32.mrf.mxu0
  %v955 = vadd.f32 %v891, %v954
  %v956 = vpop.f32.mrf.mxu0
  %957 = vmatprep.mubr.bf16.mxu0 0
  %958 = vmatmul.mubr.bf16.gmra.mxu0 %v170
  %v959 = vpop.f32.mrf.mxu0
  %v960 = vadd.f32 %v896, %v959
  %v961 = vpop.f32.mrf.mxu0
  %v962 = vpop.f32.mrf.mxu0
  %v963 = vadd.f32 %v899, %v962
  %v964 = vpop.f32.mrf.mxu0
  %965 = vmatprep.mubr.bf16.mxu0 0
  %966 = vmatmul.mubr.bf16.gmra.mxu0 %v173
  %v967 = vpop.f32.mrf.mxu0
  %v968 = vadd.f32 %v904, %v967
  %v969 = vpop.f32.mrf.mxu0
  %v970 = vpop.f32.mrf.mxu0
  %v971 = vadd.f32 %v907, %v970
  %v972 = vpop.f32.mrf.mxu0
  %973 = vmatprep.mubr.bf16.mxu0 0
  %974 = vmatmul.mubr.bf16.gmra.mxu0 %v176
  %v975 = vpop.f32.mrf.mxu0
  %v976 = vadd.f32 %v912, %v975
  %v977 = vpop.f32.mrf.mxu0
  %v978 = vpop.f32.mrf.mxu0
  %v979 = vpop.f32.mrf.mxu0
  %980 = vdwg.mxu0
  %v982 = vsel %vm165, %v100, 0
  %v985 = vsel %vm165, %v101, 0
  %v988 = vsel %vm165, %v102, 0
  %v991 = vsel %vm165, %v103, 0
  %993 = vmatprep.subr.bf16.mxu0 0
  %994 = vmatpush1.bf16.msra.mxu0 0
  %995 = vmatprep.subr.bf16.mxu0 0
  %996 = vmatpush1.bf16.msra.mxu0 0
  %997 = vmatprep.subr.bf16.mxu0 0
  %998 = vmatpush1.bf16.msra.mxu0 %v421
  %999 = vmatprep.subr.bf16.mxu0 0
  %1000 = vmatpush1.bf16.msra.mxu0 %v401
  %1001 = vmatprep.subr.bf16.mxu0 0
  %1002 = vmatpush1.bf16.msra.mxu0 %v400
  %1003 = vmatprep.subr.bf16.mxu0 0
  %1004 = vmatpush1.bf16.msra.mxu0 %v399
  %1005 = vmatprep.subr.bf16.mxu0 0
  %1006 = vmatpush1.bf16.msra.mxu0 %v398
  %1007 = vmatprep.subr.bf16.mxu0 0
  %1008 = vmatpush1.bf16.msra.mxu0 %v397
  %1009 = vmatprep.subr.bf16.mxu0 0
  %1010 = vmatpush2.bf16.msra.mxu0 0
  %1011 = vmatprep.subr.bf16.mxu0 0
  %1012 = vmatpush2.bf16.msra.mxu0 0
  %1013 = vmatprep.subr.bf16.mxu0 0
  %1014 = vmatpush2.bf16.msra.mxu0 0
  %1015 = vmatprep.subr.bf16.mxu0 0
  %1016 = vmatpush2.bf16.msra.mxu0 0
  %1017 = vmatprep.subr.bf16.mxu0 0
  %1018 = vmatpush2.bf16.msra.mxu0 0
  %1019 = vmatprep.subr.bf16.mxu0 0
  %1020 = vmatpush2.bf16.msra.mxu0 0
  %1021 = vmatprep.subr.bf16.mxu0 0
  %1022 = vmatpush2.bf16.msra.mxu0 0
  %1023 = vmatprep.subr.bf16.mxu0 0
  %1024 = vmatpush2.bf16.msra.mxu0 0
  %1025 = vmatprep.mubr.bf16.mxu0 0
  %1026 = vmatmul.mubr.bf16.gmra.mxu0 %v982
  %v1027 = vpop.f32.mrf.mxu0
  %v1028 = vadd.f32 0.0, %v1027
  %v1029 = vpop.f32.mrf.mxu0
  %v1030 = vpop.f32.mrf.mxu0
  %v1031 = vadd.f32 0.0, %v1030
  %v1032 = vpop.f32.mrf.mxu0
  %1033 = vmatprep.mubr.bf16.mxu0 0
  %1034 = vmatmul.mubr.bf16.gmra.mxu0 %v985
  %v1035 = vpop.f32.mrf.mxu0
  %v1036 = vadd.f32 0.0, %v1035
  %v1037 = vpop.f32.mrf.mxu0
  %v1038 = vpop.f32.mrf.mxu0
  %v1039 = vadd.f32 0.0, %v1038
  %v1040 = vpop.f32.mrf.mxu0
  %1041 = vmatprep.mubr.bf16.mxu0 0
  %1042 = vmatmul.mubr.bf16.gmra.mxu0 %v988
  %v1043 = vpop.f32.mrf.mxu0
  %v1044 = vadd.f32 0.0, %v1043
  %v1045 = vpop.f32.mrf.mxu0
  %v1046 = vpop.f32.mrf.mxu0
  %v1047 = vadd.f32 0.0, %v1046
  %v1048 = vpop.f32.mrf.mxu0
  %1049 = vmatprep.mubr.bf16.mxu0 0
  %1050 = vmatmul.mubr.bf16.gmra.mxu0 %v991
  %v1051 = vpop.f32.mrf.mxu0
  %v1052 = vadd.f32 0.0, %v1051
  %v1053 = vpop.f32.mrf.mxu0
  %v1054 = vpop.f32.mrf.mxu0
  %v1055 = vpop.f32.mrf.mxu0
  %1056 = vdwg.mxu0
  %v1057 = vadd.f32 %v952, %v1028
  %v1058 = vadd.f32 %v955, %v1031
  %v1059 = vadd.f32 %v960, %v1036
  %v1060 = vadd.f32 %v963, %v1039
  %v1061 = vadd.f32 %v968, %v1044
  %v1062 = vadd.f32 %v971, %v1047
  %v1063 = vadd.f32 %v976, %v1052
  %v1064 = vmax.f32 %v846, %v1057
  %v1065 = vmax.f32 %v847, %v1058
  %v1066 = vmax.f32 %v848, %v1059
  %v1067 = vmax.f32 %v849, %v1060
  %v1068 = vmax.f32 %v850, %v1061
  %v1069 = vmax.f32 %v851, %v1062
  %v1070 = vmax.f32 %v852, %v1063
  %1071 = vmatprep.subr.bf16.mxu0 0
  %1072 = vmatpush1.bf16.msra.mxu0 0
  %1073 = vmatprep.subr.bf16.mxu0 0
  %1074 = vmatpush1.bf16.msra.mxu0 0
  %1075 = vmatprep.subr.bf16.mxu0 0
  %1076 = vmatpush1.bf16.msra.mxu0 %v556
  %1077 = vmatprep.subr.bf16.mxu0 0
  %1078 = vmatpush1.bf16.msra.mxu0 %v548
  %1079 = vmatprep.subr.bf16.mxu0 0
  %1080 = vmatpush1.bf16.msra.mxu0 %v547
  %1081 = vmatprep.subr.bf16.mxu0 0
  %1082 = vmatpush1.bf16.msra.mxu0 %v546
  %1083 = vmatprep.subr.bf16.mxu0 0
  %1084 = vmatpush1.bf16.msra.mxu0 %v545
  %1085 = vmatprep.subr.bf16.mxu0 0
  %1086 = vmatpush1.bf16.msra.mxu0 %v544
  %1087 = vmatprep.subr.bf16.mxu0 0
  %1088 = vmatpush2.bf16.msra.mxu0 0
  %1089 = vmatprep.subr.bf16.mxu0 0
  %1090 = vmatpush2.bf16.msra.mxu0 0
  %1091 = vmatprep.subr.bf16.mxu0 0
  %1092 = vmatpush2.bf16.msra.mxu0 0
  %1093 = vmatprep.subr.bf16.mxu0 0
  %1094 = vmatpush2.bf16.msra.mxu0 0
  %1095 = vmatprep.subr.bf16.mxu0 0
  %1096 = vmatpush2.bf16.msra.mxu0 0
  %1097 = vmatprep.subr.bf16.mxu0 0
  %1098 = vmatpush2.bf16.msra.mxu0 0
  %1099 = vmatprep.subr.bf16.mxu0 0
  %1100 = vmatpush2.bf16.msra.mxu0 0
  %1101 = vmatprep.subr.bf16.mxu0 0
  %1102 = vmatpush2.bf16.msra.mxu0 0
  %1103 = vmatprep.mubr.bf16.mxu0 0
  %1104 = vmatmul.mubr.bf16.gmra.mxu0 %v409
  %v1105 = vpop.f32.mrf.mxu0
  %v1106 = vadd.f32 0.0, %v1105
  %v1107 = vpop.f32.mrf.mxu0
  %v1108 = vpop.f32.mrf.mxu0
  %v1109 = vadd.f32 0.0, %v1108
  %v1110 = vpop.f32.mrf.mxu0
  %1111 = vmatprep.mubr.bf16.mxu0 0
  %1112 = vmatmul.mubr.bf16.gmra.mxu0 %v412
  %v1113 = vpop.f32.mrf.mxu0
  %v1114 = vadd.f32 0.0, %v1113
  %v1115 = vpop.f32.mrf.mxu0
  %v1116 = vpop.f32.mrf.mxu0
  %v1117 = vadd.f32 0.0, %v1116
  %v1118 = vpop.f32.mrf.mxu0
  %1119 = vmatprep.mubr.bf16.mxu0 0
  %1120 = vmatmul.mubr.bf16.gmra.mxu0 %v415
  %v1121 = vpop.f32.mrf.mxu0
  %v1122 = vadd.f32 0.0, %v1121
  %v1123 = vpop.f32.mrf.mxu0
  %v1124 = vpop.f32.mrf.mxu0
  %v1125 = vadd.f32 0.0, %v1124
  %v1126 = vpop.f32.mrf.mxu0
  %1127 = vmatprep.mubr.bf16.mxu0 0
  %1128 = vmatmul.mubr.bf16.gmra.mxu0 %v418
  %v1129 = vpop.f32.mrf.mxu0
  %v1130 = vadd.f32 0.0, %v1129
  %v1131 = vpop.f32.mrf.mxu0
  %v1132 = vpop.f32.mrf.mxu0
  %v1133 = vpop.f32.mrf.mxu0
  %1134 = vdwg.mxu0
  %1135 = vmatprep.subr.bf16.mxu0 0
  %1136 = vmatpush1.bf16.msra.mxu0 0
  %1137 = vmatprep.subr.bf16.mxu0 0
  %1138 = vmatpush1.bf16.msra.mxu0 0
  %1139 = vmatprep.subr.bf16.mxu0 0
  %1140 = vmatpush1.bf16.msra.mxu0 %v658
  %1141 = vmatprep.subr.bf16.mxu0 0
  %1142 = vmatpush1.bf16.msra.mxu0 %v650
  %1143 = vmatprep.subr.bf16.mxu0 0
  %1144 = vmatpush1.bf16.msra.mxu0 %v649
  %1145 = vmatprep.subr.bf16.mxu0 0
  %1146 = vmatpush1.bf16.msra.mxu0 %v648
  %1147 = vmatprep.subr.bf16.mxu0 0
  %1148 = vmatpush1.bf16.msra.mxu0 %v647
  %1149 = vmatprep.subr.bf16.mxu0 0
  %1150 = vmatpush1.bf16.msra.mxu0 %v646
  %1151 = vmatprep.subr.bf16.mxu0 0
  %1152 = vmatpush2.bf16.msra.mxu0 0
  %1153 = vmatprep.subr.bf16.mxu0 0
  %1154 = vmatpush2.bf16.msra.mxu0 0
  %1155 = vmatprep.subr.bf16.mxu0 0
  %1156 = vmatpush2.bf16.msra.mxu0 0
  %1157 = vmatprep.subr.bf16.mxu0 0
  %1158 = vmatpush2.bf16.msra.mxu0 0
  %1159 = vmatprep.subr.bf16.mxu0 0
  %1160 = vmatpush2.bf16.msra.mxu0 0
  %1161 = vmatprep.subr.bf16.mxu0 0
  %1162 = vmatpush2.bf16.msra.mxu0 0
  %1163 = vmatprep.subr.bf16.mxu0 0
  %1164 = vmatpush2.bf16.msra.mxu0 0
  %1165 = vmatprep.subr.bf16.mxu0 0
  %1166 = vmatpush2.bf16.msra.mxu0 0
  %1167 = vmatprep.mubr.bf16.mxu0 0
  %1168 = vmatmul.mubr.bf16.gmra.mxu0 %v167
  %v1169 = vpop.f32.mrf.mxu0
  %v1170 = vadd.f32 %v1106, %v1169
  %v1171 = vpop.f32.mrf.mxu0
  %v1172 = vpop.f32.mrf.mxu0
  %v1173 = vadd.f32 %v1109, %v1172
  %v1174 = vpop.f32.mrf.mxu0
  %1175 = vmatprep.mubr.bf16.mxu0 0
  %1176 = vmatmul.mubr.bf16.gmra.mxu0 %v170
  %v1177 = vpop.f32.mrf.mxu0
  %v1178 = vadd.f32 %v1114, %v1177
  %v1179 = vpop.f32.mrf.mxu0
  %v1180 = vpop.f32.mrf.mxu0
  %v1181 = vadd.f32 %v1117, %v1180
  %v1182 = vpop.f32.mrf.mxu0
  %1183 = vmatprep.mubr.bf16.mxu0 0
  %1184 = vmatmul.mubr.bf16.gmra.mxu0 %v173
  %v1185 = vpop.f32.mrf.mxu0
  %v1186 = vadd.f32 %v1122, %v1185
  %v1187 = vpop.f32.mrf.mxu0
  %v1188 = vpop.f32.mrf.mxu0
  %v1189 = vadd.f32 %v1125, %v1188
  %v1190 = vpop.f32.mrf.mxu0
  %1191 = vmatprep.mubr.bf16.mxu0 0
  %1192 = vmatmul.mubr.bf16.gmra.mxu0 %v176
  %v1193 = vpop.f32.mrf.mxu0
  %v1194 = vadd.f32 %v1130, %v1193
  %v1195 = vpop.f32.mrf.mxu0
  %v1196 = vpop.f32.mrf.mxu0
  %v1197 = vpop.f32.mrf.mxu0
  %1198 = vdwg.mxu0
  %1199 = vmatprep.subr.bf16.mxu0 0
  %1200 = vmatpush1.bf16.msra.mxu0 0
  %1201 = vmatprep.subr.bf16.mxu0 0
  %1202 = vmatpush1.bf16.msra.mxu0 0
  %1203 = vmatprep.subr.bf16.mxu0 0
  %1204 = vmatpush1.bf16.msra.mxu0 %v773
  %1205 = vmatprep.subr.bf16.mxu0 0
  %1206 = vmatpush1.bf16.msra.mxu0 %v765
  %1207 = vmatprep.subr.bf16.mxu0 0
  %1208 = vmatpush1.bf16.msra.mxu0 %v764
  %1209 = vmatprep.subr.bf16.mxu0 0
  %1210 = vmatpush1.bf16.msra.mxu0 %v763
  %1211 = vmatprep.subr.bf16.mxu0 0
  %1212 = vmatpush1.bf16.msra.mxu0 %v762
  %1213 = vmatprep.subr.bf16.mxu0 0
  %1214 = vmatpush1.bf16.msra.mxu0 %v761
  %1215 = vmatprep.subr.bf16.mxu0 0
  %1216 = vmatpush2.bf16.msra.mxu0 0
  %1217 = vmatprep.subr.bf16.mxu0 0
  %1218 = vmatpush2.bf16.msra.mxu0 0
  %1219 = vmatprep.subr.bf16.mxu0 0
  %1220 = vmatpush2.bf16.msra.mxu0 0
  %1221 = vmatprep.subr.bf16.mxu0 0
  %1222 = vmatpush2.bf16.msra.mxu0 0
  %1223 = vmatprep.subr.bf16.mxu0 0
  %1224 = vmatpush2.bf16.msra.mxu0 0
  %1225 = vmatprep.subr.bf16.mxu0 0
  %1226 = vmatpush2.bf16.msra.mxu0 0
  %1227 = vmatprep.subr.bf16.mxu0 0
  %1228 = vmatpush2.bf16.msra.mxu0 0
  %1229 = vmatprep.subr.bf16.mxu0 0
  %1230 = vmatpush2.bf16.msra.mxu0 0
  %1231 = vmatprep.mubr.bf16.mxu0 0
  %1232 = vmatmul.mubr.bf16.gmra.mxu0 %v982
  %v1233 = vpop.f32.mrf.mxu0
  %v1234 = vadd.f32 0.0, %v1233
  %v1235 = vpop.f32.mrf.mxu0
  %v1236 = vpop.f32.mrf.mxu0
  %v1237 = vadd.f32 0.0, %v1236
  %v1238 = vpop.f32.mrf.mxu0
  %1239 = vmatprep.mubr.bf16.mxu0 0
  %1240 = vmatmul.mubr.bf16.gmra.mxu0 %v985
  %v1241 = vpop.f32.mrf.mxu0
  %v1242 = vadd.f32 0.0, %v1241
  %v1243 = vpop.f32.mrf.mxu0
  %v1244 = vpop.f32.mrf.mxu0
  %v1245 = vadd.f32 0.0, %v1244
  %v1246 = vpop.f32.mrf.mxu0
  %1247 = vmatprep.mubr.bf16.mxu0 0
  %1248 = vmatmul.mubr.bf16.gmra.mxu0 %v988
  %v1249 = vpop.f32.mrf.mxu0
  %v1250 = vadd.f32 0.0, %v1249
  %v1251 = vpop.f32.mrf.mxu0
  %v1252 = vpop.f32.mrf.mxu0
  %v1253 = vadd.f32 0.0, %v1252
  %v1254 = vpop.f32.mrf.mxu0
  %1255 = vmatprep.mubr.bf16.mxu0 0
  %1256 = vmatmul.mubr.bf16.gmra.mxu0 %v991
  %v1257 = vpop.f32.mrf.mxu0
  %v1258 = vadd.f32 0.0, %v1257
  %v1259 = vpop.f32.mrf.mxu0
  %v1260 = vpop.f32.mrf.mxu0
  %v1261 = vpop.f32.mrf.mxu0
  %1262 = vdwg.mxu0
  %v1263 = vadd.f32 %v1170, %v1234
  %v1264 = vadd.f32 %v1173, %v1237
  %v1265 = vadd.f32 %v1178, %v1242
  %v1266 = vadd.f32 %v1181, %v1245
  %v1267 = vadd.f32 %v1186, %v1250
  %v1268 = vadd.f32 %v1189, %v1253
  %v1269 = vadd.f32 %v1194, %v1258
  %v1270 = vmax.f32 %v1064, %v1263
  %v1271 = vmax.f32 %v1065, %v1264
  %v1272 = vmax.f32 %v1066, %v1265
  %v1273 = vmax.f32 %v1067, %v1266
  %v1274 = vmax.f32 %v1068, %v1267
  %v1275 = vmax.f32 %v1069, %v1268
  %v1276 = vmax.f32 %v1070, %v1269
  %v1278 = vlaneseq
  %v1279 = vshrl.u32 %v1278, 7
  %v1280 = vsub.s32 0, %v1279
  %v1281 = vrot.slane %v104, %v1280
  %v1283 = vadd.f32 %v1270, %v1281
  %v1284 = vadd.f32 %v1271, %v1281
  %v1285 = vadd.f32 %v1272, %v1281
  %v1286 = vadd.f32 %v1273, %v1281
  %v1287 = vadd.f32 %v1274, %v1281
  %v1288 = vadd.f32 %v1275, %v1281
  %v1289 = vadd.f32 %v1276, %v1281
  %v1290 = vmax.f32 %v1283, 0.0
  %v1291 = vmax.f32 %v1284, 0.0
  %v1292 = vmax.f32 %v1285, 0.0
  %v1293 = vmax.f32 %v1286, 0.0
  %v1294 = vmax.f32 %v1287, 0.0
  %v1295 = vmax.f32 %v1288, 0.0
  %v1296 = vmax.f32 %v1289, 0.0
  %1297 = vmatprep.subr.bf16.mxu0 0
  %1298 = vmatpush1.bf16.msra.mxu0 0
  %1299 = vmatprep.subr.bf16.mxu0 0
  %1300 = vmatpush1.bf16.msra.mxu0 0
  %1301 = vmatprep.subr.bf16.mxu0 0
  %1302 = vmatpush1.bf16.msra.mxu0 %v180
  %1303 = vmatprep.subr.bf16.mxu0 0
  %1304 = vmatpush1.bf16.msra.mxu0 %v158
  %1305 = vmatprep.subr.bf16.mxu0 0
  %1306 = vmatpush1.bf16.msra.mxu0 %v157
  %1307 = vmatprep.subr.bf16.mxu0 0
  %1308 = vmatpush1.bf16.msra.mxu0 %v156
  %1309 = vmatprep.subr.bf16.mxu0 0
  %1310 = vmatpush1.bf16.msra.mxu0 %v155
  %1311 = vmatprep.subr.bf16.mxu0 0
  %1312 = vmatpush1.bf16.msra.mxu0 %v154
  %1313 = vmatprep.subr.bf16.mxu0 0
  %1314 = vmatpush2.bf16.msra.mxu0 0
  %1315 = vmatprep.subr.bf16.mxu0 0
  %1316 = vmatpush2.bf16.msra.mxu0 0
  %1317 = vmatprep.subr.bf16.mxu0 0
  %1318 = vmatpush2.bf16.msra.mxu0 0
  %1319 = vmatprep.subr.bf16.mxu0 0
  %1320 = vmatpush2.bf16.msra.mxu0 0
  %1321 = vmatprep.subr.bf16.mxu0 0
  %1322 = vmatpush2.bf16.msra.mxu0 0
  %1323 = vmatprep.subr.bf16.mxu0 0
  %1324 = vmatpush2.bf16.msra.mxu0 0
  %1325 = vmatprep.subr.bf16.mxu0 0
  %1326 = vmatpush2.bf16.msra.mxu0 0
  %1327 = vmatprep.subr.bf16.mxu0 0
  %1328 = vmatpush2.bf16.msra.mxu0 0
  %1329 = vmatprep.mubr.bf16.mxu0 0
  %1330 = vmatmul.mubr.bf16.gmra.mxu0 %v982
  %v1331 = vpop.f32.mrf.mxu0
  %v1332 = vadd.f32 0.0, %v1331
  %v1333 = vpop.f32.mrf.mxu0
  %v1334 = vpop.f32.mrf.mxu0
  %v1335 = vadd.f32 0.0, %v1334
  %v1336 = vpop.f32.mrf.mxu0
  %1337 = vmatprep.mubr.bf16.mxu0 0
  %1338 = vmatmul.mubr.bf16.gmra.mxu0 %v985
  %v1339 = vpop.f32.mrf.mxu0
  %v1340 = vadd.f32 0.0, %v1339
  %v1341 = vpop.f32.mrf.mxu0
  %v1342 = vpop.f32.mrf.mxu0
  %v1343 = vadd.f32 0.0, %v1342
  %v1344 = vpop.f32.mrf.mxu0
  %1345 = vmatprep.mubr.bf16.mxu0 0
  %1346 = vmatmul.mubr.bf16.gmra.mxu0 %v988
  %v1347 = vpop.f32.mrf.mxu0
  %v1348 = vadd.f32 0.0, %v1347
  %v1349 = vpop.f32.mrf.mxu0
  %v1350 = vpop.f32.mrf.mxu0
  %v1351 = vadd.f32 0.0, %v1350
  %v1352 = vpop.f32.mrf.mxu0
  %1353 = vmatprep.mubr.bf16.mxu0 0
  %1354 = vmatmul.mubr.bf16.gmra.mxu0 %v991
  %v1355 = vpop.f32.mrf.mxu0
  %v1356 = vadd.f32 0.0, %v1355
  %v1357 = vpop.f32.mrf.mxu0
  %v1358 = vpop.f32.mrf.mxu0
  %v1359 = vpop.f32.mrf.mxu0
  %1360 = vdwg.mxu0
  %1361 = vmatprep.subr.bf16.mxu0 0
  %1362 = vmatpush1.bf16.msra.mxu0 0
  %1363 = vmatprep.subr.bf16.mxu0 0
  %1364 = vmatpush1.bf16.msra.mxu0 0
  %1365 = vmatprep.subr.bf16.mxu0 0
  %1366 = vmatpush1.bf16.msra.mxu0 %v294
  %1367 = vmatprep.subr.bf16.mxu0 0
  %1368 = vmatpush1.bf16.msra.mxu0 %v274
  %1369 = vmatprep.subr.bf16.mxu0 0
  %1370 = vmatpush1.bf16.msra.mxu0 %v273
  %1371 = vmatprep.subr.bf16.mxu0 0
  %1372 = vmatpush1.bf16.msra.mxu0 %v272
  %1373 = vmatprep.subr.bf16.mxu0 0
  %1374 = vmatpush1.bf16.msra.mxu0 %v271
  %1375 = vmatprep.subr.bf16.mxu0 0
  %1376 = vmatpush1.bf16.msra.mxu0 %v270
  %1377 = vmatprep.subr.bf16.mxu0 0
  %1378 = vmatpush2.bf16.msra.mxu0 0
  %1379 = vmatprep.subr.bf16.mxu0 0
  %1380 = vmatpush2.bf16.msra.mxu0 0
  %1381 = vmatprep.subr.bf16.mxu0 0
  %1382 = vmatpush2.bf16.msra.mxu0 0
  %1383 = vmatprep.subr.bf16.mxu0 0
  %1384 = vmatpush2.bf16.msra.mxu0 0
  %1385 = vmatprep.subr.bf16.mxu0 0
  %1386 = vmatpush2.bf16.msra.mxu0 0
  %1387 = vmatprep.subr.bf16.mxu0 0
  %1388 = vmatpush2.bf16.msra.mxu0 0
  %1389 = vmatprep.subr.bf16.mxu0 0
  %1390 = vmatpush2.bf16.msra.mxu0 0
  %1391 = vmatprep.subr.bf16.mxu0 0
  %1392 = vmatpush2.bf16.msra.mxu0 0
  %1393 = vmatprep.mubr.bf16.mxu0 0
  %1394 = vmatmul.mubr.bf16.gmra.mxu0 %v409
  %v1395 = vpop.f32.mrf.mxu0
  %v1396 = vadd.f32 %v1332, %v1395
  %v1397 = vpop.f32.mrf.mxu0
  %v1398 = vpop.f32.mrf.mxu0
  %v1399 = vadd.f32 %v1335, %v1398
  %v1400 = vpop.f32.mrf.mxu0
  %1401 = vmatprep.mubr.bf16.mxu0 0
  %1402 = vmatmul.mubr.bf16.gmra.mxu0 %v412
  %v1403 = vpop.f32.mrf.mxu0
  %v1404 = vadd.f32 %v1340, %v1403
  %v1405 = vpop.f32.mrf.mxu0
  %v1406 = vpop.f32.mrf.mxu0
  %v1407 = vadd.f32 %v1343, %v1406
  %v1408 = vpop.f32.mrf.mxu0
  %1409 = vmatprep.mubr.bf16.mxu0 0
  %1410 = vmatmul.mubr.bf16.gmra.mxu0 %v415
  %v1411 = vpop.f32.mrf.mxu0
  %v1412 = vadd.f32 %v1348, %v1411
  %v1413 = vpop.f32.mrf.mxu0
  %v1414 = vpop.f32.mrf.mxu0
  %v1415 = vadd.f32 %v1351, %v1414
  %v1416 = vpop.f32.mrf.mxu0
  %1417 = vmatprep.mubr.bf16.mxu0 0
  %1418 = vmatmul.mubr.bf16.gmra.mxu0 %v418
  %v1419 = vpop.f32.mrf.mxu0
  %v1420 = vadd.f32 %v1356, %v1419
  %v1421 = vpop.f32.mrf.mxu0
  %v1422 = vpop.f32.mrf.mxu0
  %v1423 = vpop.f32.mrf.mxu0
  %1424 = vdwg.mxu0
  %v1426 = vsel %vm165, %v55, 0
  %v1429 = vsel %vm165, %v56, 0
  %v1432 = vsel %vm165, %v57, 0
  %v1435 = vsel %vm165, %v58, 0
  %1437 = vmatprep.subr.bf16.mxu0 0
  %1438 = vmatpush1.bf16.msra.mxu0 0
  %1439 = vmatprep.subr.bf16.mxu0 0
  %1440 = vmatpush1.bf16.msra.mxu0 0
  %1441 = vmatprep.subr.bf16.mxu0 0
  %1442 = vmatpush1.bf16.msra.mxu0 %v421
  %1443 = vmatprep.subr.bf16.mxu0 0
  %1444 = vmatpush1.bf16.msra.mxu0 %v401
  %1445 = vmatprep.subr.bf16.mxu0 0
  %1446 = vmatpush1.bf16.msra.mxu0 %v400
  %1447 = vmatprep.subr.bf16.mxu0 0
  %1448 = vmatpush1.bf16.msra.mxu0 %v399
  %1449 = vmatprep.subr.bf16.mxu0 0
  %1450 = vmatpush1.bf16.msra.mxu0 %v398
  %1451 = vmatprep.subr.bf16.mxu0 0
  %1452 = vmatpush1.bf16.msra.mxu0 %v397
  %1453 = vmatprep.subr.bf16.mxu0 0
  %1454 = vmatpush2.bf16.msra.mxu0 0
  %1455 = vmatprep.subr.bf16.mxu0 0
  %1456 = vmatpush2.bf16.msra.mxu0 0
  %1457 = vmatprep.subr.bf16.mxu0 0
  %1458 = vmatpush2.bf16.msra.mxu0 0
  %1459 = vmatprep.subr.bf16.mxu0 0
  %1460 = vmatpush2.bf16.msra.mxu0 0
  %1461 = vmatprep.subr.bf16.mxu0 0
  %1462 = vmatpush2.bf16.msra.mxu0 0
  %1463 = vmatprep.subr.bf16.mxu0 0
  %1464 = vmatpush2.bf16.msra.mxu0 0
  %1465 = vmatprep.subr.bf16.mxu0 0
  %1466 = vmatpush2.bf16.msra.mxu0 0
  %1467 = vmatprep.subr.bf16.mxu0 0
  %1468 = vmatpush2.bf16.msra.mxu0 0
  %1469 = vmatprep.mubr.bf16.mxu0 0
  %1470 = vmatmul.mubr.bf16.gmra.mxu0 %v1426
  %v1471 = vpop.f32.mrf.mxu0
  %v1472 = vadd.f32 0.0, %v1471
  %v1473 = vpop.f32.mrf.mxu0
  %v1474 = vpop.f32.mrf.mxu0
  %v1475 = vadd.f32 0.0, %v1474
  %v1476 = vpop.f32.mrf.mxu0
  %1477 = vmatprep.mubr.bf16.mxu0 0
  %1478 = vmatmul.mubr.bf16.gmra.mxu0 %v1429
  %v1479 = vpop.f32.mrf.mxu0
  %v1480 = vadd.f32 0.0, %v1479
  %v1481 = vpop.f32.mrf.mxu0
  %v1482 = vpop.f32.mrf.mxu0
  %v1483 = vadd.f32 0.0, %v1482
  %v1484 = vpop.f32.mrf.mxu0
  %1485 = vmatprep.mubr.bf16.mxu0 0
  %1486 = vmatmul.mubr.bf16.gmra.mxu0 %v1432
  %v1487 = vpop.f32.mrf.mxu0
  %v1488 = vadd.f32 0.0, %v1487
  %v1489 = vpop.f32.mrf.mxu0
  %v1490 = vpop.f32.mrf.mxu0
  %v1491 = vadd.f32 0.0, %v1490
  %v1492 = vpop.f32.mrf.mxu0
  %1493 = vmatprep.mubr.bf16.mxu0 0
  %1494 = vmatmul.mubr.bf16.gmra.mxu0 %v1435
  %v1495 = vpop.f32.mrf.mxu0
  %v1496 = vadd.f32 0.0, %v1495
  %v1497 = vpop.f32.mrf.mxu0
  %v1498 = vpop.f32.mrf.mxu0
  %v1499 = vpop.f32.mrf.mxu0
  %1500 = vdwg.mxu0
  %v1501 = vadd.f32 %v1396, %v1472
  %v1502 = vadd.f32 %v1399, %v1475
  %v1503 = vadd.f32 %v1404, %v1480
  %v1504 = vadd.f32 %v1407, %v1483
  %v1505 = vadd.f32 %v1412, %v1488
  %v1506 = vadd.f32 %v1415, %v1491
  %v1507 = vadd.f32 %v1420, %v1496
  %1508 = vmatprep.subr.bf16.mxu0 0
  %1509 = vmatpush1.bf16.msra.mxu0 0
  %1510 = vmatprep.subr.bf16.mxu0 0
  %1511 = vmatpush1.bf16.msra.mxu0 0
  %1512 = vmatprep.subr.bf16.mxu0 0
  %1513 = vmatpush1.bf16.msra.mxu0 %v556
  %1514 = vmatprep.subr.bf16.mxu0 0
  %1515 = vmatpush1.bf16.msra.mxu0 %v548
  %1516 = vmatprep.subr.bf16.mxu0 0
  %1517 = vmatpush1.bf16.msra.mxu0 %v547
  %1518 = vmatprep.subr.bf16.mxu0 0
  %1519 = vmatpush1.bf16.msra.mxu0 %v546
  %1520 = vmatprep.subr.bf16.mxu0 0
  %1521 = vmatpush1.bf16.msra.mxu0 %v545
  %1522 = vmatprep.subr.bf16.mxu0 0
  %1523 = vmatpush1.bf16.msra.mxu0 %v544
  %1524 = vmatprep.subr.bf16.mxu0 0
  %1525 = vmatpush2.bf16.msra.mxu0 0
  %1526 = vmatprep.subr.bf16.mxu0 0
  %1527 = vmatpush2.bf16.msra.mxu0 0
  %1528 = vmatprep.subr.bf16.mxu0 0
  %1529 = vmatpush2.bf16.msra.mxu0 0
  %1530 = vmatprep.subr.bf16.mxu0 0
  %1531 = vmatpush2.bf16.msra.mxu0 0
  %1532 = vmatprep.subr.bf16.mxu0 0
  %1533 = vmatpush2.bf16.msra.mxu0 0
  %1534 = vmatprep.subr.bf16.mxu0 0
  %1535 = vmatpush2.bf16.msra.mxu0 0
  %1536 = vmatprep.subr.bf16.mxu0 0
  %1537 = vmatpush2.bf16.msra.mxu0 0
  %1538 = vmatprep.subr.bf16.mxu0 0
  %1539 = vmatpush2.bf16.msra.mxu0 0
  %1540 = vmatprep.mubr.bf16.mxu0 0
  %1541 = vmatmul.mubr.bf16.gmra.mxu0 %v982
  %v1542 = vpop.f32.mrf.mxu0
  %v1543 = vadd.f32 0.0, %v1542
  %v1544 = vpop.f32.mrf.mxu0
  %v1545 = vpop.f32.mrf.mxu0
  %v1546 = vadd.f32 0.0, %v1545
  %v1547 = vpop.f32.mrf.mxu0
  %1548 = vmatprep.mubr.bf16.mxu0 0
  %1549 = vmatmul.mubr.bf16.gmra.mxu0 %v985
  %v1550 = vpop.f32.mrf.mxu0
  %v1551 = vadd.f32 0.0, %v1550
  %v1552 = vpop.f32.mrf.mxu0
  %v1553 = vpop.f32.mrf.mxu0
  %v1554 = vadd.f32 0.0, %v1553
  %v1555 = vpop.f32.mrf.mxu0
  %1556 = vmatprep.mubr.bf16.mxu0 0
  %1557 = vmatmul.mubr.bf16.gmra.mxu0 %v988
  %v1558 = vpop.f32.mrf.mxu0
  %v1559 = vadd.f32 0.0, %v1558
  %v1560 = vpop.f32.mrf.mxu0
  %v1561 = vpop.f32.mrf.mxu0
  %v1562 = vadd.f32 0.0, %v1561
  %v1563 = vpop.f32.mrf.mxu0
  %1564 = vmatprep.mubr.bf16.mxu0 0
  %1565 = vmatmul.mubr.bf16.gmra.mxu0 %v991
  %v1566 = vpop.f32.mrf.mxu0
  %v1567 = vadd.f32 0.0, %v1566
  %v1568 = vpop.f32.mrf.mxu0
  %v1569 = vpop.f32.mrf.mxu0
  %v1570 = vpop.f32.mrf.mxu0
  %1571 = vdwg.mxu0
  %1572 = vmatprep.subr.bf16.mxu0 0
  %1573 = vmatpush1.bf16.msra.mxu0 0
  %1574 = vmatprep.subr.bf16.mxu0 0
  %1575 = vmatpush1.bf16.msra.mxu0 0
  %1576 = vmatprep.subr.bf16.mxu0 0
  %1577 = vmatpush1.bf16.msra.mxu0 %v658
  %1578 = vmatprep.subr.bf16.mxu0 0
  %1579 = vmatpush1.bf16.msra.mxu0 %v650
  %1580 = vmatprep.subr.bf16.mxu0 0
  %1581 = vmatpush1.bf16.msra.mxu0 %v649
  %1582 = vmatprep.subr.bf16.mxu0 0
  %1583 = vmatpush1.bf16.msra.mxu0 %v648
  %1584 = vmatprep.subr.bf16.mxu0 0
  %1585 = vmatpush1.bf16.msra.mxu0 %v647
  %1586 = vmatprep.subr.bf16.mxu0 0
  %1587 = vmatpush1.bf16.msra.mxu0 %v646
  %1588 = vmatprep.subr.bf16.mxu0 0
  %1589 = vmatpush2.bf16.msra.mxu0 0
  %1590 = vmatprep.subr.bf16.mxu0 0
  %1591 = vmatpush2.bf16.msra.mxu0 0
  %1592 = vmatprep.subr.bf16.mxu0 0
  %1593 = vmatpush2.bf16.msra.mxu0 0
  %1594 = vmatprep.subr.bf16.mxu0 0
  %1595 = vmatpush2.bf16.msra.mxu0 0
  %1596 = vmatprep.subr.bf16.mxu0 0
  %1597 = vmatpush2.bf16.msra.mxu0 0
  %1598 = vmatprep.subr.bf16.mxu0 0
  %1599 = vmatpush2.bf16.msra.mxu0 0
  %1600 = vmatprep.subr.bf16.mxu0 0
  %1601 = vmatpush2.bf16.msra.mxu0 0
  %1602 = vmatprep.subr.bf16.mxu0 0
  %1603 = vmatpush2.bf16.msra.mxu0 0
  %1604 = vmatprep.mubr.bf16.mxu0 0
  %1605 = vmatmul.mubr.bf16.gmra.mxu0 %v409
  %v1606 = vpop.f32.mrf.mxu0
  %v1607 = vadd.f32 %v1543, %v1606
  %v1608 = vpop.f32.mrf.mxu0
  %v1609 = vpop.f32.mrf.mxu0
  %v1610 = vadd.f32 %v1546, %v1609
  %v1611 = vpop.f32.mrf.mxu0
  %1612 = vmatprep.mubr.bf16.mxu0 0
  %1613 = vmatmul.mubr.bf16.gmra.mxu0 %v412
  %v1614 = vpop.f32.mrf.mxu0
  %v1615 = vadd.f32 %v1551, %v1614
  %v1616 = vpop.f32.mrf.mxu0
  %v1617 = vpop.f32.mrf.mxu0
  %v1618 = vadd.f32 %v1554, %v1617
  %v1619 = vpop.f32.mrf.mxu0
  %1620 = vmatprep.mubr.bf16.mxu0 0
  %1621 = vmatmul.mubr.bf16.gmra.mxu0 %v415
  %v1622 = vpop.f32.mrf.mxu0
  %v1623 = vadd.f32 %v1559, %v1622
  %v1624 = vpop.f32.mrf.mxu0
  %v1625 = vpop.f32.mrf.mxu0
  %v1626 = vadd.f32 %v1562, %v1625
  %v1627 = vpop.f32.mrf.mxu0
  %1628 = vmatprep.mubr.bf16.mxu0 0
  %1629 = vmatmul.mubr.bf16.gmra.mxu0 %v418
  %v1630 = vpop.f32.mrf.mxu0
  %v1631 = vadd.f32 %v1567, %v1630
  %v1632 = vpop.f32.mrf.mxu0
  %v1633 = vpop.f32.mrf.mxu0
  %v1634 = vpop.f32.mrf.mxu0
  %1635 = vdwg.mxu0
  %1636 = vmatprep.subr.bf16.mxu0 0
  %1637 = vmatpush1.bf16.msra.mxu0 0
  %1638 = vmatprep.subr.bf16.mxu0 0
  %1639 = vmatpush1.bf16.msra.mxu0 0
  %1640 = vmatprep.subr.bf16.mxu0 0
  %1641 = vmatpush1.bf16.msra.mxu0 %v773
  %1642 = vmatprep.subr.bf16.mxu0 0
  %1643 = vmatpush1.bf16.msra.mxu0 %v765
  %1644 = vmatprep.subr.bf16.mxu0 0
  %1645 = vmatpush1.bf16.msra.mxu0 %v764
  %1646 = vmatprep.subr.bf16.mxu0 0
  %1647 = vmatpush1.bf16.msra.mxu0 %v763
  %1648 = vmatprep.subr.bf16.mxu0 0
  %1649 = vmatpush1.bf16.msra.mxu0 %v762
  %1650 = vmatprep.subr.bf16.mxu0 0
  %1651 = vmatpush1.bf16.msra.mxu0 %v761
  %1652 = vmatprep.subr.bf16.mxu0 0
  %1653 = vmatpush2.bf16.msra.mxu0 0
  %1654 = vmatprep.subr.bf16.mxu0 0
  %1655 = vmatpush2.bf16.msra.mxu0 0
  %1656 = vmatprep.subr.bf16.mxu0 0
  %1657 = vmatpush2.bf16.msra.mxu0 0
  %1658 = vmatprep.subr.bf16.mxu0 0
  %1659 = vmatpush2.bf16.msra.mxu0 0
  %1660 = vmatprep.subr.bf16.mxu0 0
  %1661 = vmatpush2.bf16.msra.mxu0 0
  %1662 = vmatprep.subr.bf16.mxu0 0
  %1663 = vmatpush2.bf16.msra.mxu0 0
  %1664 = vmatprep.subr.bf16.mxu0 0
  %1665 = vmatpush2.bf16.msra.mxu0 0
  %1666 = vmatprep.subr.bf16.mxu0 0
  %1667 = vmatpush2.bf16.msra.mxu0 0
  %1668 = vmatprep.mubr.bf16.mxu0 0
  %1669 = vmatmul.mubr.bf16.gmra.mxu0 %v1426
  %v1670 = vpop.f32.mrf.mxu0
  %v1671 = vadd.f32 0.0, %v1670
  %v1672 = vpop.f32.mrf.mxu0
  %v1673 = vpop.f32.mrf.mxu0
  %v1674 = vadd.f32 0.0, %v1673
  %v1675 = vpop.f32.mrf.mxu0
  %1676 = vmatprep.mubr.bf16.mxu0 0
  %1677 = vmatmul.mubr.bf16.gmra.mxu0 %v1429
  %v1678 = vpop.f32.mrf.mxu0
  %v1679 = vadd.f32 0.0, %v1678
  %v1680 = vpop.f32.mrf.mxu0
  %v1681 = vpop.f32.mrf.mxu0
  %v1682 = vadd.f32 0.0, %v1681
  %v1683 = vpop.f32.mrf.mxu0
  %1684 = vmatprep.mubr.bf16.mxu0 0
  %1685 = vmatmul.mubr.bf16.gmra.mxu0 %v1432
  %v1686 = vpop.f32.mrf.mxu0
  %v1687 = vadd.f32 0.0, %v1686
  %v1688 = vpop.f32.mrf.mxu0
  %v1689 = vpop.f32.mrf.mxu0
  %v1690 = vadd.f32 0.0, %v1689
  %v1691 = vpop.f32.mrf.mxu0
  %1692 = vmatprep.mubr.bf16.mxu0 0
  %1693 = vmatmul.mubr.bf16.gmra.mxu0 %v1435
  %v1694 = vpop.f32.mrf.mxu0
  %v1695 = vadd.f32 0.0, %v1694
  %v1696 = vpop.f32.mrf.mxu0
  %v1697 = vpop.f32.mrf.mxu0
  %v1698 = vpop.f32.mrf.mxu0
  %1699 = vdwg.mxu0
  %v1700 = vadd.f32 %v1607, %v1671
  %v1701 = vadd.f32 %v1610, %v1674
  %v1702 = vadd.f32 %v1615, %v1679
  %v1703 = vadd.f32 %v1618, %v1682
  %v1704 = vadd.f32 %v1623, %v1687
  %v1705 = vadd.f32 %v1626, %v1690
  %v1706 = vadd.f32 %v1631, %v1695
  %v1707 = vmax.f32 %v1501, %v1700
  %v1708 = vmax.f32 %v1502, %v1701
  %v1709 = vmax.f32 %v1503, %v1702
  %v1710 = vmax.f32 %v1504, %v1703
  %v1711 = vmax.f32 %v1505, %v1704
  %v1712 = vmax.f32 %v1506, %v1705
  %v1713 = vmax.f32 %v1507, %v1706
  %1714 = vmatprep.subr.bf16.mxu0 0
  %1715 = vmatpush1.bf16.msra.mxu0 0
  %1716 = vmatprep.subr.bf16.mxu0 0
  %1717 = vmatpush1.bf16.msra.mxu0 0
  %1718 = vmatprep.subr.bf16.mxu0 0
  %1719 = vmatpush1.bf16.msra.mxu0 %v180
  %1720 = vmatprep.subr.bf16.mxu0 0
  %1721 = vmatpush1.bf16.msra.mxu0 %v158
  %1722 = vmatprep.subr.bf16.mxu0 0
  %1723 = vmatpush1.bf16.msra.mxu0 %v157
  %1724 = vmatprep.subr.bf16.mxu0 0
  %1725 = vmatpush1.bf16.msra.mxu0 %v156
  %1726 = vmatprep.subr.bf16.mxu0 0
  %1727 = vmatpush1.bf16.msra.mxu0 %v155
  %1728 = vmatprep.subr.bf16.mxu0 0
  %1729 = vmatpush1.bf16.msra.mxu0 %v154
  %1730 = vmatprep.subr.bf16.mxu0 0
  %1731 = vmatpush2.bf16.msra.mxu0 0
  %1732 = vmatprep.subr.bf16.mxu0 0
  %1733 = vmatpush2.bf16.msra.mxu0 0
  %1734 = vmatprep.subr.bf16.mxu0 0
  %1735 = vmatpush2.bf16.msra.mxu0 0
  %1736 = vmatprep.subr.bf16.mxu0 0
  %1737 = vmatpush2.bf16.msra.mxu0 0
  %1738 = vmatprep.subr.bf16.mxu0 0
  %1739 = vmatpush2.bf16.msra.mxu0 0
  %1740 = vmatprep.subr.bf16.mxu0 0
  %1741 = vmatpush2.bf16.msra.mxu0 0
  %1742 = vmatprep.subr.bf16.mxu0 0
  %1743 = vmatpush2.bf16.msra.mxu0 0
  %1744 = vmatprep.subr.bf16.mxu0 0
  %1745 = vmatpush2.bf16.msra.mxu0 0
  %1746 = vmatprep.mubr.bf16.mxu0 0
  %1747 = vmatmul.mubr.bf16.gmra.mxu0 %v1426
  %v1748 = vpop.f32.mrf.mxu0
  %v1749 = vadd.f32 0.0, %v1748
  %v1750 = vpop.f32.mrf.mxu0
  %v1751 = vpop.f32.mrf.mxu0
  %v1752 = vadd.f32 0.0, %v1751
  %v1753 = vpop.f32.mrf.mxu0
  %1754 = vmatprep.mubr.bf16.mxu0 0
  %1755 = vmatmul.mubr.bf16.gmra.mxu0 %v1429
  %v1756 = vpop.f32.mrf.mxu0
  %v1757 = vadd.f32 0.0, %v1756
  %v1758 = vpop.f32.mrf.mxu0
  %v1759 = vpop.f32.mrf.mxu0
  %v1760 = vadd.f32 0.0, %v1759
  %v1761 = vpop.f32.mrf.mxu0
  %1762 = vmatprep.mubr.bf16.mxu0 0
  %1763 = vmatmul.mubr.bf16.gmra.mxu0 %v1432
  %v1764 = vpop.f32.mrf.mxu0
  %v1765 = vadd.f32 0.0, %v1764
  %v1766 = vpop.f32.mrf.mxu0
  %v1767 = vpop.f32.mrf.mxu0
  %v1768 = vadd.f32 0.0, %v1767
  %v1769 = vpop.f32.mrf.mxu0
  %1770 = vmatprep.mubr.bf16.mxu0 0
  %1771 = vmatmul.mubr.bf16.gmra.mxu0 %v1435
  %v1772 = vpop.f32.mrf.mxu0
  %v1773 = vadd.f32 0.0, %v1772
  %v1774 = vpop.f32.mrf.mxu0
  %v1775 = vpop.f32.mrf.mxu0
  %v1776 = vpop.f32.mrf.mxu0
  %1777 = vdwg.mxu0
  %1778 = vmatprep.subr.bf16.mxu0 0
  %1779 = vmatpush1.bf16.msra.mxu0 0
  %1780 = vmatprep.subr.bf16.mxu0 0
  %1781 = vmatpush1.bf16.msra.mxu0 0
  %1782 = vmatprep.subr.bf16.mxu0 0
  %1783 = vmatpush1.bf16.msra.mxu0 %v294
  %1784 = vmatprep.subr.bf16.mxu0 0
  %1785 = vmatpush1.bf16.msra.mxu0 %v274
  %1786 = vmatprep.subr.bf16.mxu0 0
  %1787 = vmatpush1.bf16.msra.mxu0 %v273
  %1788 = vmatprep.subr.bf16.mxu0 0
  %1789 = vmatpush1.bf16.msra.mxu0 %v272
  %1790 = vmatprep.subr.bf16.mxu0 0
  %1791 = vmatpush1.bf16.msra.mxu0 %v271
  %1792 = vmatprep.subr.bf16.mxu0 0
  %1793 = vmatpush1.bf16.msra.mxu0 %v270
  %1794 = vmatprep.subr.bf16.mxu0 0
  %1795 = vmatpush2.bf16.msra.mxu0 0
  %1796 = vmatprep.subr.bf16.mxu0 0
  %1797 = vmatpush2.bf16.msra.mxu0 0
  %1798 = vmatprep.subr.bf16.mxu0 0
  %1799 = vmatpush2.bf16.msra.mxu0 0
  %1800 = vmatprep.subr.bf16.mxu0 0
  %1801 = vmatpush2.bf16.msra.mxu0 0
  %1802 = vmatprep.subr.bf16.mxu0 0
  %1803 = vmatpush2.bf16.msra.mxu0 0
  %1804 = vmatprep.subr.bf16.mxu0 0
  %1805 = vmatpush2.bf16.msra.mxu0 0
  %1806 = vmatprep.subr.bf16.mxu0 0
  %1807 = vmatpush2.bf16.msra.mxu0 0
  %1808 = vmatprep.subr.bf16.mxu0 0
  %1809 = vmatpush2.bf16.msra.mxu0 0
  %1810 = vmatprep.mubr.bf16.mxu0 0
  %1811 = vmatmul.mubr.bf16.gmra.mxu0 %v982
  %v1812 = vpop.f32.mrf.mxu0
  %v1813 = vadd.f32 %v1749, %v1812
  %v1814 = vpop.f32.mrf.mxu0
  %v1815 = vpop.f32.mrf.mxu0
  %v1816 = vadd.f32 %v1752, %v1815
  %v1817 = vpop.f32.mrf.mxu0
  %1818 = vmatprep.mubr.bf16.mxu0 0
  %1819 = vmatmul.mubr.bf16.gmra.mxu0 %v985
  %v1820 = vpop.f32.mrf.mxu0
  %v1821 = vadd.f32 %v1757, %v1820
  %v1822 = vpop.f32.mrf.mxu0
  %v1823 = vpop.f32.mrf.mxu0
  %v1824 = vadd.f32 %v1760, %v1823
  %v1825 = vpop.f32.mrf.mxu0
  %1826 = vmatprep.mubr.bf16.mxu0 0
  %1827 = vmatmul.mubr.bf16.gmra.mxu0 %v988
  %v1828 = vpop.f32.mrf.mxu0
  %v1829 = vadd.f32 %v1765, %v1828
  %v1830 = vpop.f32.mrf.mxu0
  %v1831 = vpop.f32.mrf.mxu0
  %v1832 = vadd.f32 %v1768, %v1831
  %v1833 = vpop.f32.mrf.mxu0
  %1834 = vmatprep.mubr.bf16.mxu0 0
  %1835 = vmatmul.mubr.bf16.gmra.mxu0 %v991
  %v1836 = vpop.f32.mrf.mxu0
  %v1837 = vadd.f32 %v1773, %v1836
  %v1838 = vpop.f32.mrf.mxu0
  %v1839 = vpop.f32.mrf.mxu0
  %v1840 = vpop.f32.mrf.mxu0
  %1841 = vdwg.mxu0
  %v1843 = vsel %vm165, %v78, 0
  %v1846 = vsel %vm165, %v79, 0
  %v1849 = vsel %vm165, %v80, 0
  %v1852 = vsel %vm165, %v81, 0
  %1854 = vmatprep.subr.bf16.mxu0 0
  %1855 = vmatpush1.bf16.msra.mxu0 0
  %1856 = vmatprep.subr.bf16.mxu0 0
  %1857 = vmatpush1.bf16.msra.mxu0 0
  %1858 = vmatprep.subr.bf16.mxu0 0
  %1859 = vmatpush1.bf16.msra.mxu0 %v421
  %1860 = vmatprep.subr.bf16.mxu0 0
  %1861 = vmatpush1.bf16.msra.mxu0 %v401
  %1862 = vmatprep.subr.bf16.mxu0 0
  %1863 = vmatpush1.bf16.msra.mxu0 %v400
  %1864 = vmatprep.subr.bf16.mxu0 0
  %1865 = vmatpush1.bf16.msra.mxu0 %v399
  %1866 = vmatprep.subr.bf16.mxu0 0
  %1867 = vmatpush1.bf16.msra.mxu0 %v398
  %1868 = vmatprep.subr.bf16.mxu0 0
  %1869 = vmatpush1.bf16.msra.mxu0 %v397
  %1870 = vmatprep.subr.bf16.mxu0 0
  %1871 = vmatpush2.bf16.msra.mxu0 0
  %1872 = vmatprep.subr.bf16.mxu0 0
  %1873 = vmatpush2.bf16.msra.mxu0 0
  %1874 = vmatprep.subr.bf16.mxu0 0
  %1875 = vmatpush2.bf16.msra.mxu0 0
  %1876 = vmatprep.subr.bf16.mxu0 0
  %1877 = vmatpush2.bf16.msra.mxu0 0
  %1878 = vmatprep.subr.bf16.mxu0 0
  %1879 = vmatpush2.bf16.msra.mxu0 0
  %1880 = vmatprep.subr.bf16.mxu0 0
  %1881 = vmatpush2.bf16.msra.mxu0 0
  %1882 = vmatprep.subr.bf16.mxu0 0
  %1883 = vmatpush2.bf16.msra.mxu0 0
  %1884 = vmatprep.subr.bf16.mxu0 0
  %1885 = vmatpush2.bf16.msra.mxu0 0
  %1886 = vmatprep.mubr.bf16.mxu0 0
  %1887 = vmatmul.mubr.bf16.gmra.mxu0 %v1843
  %v1888 = vpop.f32.mrf.mxu0
  %v1889 = vadd.f32 0.0, %v1888
  %v1890 = vpop.f32.mrf.mxu0
  %v1891 = vpop.f32.mrf.mxu0
  %v1892 = vadd.f32 0.0, %v1891
  %v1893 = vpop.f32.mrf.mxu0
  %1894 = vmatprep.mubr.bf16.mxu0 0
  %1895 = vmatmul.mubr.bf16.gmra.mxu0 %v1846
  %v1896 = vpop.f32.mrf.mxu0
  %v1897 = vadd.f32 0.0, %v1896
  %v1898 = vpop.f32.mrf.mxu0
  %v1899 = vpop.f32.mrf.mxu0
  %v1900 = vadd.f32 0.0, %v1899
  %v1901 = vpop.f32.mrf.mxu0
  %1902 = vmatprep.mubr.bf16.mxu0 0
  %1903 = vmatmul.mubr.bf16.gmra.mxu0 %v1849
  %v1904 = vpop.f32.mrf.mxu0
  %v1905 = vadd.f32 0.0, %v1904
  %v1906 = vpop.f32.mrf.mxu0
  %v1907 = vpop.f32.mrf.mxu0
  %v1908 = vadd.f32 0.0, %v1907
  %v1909 = vpop.f32.mrf.mxu0
  %1910 = vmatprep.mubr.bf16.mxu0 0
  %1911 = vmatmul.mubr.bf16.gmra.mxu0 %v1852
  %v1912 = vpop.f32.mrf.mxu0
  %v1913 = vadd.f32 0.0, %v1912
  %v1914 = vpop.f32.mrf.mxu0
  %v1915 = vpop.f32.mrf.mxu0
  %v1916 = vpop.f32.mrf.mxu0
  %1917 = vdwg.mxu0
  %v1918 = vadd.f32 %v1813, %v1889
  %v1919 = vadd.f32 %v1816, %v1892
  %v1920 = vadd.f32 %v1821, %v1897
  %v1921 = vadd.f32 %v1824, %v1900
  %v1922 = vadd.f32 %v1829, %v1905
  %v1923 = vadd.f32 %v1832, %v1908
  %v1924 = vadd.f32 %v1837, %v1913
  %v1925 = vmax.f32 %v1707, %v1918
  %v1926 = vmax.f32 %v1708, %v1919
  %v1927 = vmax.f32 %v1709, %v1920
  %v1928 = vmax.f32 %v1710, %v1921
  %v1929 = vmax.f32 %v1711, %v1922
  %v1930 = vmax.f32 %v1712, %v1923
  %v1931 = vmax.f32 %v1713, %v1924
  %1932 = vmatprep.subr.bf16.mxu0 0
  %1933 = vmatpush1.bf16.msra.mxu0 0
  %1934 = vmatprep.subr.bf16.mxu0 0
  %1935 = vmatpush1.bf16.msra.mxu0 0
  %1936 = vmatprep.subr.bf16.mxu0 0
  %1937 = vmatpush1.bf16.msra.mxu0 %v556
  %1938 = vmatprep.subr.bf16.mxu0 0
  %1939 = vmatpush1.bf16.msra.mxu0 %v548
  %1940 = vmatprep.subr.bf16.mxu0 0
  %1941 = vmatpush1.bf16.msra.mxu0 %v547
  %1942 = vmatprep.subr.bf16.mxu0 0
  %1943 = vmatpush1.bf16.msra.mxu0 %v546
  %1944 = vmatprep.subr.bf16.mxu0 0
  %1945 = vmatpush1.bf16.msra.mxu0 %v545
  %1946 = vmatprep.subr.bf16.mxu0 0
  %1947 = vmatpush1.bf16.msra.mxu0 %v544
  %1948 = vmatprep.subr.bf16.mxu0 0
  %1949 = vmatpush2.bf16.msra.mxu0 0
  %1950 = vmatprep.subr.bf16.mxu0 0
  %1951 = vmatpush2.bf16.msra.mxu0 0
  %1952 = vmatprep.subr.bf16.mxu0 0
  %1953 = vmatpush2.bf16.msra.mxu0 0
  %1954 = vmatprep.subr.bf16.mxu0 0
  %1955 = vmatpush2.bf16.msra.mxu0 0
  %1956 = vmatprep.subr.bf16.mxu0 0
  %1957 = vmatpush2.bf16.msra.mxu0 0
  %1958 = vmatprep.subr.bf16.mxu0 0
  %1959 = vmatpush2.bf16.msra.mxu0 0
  %1960 = vmatprep.subr.bf16.mxu0 0
  %1961 = vmatpush2.bf16.msra.mxu0 0
  %1962 = vmatprep.subr.bf16.mxu0 0
  %1963 = vmatpush2.bf16.msra.mxu0 0
  %1964 = vmatprep.mubr.bf16.mxu0 0
  %1965 = vmatmul.mubr.bf16.gmra.mxu0 %v1426
  %v1966 = vpop.f32.mrf.mxu0
  %v1967 = vadd.f32 0.0, %v1966
  %v1968 = vpop.f32.mrf.mxu0
  %v1969 = vpop.f32.mrf.mxu0
  %v1970 = vadd.f32 0.0, %v1969
  %v1971 = vpop.f32.mrf.mxu0
  %1972 = vmatprep.mubr.bf16.mxu0 0
  %1973 = vmatmul.mubr.bf16.gmra.mxu0 %v1429
  %v1974 = vpop.f32.mrf.mxu0
  %v1975 = vadd.f32 0.0, %v1974
  %v1976 = vpop.f32.mrf.mxu0
  %v1977 = vpop.f32.mrf.mxu0
  %v1978 = vadd.f32 0.0, %v1977
  %v1979 = vpop.f32.mrf.mxu0
  %1980 = vmatprep.mubr.bf16.mxu0 0
  %1981 = vmatmul.mubr.bf16.gmra.mxu0 %v1432
  %v1982 = vpop.f32.mrf.mxu0
  %v1983 = vadd.f32 0.0, %v1982
  %v1984 = vpop.f32.mrf.mxu0
  %v1985 = vpop.f32.mrf.mxu0
  %v1986 = vadd.f32 0.0, %v1985
  %v1987 = vpop.f32.mrf.mxu0
  %1988 = vmatprep.mubr.bf16.mxu0 0
  %1989 = vmatmul.mubr.bf16.gmra.mxu0 %v1435
  %v1990 = vpop.f32.mrf.mxu0
  %v1991 = vadd.f32 0.0, %v1990
  %v1992 = vpop.f32.mrf.mxu0
  %v1993 = vpop.f32.mrf.mxu0
  %v1994 = vpop.f32.mrf.mxu0
  %1995 = vdwg.mxu0
  %1996 = vmatprep.subr.bf16.mxu0 0
  %1997 = vmatpush1.bf16.msra.mxu0 0
  %1998 = vmatprep.subr.bf16.mxu0 0
  %1999 = vmatpush1.bf16.msra.mxu0 0
  %2000 = vmatprep.subr.bf16.mxu0 0
  %2001 = vmatpush1.bf16.msra.mxu0 %v658
  %2002 = vmatprep.subr.bf16.mxu0 0
  %2003 = vmatpush1.bf16.msra.mxu0 %v650
  %2004 = vmatprep.subr.bf16.mxu0 0
  %2005 = vmatpush1.bf16.msra.mxu0 %v649
  %2006 = vmatprep.subr.bf16.mxu0 0
  %2007 = vmatpush1.bf16.msra.mxu0 %v648
  %2008 = vmatprep.subr.bf16.mxu0 0
  %2009 = vmatpush1.bf16.msra.mxu0 %v647
  %2010 = vmatprep.subr.bf16.mxu0 0
  %2011 = vmatpush1.bf16.msra.mxu0 %v646
  %2012 = vmatprep.subr.bf16.mxu0 0
  %2013 = vmatpush2.bf16.msra.mxu0 0
  %2014 = vmatprep.subr.bf16.mxu0 0
  %2015 = vmatpush2.bf16.msra.mxu0 0
  %2016 = vmatprep.subr.bf16.mxu0 0
  %2017 = vmatpush2.bf16.msra.mxu0 0
  %2018 = vmatprep.subr.bf16.mxu0 0
  %2019 = vmatpush2.bf16.msra.mxu0 0
  %2020 = vmatprep.subr.bf16.mxu0 0
  %2021 = vmatpush2.bf16.msra.mxu0 0
  %2022 = vmatprep.subr.bf16.mxu0 0
  %2023 = vmatpush2.bf16.msra.mxu0 0
  %2024 = vmatprep.subr.bf16.mxu0 0
  %2025 = vmatpush2.bf16.msra.mxu0 0
  %2026 = vmatprep.subr.bf16.mxu0 0
  %2027 = vmatpush2.bf16.msra.mxu0 0
  %2028 = vmatprep.mubr.bf16.mxu0 0
  %2029 = vmatmul.mubr.bf16.gmra.mxu0 %v982
  %v2030 = vpop.f32.mrf.mxu0
  %v2031 = vadd.f32 %v1967, %v2030
  %v2032 = vpop.f32.mrf.mxu0
  %v2033 = vpop.f32.mrf.mxu0
  %v2034 = vadd.f32 %v1970, %v2033
  %v2035 = vpop.f32.mrf.mxu0
  %2036 = vmatprep.mubr.bf16.mxu0 0
  %2037 = vmatmul.mubr.bf16.gmra.mxu0 %v985
  %v2038 = vpop.f32.mrf.mxu0
  %v2039 = vadd.f32 %v1975, %v2038
  %v2040 = vpop.f32.mrf.mxu0
  %v2041 = vpop.f32.mrf.mxu0
  %v2042 = vadd.f32 %v1978, %v2041
  %v2043 = vpop.f32.mrf.mxu0
  %2044 = vmatprep.mubr.bf16.mxu0 0
  %2045 = vmatmul.mubr.bf16.gmra.mxu0 %v988
  %v2046 = vpop.f32.mrf.mxu0
  %v2047 = vadd.f32 %v1983, %v2046
  %v2048 = vpop.f32.mrf.mxu0
  %v2049 = vpop.f32.mrf.mxu0
  %v2050 = vadd.f32 %v1986, %v2049
  %v2051 = vpop.f32.mrf.mxu0
  %2052 = vmatprep.mubr.bf16.mxu0 0
  %2053 = vmatmul.mubr.bf16.gmra.mxu0 %v991
  %v2054 = vpop.f32.mrf.mxu0
  %v2055 = vadd.f32 %v1991, %v2054
  %v2056 = vpop.f32.mrf.mxu0
  %v2057 = vpop.f32.mrf.mxu0
  %v2058 = vpop.f32.mrf.mxu0
  %2059 = vdwg.mxu0
  %2060 = vmatprep.subr.bf16.mxu0 0
  %2061 = vmatpush1.bf16.msra.mxu0 0
  %2062 = vmatprep.subr.bf16.mxu0 0
  %2063 = vmatpush1.bf16.msra.mxu0 0
  %2064 = vmatprep.subr.bf16.mxu0 0
  %2065 = vmatpush1.bf16.msra.mxu0 %v773
  %2066 = vmatprep.subr.bf16.mxu0 0
  %2067 = vmatpush1.bf16.msra.mxu0 %v765
  %2068 = vmatprep.subr.bf16.mxu0 0
  %2069 = vmatpush1.bf16.msra.mxu0 %v764
  %2070 = vmatprep.subr.bf16.mxu0 0
  %2071 = vmatpush1.bf16.msra.mxu0 %v763
  %2072 = vmatprep.subr.bf16.mxu0 0
  %2073 = vmatpush1.bf16.msra.mxu0 %v762
  %2074 = vmatprep.subr.bf16.mxu0 0
  %2075 = vmatpush1.bf16.msra.mxu0 %v761
  %2076 = vmatprep.subr.bf16.mxu0 0
  %2077 = vmatpush2.bf16.msra.mxu0 0
  %2078 = vmatprep.subr.bf16.mxu0 0
  %2079 = vmatpush2.bf16.msra.mxu0 0
  %2080 = vmatprep.subr.bf16.mxu0 0
  %2081 = vmatpush2.bf16.msra.mxu0 0
  %2082 = vmatprep.subr.bf16.mxu0 0
  %2083 = vmatpush2.bf16.msra.mxu0 0
  %2084 = vmatprep.subr.bf16.mxu0 0
  %2085 = vmatpush2.bf16.msra.mxu0 0
  %2086 = vmatprep.subr.bf16.mxu0 0
  %2087 = vmatpush2.bf16.msra.mxu0 0
  %2088 = vmatprep.subr.bf16.mxu0 0
  %2089 = vmatpush2.bf16.msra.mxu0 0
  %2090 = vmatprep.subr.bf16.mxu0 0
  %2091 = vmatpush2.bf16.msra.mxu0 0
  %2092 = vmatprep.mubr.bf16.mxu0 0
  %2093 = vmatmul.mubr.bf16.gmra.mxu0 %v1843
  %v2094 = vpop.f32.mrf.mxu0
  %v2095 = vadd.f32 0.0, %v2094
  %v2096 = vpop.f32.mrf.mxu0
  %v2097 = vpop.f32.mrf.mxu0
  %v2098 = vadd.f32 0.0, %v2097
  %v2099 = vpop.f32.mrf.mxu0
  %2100 = vmatprep.mubr.bf16.mxu0 0
  %2101 = vmatmul.mubr.bf16.gmra.mxu0 %v1846
  %v2102 = vpop.f32.mrf.mxu0
  %v2103 = vadd.f32 0.0, %v2102
  %v2104 = vpop.f32.mrf.mxu0
  %v2105 = vpop.f32.mrf.mxu0
  %v2106 = vadd.f32 0.0, %v2105
  %v2107 = vpop.f32.mrf.mxu0
  %2108 = vmatprep.mubr.bf16.mxu0 0
  %2109 = vmatmul.mubr.bf16.gmra.mxu0 %v1849
  %v2110 = vpop.f32.mrf.mxu0
  %v2111 = vadd.f32 0.0, %v2110
  %v2112 = vpop.f32.mrf.mxu0
  %v2113 = vpop.f32.mrf.mxu0
  %v2114 = vadd.f32 0.0, %v2113
  %v2115 = vpop.f32.mrf.mxu0
  %2116 = vmatprep.mubr.bf16.mxu0 0
  %2117 = vmatmul.mubr.bf16.gmra.mxu0 %v1852
  %v2118 = vpop.f32.mrf.mxu0
  %v2119 = vadd.f32 0.0, %v2118
  %v2120 = vpop.f32.mrf.mxu0
  %v2121 = vpop.f32.mrf.mxu0
  %v2122 = vpop.f32.mrf.mxu0
  %2123 = vdwg.mxu0
  %v2124 = vadd.f32 %v2031, %v2095
  %v2125 = vadd.f32 %v2034, %v2098
  %v2126 = vadd.f32 %v2039, %v2103
  %v2127 = vadd.f32 %v2042, %v2106
  %v2128 = vadd.f32 %v2047, %v2111
  %v2129 = vadd.f32 %v2050, %v2114
  %v2130 = vadd.f32 %v2055, %v2119
  %v2131 = vmax.f32 %v1925, %v2124
  %v2132 = vmax.f32 %v1926, %v2125
  %v2133 = vmax.f32 %v1927, %v2126
  %v2134 = vmax.f32 %v1928, %v2127
  %v2135 = vmax.f32 %v1929, %v2128
  %v2136 = vmax.f32 %v1930, %v2129
  %v2137 = vmax.f32 %v1931, %v2130
  %v2138 = vadd.f32 %v2131, %v1281
  %v2139 = vadd.f32 %v2132, %v1281
  %v2140 = vadd.f32 %v2133, %v1281
  %v2141 = vadd.f32 %v2134, %v1281
  %v2142 = vadd.f32 %v2135, %v1281
  %v2143 = vadd.f32 %v2136, %v1281
  %v2144 = vadd.f32 %v2137, %v1281
  %v2145 = vmax.f32 %v2138, 0.0
  %v2146 = vmax.f32 %v2139, 0.0
  %v2147 = vmax.f32 %v2140, 0.0
  %v2148 = vmax.f32 %v2141, 0.0
  %v2149 = vmax.f32 %v2142, 0.0
  %v2150 = vmax.f32 %v2143, 0.0
  %v2151 = vmax.f32 %v2144, 0.0
  %v2152 = vpack.c.bf16 %v2145, 0.0
  %v2153 = vpack.c.bf16 %v2147, %v2146
  %v2154 = vpack.c.bf16 %v2149, %v2148
  %v2155 = vpack.c.bf16 %v2150, %v2150
  %v2156 = vpack.c.bf16 %v1292, %v1291
  %v2157 = vpack.c.bf16 %v1294, %v1293
  %v2158 = vpack.c.bf16 %v1296, %v1295
  %v2159 = vpack.c.bf16 0.0, 0.0
  %v2160 = vpack.c.bf16 %v1291, %v1290
  %v2161 = vpack.c.bf16 %v1293, %v1292
  %v2162 = vpack.c.bf16 %v1295, %v1294
  %v2163 = vpack.c.bf16 %v1296, %v1296
  %v2164 = vpack.c.bf16 %v2146, %v2145
  %v2165 = vpack.c.bf16 %v2148, %v2147
  %v2166 = vpack.c.bf16 %v2150, %v2149
  %v2167 = vpack.c.bf16 %v2151, %v2151
  %v2168 = vld [vmem:[%s8] sm:$0x1]
  %v2169 = vld [vmem:[%s5] sm:$0xf]
  %v2170 = vld [vmem:[%s5 + $0x4] sm:$0xf]
  %v2171 = vld [vmem:[%s5 + $0x8] sm:$0xf]
  %v2172 = vld [vmem:[%s5 + $0xc] sm:$0xf]
  %v2173 = vld [vmem:[%s5 + $0x10] sm:$0xf]
  %v2174 = vld [vmem:[%s5 + $0x14] sm:$0xf]
  %v2175 = vld [vmem:[%s5 + $0x18] sm:$0xf]
  %v2176 = vld [vmem:[%s5 + $0x1c] sm:$0xf]
  %v2177 = vld [vmem:[%s5 + $0x20] sm:$0xf]
  %v2178 = vld [vmem:[%s5 + $0x24] sm:$0xf]
  %v2179 = vld [vmem:[%s5 + $0x28] sm:$0xf]
  %v2180 = vld [vmem:[%s5 + $0x2c] sm:$0xf]
  %v2181 = vld [vmem:[%s5 + $0x30] sm:$0xf]
  %v2182 = vld [vmem:[%s5 + $0x34] sm:$0xf]
  %s2183 = scalar_lea.vmem %s5, 56
  %v2184 = vld [vmem:[%s2183] sm:$0xf]
  %v2185 = vld [vmem:[%s2183 + $0x4] sm:$0xf]
  %v2186 = vld [vmem:[%s2183 + $0x8] sm:$0xf]
  %v2187 = vld [vmem:[%s2183 + $0xc] sm:$0xf]
  %v2188 = vld [vmem:[%s2183 + $0x10] sm:$0xf]
  %v2189 = vld [vmem:[%s2183 + $0x14] sm:$0xf]
  %v2190 = vld [vmem:[%s2183 + $0x18] sm:$0xf]
  %v2191 = vld [vmem:[%s2183 + $0x1c] sm:$0xf]
  %v2192 = vld [vmem:[%s2183 + $0x20] sm:$0xf]
  %v2193 = vld [vmem:[%s2183 + $0x24] sm:$0xf]
  %v2194 = vld [vmem:[%s2183 + $0x28] sm:$0xf]
  %v2195 = vld [vmem:[%s2183 + $0x2c] sm:$0xf]
  %v2196 = vld [vmem:[%s2183 + $0x30] sm:$0xf]
  %v2197 = vld [vmem:[%s2183 + $0x34] sm:$0xf]
  %v2212 = vunpack.c.l.b16 %v2184
  %v2213 = vunpack.c.l.b16 %v2185
  %v2214 = vunpack.c.l.b16 %v2186
  %v2215 = vunpack.c.l.b16 %v2187
  %v2216 = vunpack.c.l.b16 %v2188
  %v2217 = vunpack.c.l.b16 %v2189
  %v2218 = vunpack.c.l.b16 %v2190
  %v2219 = vunpack.c.l.b16 %v2191
  %v2220 = vunpack.c.l.b16 %v2192
  %v2221 = vunpack.c.l.b16 %v2193
  %v2222 = vunpack.c.l.b16 %v2194
  %v2223 = vunpack.c.l.b16 %v2195
  %v2224 = vunpack.c.l.b16 %v2196
  %v2225 = vunpack.c.l.b16 %v2197
  %v2226 = vpack.c.b16 %v2213, %v2212
  %v2227 = vpack.c.b16 %v2215, %v2214
  %v2228 = vpack.c.b16 %v2217, %v2216
  %v2229 = vpack.c.b16 %v2219, %v2218
  %v2230 = vpack.c.b16 %v2221, %v2220
  %v2231 = vpack.c.b16 %v2223, %v2222
  %v2232 = vpack.c.b16 %v2225, %v2224
  %vm2240 = vcmask 916480
  %v2242 = vsel %vm2240, %v2160, 0
  %v2245 = vsel %vm2240, %v2161, 0
  %v2248 = vsel %vm2240, %v2162, 0
  %v2251 = vsel %vm2240, %v2163, 0
  %2253 = vmatprep.subr.bf16.mxu0 0
  %2254 = vmatpush1.bf16.msra.mxu0 0
  %2255 = vmatprep.subr.bf16.mxu0 0
  %2256 = vmatpush1.bf16.msra.mxu0 %v2232
  %2257 = vmatprep.subr.bf16.mxu0 0
  %2258 = vmatpush1.bf16.msra.mxu0 %v2231
  %2259 = vmatprep.subr.bf16.mxu0 0
  %2260 = vmatpush1.bf16.msra.mxu0 %v2230
  %2261 = vmatprep.subr.bf16.mxu0 0
  %2262 = vmatpush1.bf16.msra.mxu0 %v2229
  %2263 = vmatprep.subr.bf16.mxu0 0
  %2264 = vmatpush1.bf16.msra.mxu0 %v2228
  %2265 = vmatprep.subr.bf16.mxu0 0
  %2266 = vmatpush1.bf16.msra.mxu0 %v2227
  %2267 = vmatprep.subr.bf16.mxu0 0
  %2268 = vmatpush1.bf16.msra.mxu0 %v2226
  %2269 = vmatprep.subr.bf16.mxu0 0
  %2270 = vmatpush2.bf16.msra.mxu0 0
  %2271 = vmatprep.subr.bf16.mxu0 0
  %2272 = vmatpush2.bf16.msra.mxu0 0
  %2273 = vmatprep.subr.bf16.mxu0 0
  %2274 = vmatpush2.bf16.msra.mxu0 0
  %2275 = vmatprep.subr.bf16.mxu0 0
  %2276 = vmatpush2.bf16.msra.mxu0 0
  %2277 = vmatprep.subr.bf16.mxu0 0
  %2278 = vmatpush2.bf16.msra.mxu0 0
  %2279 = vmatprep.subr.bf16.mxu0 0
  %2280 = vmatpush2.bf16.msra.mxu0 0
  %2281 = vmatprep.subr.bf16.mxu0 0
  %2282 = vmatpush2.bf16.msra.mxu0 0
  %2283 = vmatprep.subr.bf16.mxu0 0
  %2284 = vmatpush2.bf16.msra.mxu0 0
  %2285 = vmatprep.mubr.bf16.mxu0 0
  %2286 = vmatmul.mubr.bf16.gmra.mxu0 %v2242
  %v2287 = vpop.f32.mrf.mxu0
  %v2288 = vadd.f32 0.0, %v2287
  %v2289 = vpop.f32.mrf.mxu0
  %v2290 = vpop.f32.mrf.mxu0
  %v2291 = vadd.f32 0.0, %v2290
  %v2292 = vpop.f32.mrf.mxu0
  %2293 = vmatprep.mubr.bf16.mxu0 0
  %2294 = vmatmul.mubr.bf16.gmra.mxu0 %v2245
  %v2295 = vpop.f32.mrf.mxu0
  %v2296 = vadd.f32 0.0, %v2295
  %v2297 = vpop.f32.mrf.mxu0
  %v2298 = vpop.f32.mrf.mxu0
  %v2299 = vadd.f32 0.0, %v2298
  %v2300 = vpop.f32.mrf.mxu0
  %2301 = vmatprep.mubr.bf16.mxu0 0
  %2302 = vmatmul.mubr.bf16.gmra.mxu0 %v2248
  %v2303 = vpop.f32.mrf.mxu0
  %v2304 = vadd.f32 0.0, %v2303
  %v2305 = vpop.f32.mrf.mxu0
  %v2306 = vpop.f32.mrf.mxu0
  %v2307 = vadd.f32 0.0, %v2306
  %v2308 = vpop.f32.mrf.mxu0
  %2309 = vmatprep.mubr.bf16.mxu0 0
  %2310 = vmatmul.mubr.bf16.gmra.mxu0 %v2251
  %v2311 = vpop.f32.mrf.mxu0
  %v2312 = vadd.f32 0.0, %v2311
  %v2313 = vpop.f32.mrf.mxu0
  %v2314 = vpop.f32.mrf.mxu0
  %v2315 = vpop.f32.mrf.mxu0
  %2316 = vdwg.mxu0
  %v2331 = vunpack.c.l.b16 %v2169
  %v2332 = vunpack.c.l.b16 %v2170
  %v2333 = vunpack.c.l.b16 %v2171
  %v2334 = vunpack.c.l.b16 %v2172
  %v2335 = vunpack.c.l.b16 %v2173
  %v2336 = vunpack.c.l.b16 %v2174
  %v2337 = vunpack.c.l.b16 %v2175
  %v2338 = vunpack.c.l.b16 %v2176
  %v2339 = vunpack.c.l.b16 %v2177
  %v2340 = vunpack.c.l.b16 %v2178
  %v2341 = vunpack.c.l.b16 %v2179
  %v2342 = vunpack.c.l.b16 %v2180
  %v2343 = vunpack.c.l.b16 %v2181
  %v2344 = vunpack.c.l.b16 %v2182
  %v2345 = vpack.c.b16 %v2332, %v2331
  %v2346 = vpack.c.b16 %v2334, %v2333
  %v2347 = vpack.c.b16 %v2336, %v2335
  %v2348 = vpack.c.b16 %v2338, %v2337
  %v2349 = vpack.c.b16 %v2340, %v2339
  %v2350 = vpack.c.b16 %v2342, %v2341
  %v2351 = vpack.c.b16 %v2344, %v2343
  %v2360 = vsel %vm2240, %v2152, 0
  %v2363 = vsel %vm2240, %v2153, 0
  %v2366 = vsel %vm2240, %v2154, 0
  %v2369 = vsel %vm2240, %v2155, 0
  %2371 = vmatprep.subr.bf16.mxu0 0
  %2372 = vmatpush1.bf16.msra.mxu0 0
  %2373 = vmatprep.subr.bf16.mxu0 0
  %2374 = vmatpush1.bf16.msra.mxu0 %v2351
  %2375 = vmatprep.subr.bf16.mxu0 0
  %2376 = vmatpush1.bf16.msra.mxu0 %v2350
  %2377 = vmatprep.subr.bf16.mxu0 0
  %2378 = vmatpush1.bf16.msra.mxu0 %v2349
  %2379 = vmatprep.subr.bf16.mxu0 0
  %2380 = vmatpush1.bf16.msra.mxu0 %v2348
  %2381 = vmatprep.subr.bf16.mxu0 0
  %2382 = vmatpush1.bf16.msra.mxu0 %v2347
  %2383 = vmatprep.subr.bf16.mxu0 0
  %2384 = vmatpush1.bf16.msra.mxu0 %v2346
  %2385 = vmatprep.subr.bf16.mxu0 0
  %2386 = vmatpush1.bf16.msra.mxu0 %v2345
  %2387 = vmatprep.subr.bf16.mxu0 0
  %2388 = vmatpush2.bf16.msra.mxu0 0
  %2389 = vmatprep.subr.bf16.mxu0 0
  %2390 = vmatpush2.bf16.msra.mxu0 0
  %2391 = vmatprep.subr.bf16.mxu0 0
  %2392 = vmatpush2.bf16.msra.mxu0 0
  %2393 = vmatprep.subr.bf16.mxu0 0
  %2394 = vmatpush2.bf16.msra.mxu0 0
  %2395 = vmatprep.subr.bf16.mxu0 0
  %2396 = vmatpush2.bf16.msra.mxu0 0
  %2397 = vmatprep.subr.bf16.mxu0 0
  %2398 = vmatpush2.bf16.msra.mxu0 0
  %2399 = vmatprep.subr.bf16.mxu0 0
  %2400 = vmatpush2.bf16.msra.mxu0 0
  %2401 = vmatprep.subr.bf16.mxu0 0
  %2402 = vmatpush2.bf16.msra.mxu0 0
  %2403 = vmatprep.mubr.bf16.mxu0 0
  %2404 = vmatmul.mubr.bf16.gmra.mxu0 %v2360
  %v2405 = vpop.f32.mrf.mxu0
  %v2406 = vadd.f32 %v2288, %v2405
  %v2407 = vpop.f32.mrf.mxu0
  %v2408 = vpop.f32.mrf.mxu0
  %v2409 = vadd.f32 %v2291, %v2408
  %v2410 = vpop.f32.mrf.mxu0
  %2411 = vmatprep.mubr.bf16.mxu0 0
  %2412 = vmatmul.mubr.bf16.gmra.mxu0 %v2363
  %v2413 = vpop.f32.mrf.mxu0
  %v2414 = vadd.f32 %v2296, %v2413
  %v2415 = vpop.f32.mrf.mxu0
  %v2416 = vpop.f32.mrf.mxu0
  %v2417 = vadd.f32 %v2299, %v2416
  %v2418 = vpop.f32.mrf.mxu0
  %2419 = vmatprep.mubr.bf16.mxu0 0
  %2420 = vmatmul.mubr.bf16.gmra.mxu0 %v2366
  %v2421 = vpop.f32.mrf.mxu0
  %v2422 = vadd.f32 %v2304, %v2421
  %v2423 = vpop.f32.mrf.mxu0
  %v2424 = vpop.f32.mrf.mxu0
  %v2425 = vadd.f32 %v2307, %v2424
  %v2426 = vpop.f32.mrf.mxu0
  %2427 = vmatprep.mubr.bf16.mxu0 0
  %2428 = vmatmul.mubr.bf16.gmra.mxu0 %v2369
  %v2429 = vpop.f32.mrf.mxu0
  %v2430 = vadd.f32 %v2312, %v2429
  %v2431 = vpop.f32.mrf.mxu0
  %v2432 = vpop.f32.mrf.mxu0
  %v2433 = vpop.f32.mrf.mxu0
  %2434 = vdwg.mxu0
  %s2435 = scalar_lea.vmem %s5, 112
  %v2436 = vld [vmem:[%s2435] sm:$0xf]
  %v2437 = vld [vmem:[%s2435 + $0x4] sm:$0xf]
  %v2438 = vld [vmem:[%s2435 + $0x8] sm:$0xf]
  %v2439 = vld [vmem:[%s2435 + $0xc] sm:$0xf]
  %v2440 = vld [vmem:[%s2435 + $0x10] sm:$0xf]
  %v2441 = vld [vmem:[%s2435 + $0x14] sm:$0xf]
  %v2442 = vld [vmem:[%s2435 + $0x18] sm:$0xf]
  %v2443 = vld [vmem:[%s2435 + $0x1c] sm:$0xf]
  %v2444 = vld [vmem:[%s2435 + $0x20] sm:$0xf]
  %v2445 = vld [vmem:[%s2435 + $0x24] sm:$0xf]
  %v2446 = vld [vmem:[%s2435 + $0x28] sm:$0xf]
  %v2447 = vld [vmem:[%s2435 + $0x2c] sm:$0xf]
  %v2448 = vld [vmem:[%s2435 + $0x30] sm:$0xf]
  %v2449 = vld [vmem:[%s2435 + $0x34] sm:$0xf]
  %v2464 = vunpack.c.l.b16 %v2436
  %v2465 = vunpack.c.l.b16 %v2437
  %v2466 = vunpack.c.l.b16 %v2438
  %v2467 = vunpack.c.l.b16 %v2439
  %v2468 = vunpack.c.l.b16 %v2440
  %v2469 = vunpack.c.l.b16 %v2441
  %v2470 = vunpack.c.l.b16 %v2442
  %v2471 = vunpack.c.l.b16 %v2443
  %v2472 = vunpack.c.l.b16 %v2444
  %v2473 = vunpack.c.l.b16 %v2445
  %v2474 = vunpack.c.l.b16 %v2446
  %v2475 = vunpack.c.l.b16 %v2447
  %v2476 = vunpack.c.l.b16 %v2448
  %v2477 = vunpack.c.l.b16 %v2449
  %v2478 = vpack.c.b16 %v2465, %v2464
  %v2479 = vpack.c.b16 %v2467, %v2466
  %v2480 = vpack.c.b16 %v2469, %v2468
  %v2481 = vpack.c.b16 %v2471, %v2470
  %v2482 = vpack.c.b16 %v2473, %v2472
  %v2483 = vpack.c.b16 %v2475, %v2474
  %v2484 = vpack.c.b16 %v2477, %v2476
  %v2493 = vsel %vm2240, %v2164, 0
  %v2496 = vsel %vm2240, %v2165, 0
  %v2499 = vsel %vm2240, %v2166, 0
  %v2502 = vsel %vm2240, %v2167, 0
  %2504 = vmatprep.subr.bf16.mxu0 0
  %2505 = vmatpush1.bf16.msra.mxu0 0
  %2506 = vmatprep.subr.bf16.mxu0 0
  %2507 = vmatpush1.bf16.msra.mxu0 %v2484
  %2508 = vmatprep.subr.bf16.mxu0 0
  %2509 = vmatpush1.bf16.msra.mxu0 %v2483
  %2510 = vmatprep.subr.bf16.mxu0 0
  %2511 = vmatpush1.bf16.msra.mxu0 %v2482
  %2512 = vmatprep.subr.bf16.mxu0 0
  %2513 = vmatpush1.bf16.msra.mxu0 %v2481
  %2514 = vmatprep.subr.bf16.mxu0 0
  %2515 = vmatpush1.bf16.msra.mxu0 %v2480
  %2516 = vmatprep.subr.bf16.mxu0 0
  %2517 = vmatpush1.bf16.msra.mxu0 %v2479
  %2518 = vmatprep.subr.bf16.mxu0 0
  %2519 = vmatpush1.bf16.msra.mxu0 %v2478
  %2520 = vmatprep.subr.bf16.mxu0 0
  %2521 = vmatpush2.bf16.msra.mxu0 0
  %2522 = vmatprep.subr.bf16.mxu0 0
  %2523 = vmatpush2.bf16.msra.mxu0 0
  %2524 = vmatprep.subr.bf16.mxu0 0
  %2525 = vmatpush2.bf16.msra.mxu0 0
  %2526 = vmatprep.subr.bf16.mxu0 0
  %2527 = vmatpush2.bf16.msra.mxu0 0
  %2528 = vmatprep.subr.bf16.mxu0 0
  %2529 = vmatpush2.bf16.msra.mxu0 0
  %2530 = vmatprep.subr.bf16.mxu0 0
  %2531 = vmatpush2.bf16.msra.mxu0 0
  %2532 = vmatprep.subr.bf16.mxu0 0
  %2533 = vmatpush2.bf16.msra.mxu0 0
  %2534 = vmatprep.subr.bf16.mxu0 0
  %2535 = vmatpush2.bf16.msra.mxu0 0
  %2536 = vmatprep.mubr.bf16.mxu0 0
  %2537 = vmatmul.mubr.bf16.gmra.mxu0 %v2493
  %v2538 = vpop.f32.mrf.mxu0
  %v2539 = vadd.f32 0.0, %v2538
  %v2540 = vpop.f32.mrf.mxu0
  %v2541 = vpop.f32.mrf.mxu0
  %v2542 = vadd.f32 0.0, %v2541
  %v2543 = vpop.f32.mrf.mxu0
  %2544 = vmatprep.mubr.bf16.mxu0 0
  %2545 = vmatmul.mubr.bf16.gmra.mxu0 %v2496
  %v2546 = vpop.f32.mrf.mxu0
  %v2547 = vadd.f32 0.0, %v2546
  %v2548 = vpop.f32.mrf.mxu0
  %v2549 = vpop.f32.mrf.mxu0
  %v2550 = vadd.f32 0.0, %v2549
  %v2551 = vpop.f32.mrf.mxu0
  %2552 = vmatprep.mubr.bf16.mxu0 0
  %2553 = vmatmul.mubr.bf16.gmra.mxu0 %v2499
  %v2554 = vpop.f32.mrf.mxu0
  %v2555 = vadd.f32 0.0, %v2554
  %v2556 = vpop.f32.mrf.mxu0
  %v2557 = vpop.f32.mrf.mxu0
  %v2558 = vadd.f32 0.0, %v2557
  %v2559 = vpop.f32.mrf.mxu0
  %2560 = vmatprep.mubr.bf16.mxu0 0
  %2561 = vmatmul.mubr.bf16.gmra.mxu0 %v2502
  %v2562 = vpop.f32.mrf.mxu0
  %v2563 = vadd.f32 0.0, %v2562
  %v2564 = vpop.f32.mrf.mxu0
  %v2565 = vpop.f32.mrf.mxu0
  %v2566 = vpop.f32.mrf.mxu0
  %2567 = vdwg.mxu0
  %v2568 = vadd.f32 %v2406, %v2539
  %v2569 = vadd.f32 %v2409, %v2542
  %v2570 = vadd.f32 %v2414, %v2547
  %v2571 = vadd.f32 %v2417, %v2550
  %v2572 = vadd.f32 %v2422, %v2555
  %v2573 = vadd.f32 %v2425, %v2558
  %v2574 = vadd.f32 %v2430, %v2563
  %s2575 = scalar_lea.vmem %s5, 168
  %v2576 = vld [vmem:[%s2575] sm:$0xf]
  %v2577 = vld [vmem:[%s2575 + $0x4] sm:$0xf]
  %v2578 = vld [vmem:[%s2575 + $0x8] sm:$0xf]
  %v2579 = vld [vmem:[%s2575 + $0xc] sm:$0xf]
  %v2580 = vld [vmem:[%s2575 + $0x10] sm:$0xf]
  %v2581 = vld [vmem:[%s2575 + $0x14] sm:$0xf]
  %v2582 = vld [vmem:[%s2575 + $0x18] sm:$0xf]
  %v2583 = vld [vmem:[%s2575 + $0x1c] sm:$0xf]
  %v2584 = vld [vmem:[%s2575 + $0x20] sm:$0xf]
  %v2585 = vld [vmem:[%s2575 + $0x24] sm:$0xf]
  %v2586 = vld [vmem:[%s2575 + $0x28] sm:$0xf]
  %v2587 = vld [vmem:[%s2575 + $0x2c] sm:$0xf]
  %v2588 = vld [vmem:[%s2575 + $0x30] sm:$0xf]
  %v2589 = vld [vmem:[%s2575 + $0x34] sm:$0xf]
  %s2590 = scalar_lea.vmem %s5, 224
  %v2591 = vld [vmem:[%s2590] sm:$0xf]
  %v2592 = vld [vmem:[%s2590 + $0x4] sm:$0xf]
  %v2593 = vld [vmem:[%s2590 + $0x8] sm:$0xf]
  %v2594 = vld [vmem:[%s2590 + $0xc] sm:$0xf]
  %v2595 = vld [vmem:[%s2590 + $0x10] sm:$0xf]
  %v2596 = vld [vmem:[%s2590 + $0x14] sm:$0xf]
  %v2597 = vld [vmem:[%s2590 + $0x18] sm:$0xf]
  %v2598 = vld [vmem:[%s2590 + $0x1c] sm:$0xf]
  %v2599 = vld [vmem:[%s2590 + $0x20] sm:$0xf]
  %v2600 = vld [vmem:[%s2590 + $0x24] sm:$0xf]
  %v2601 = vld [vmem:[%s2590 + $0x28] sm:$0xf]
  %v2602 = vld [vmem:[%s2590 + $0x2c] sm:$0xf]
  %v2603 = vld [vmem:[%s2590 + $0x30] sm:$0xf]
  %v2604 = vld [vmem:[%s2590 + $0x34] sm:$0xf]
  %v2619 = vunpack.c.l.b16 %v2591
  %v2620 = vunpack.c.l.b16 %v2592
  %v2621 = vunpack.c.l.b16 %v2593
  %v2622 = vunpack.c.l.b16 %v2594
  %v2623 = vunpack.c.l.b16 %v2595
  %v2624 = vunpack.c.l.b16 %v2596
  %v2625 = vunpack.c.l.b16 %v2597
  %v2626 = vunpack.c.l.b16 %v2598
  %v2627 = vunpack.c.l.b16 %v2599
  %v2628 = vunpack.c.l.b16 %v2600
  %v2629 = vunpack.c.l.b16 %v2601
  %v2630 = vunpack.c.l.b16 %v2602
  %v2631 = vunpack.c.l.b16 %v2603
  %v2632 = vunpack.c.l.b16 %v2604
  %v2633 = vpack.c.b16 %v2620, %v2619
  %v2634 = vpack.c.b16 %v2622, %v2621
  %v2635 = vpack.c.b16 %v2624, %v2623
  %v2636 = vpack.c.b16 %v2626, %v2625
  %v2637 = vpack.c.b16 %v2628, %v2627
  %v2638 = vpack.c.b16 %v2630, %v2629
  %v2639 = vpack.c.b16 %v2632, %v2631
  %2647 = vmatprep.subr.bf16.mxu0 0
  %2648 = vmatpush1.bf16.msra.mxu0 0
  %2649 = vmatprep.subr.bf16.mxu0 0
  %2650 = vmatpush1.bf16.msra.mxu0 %v2639
  %2651 = vmatprep.subr.bf16.mxu0 0
  %2652 = vmatpush1.bf16.msra.mxu0 %v2638
  %2653 = vmatprep.subr.bf16.mxu0 0
  %2654 = vmatpush1.bf16.msra.mxu0 %v2637
  %2655 = vmatprep.subr.bf16.mxu0 0
  %2656 = vmatpush1.bf16.msra.mxu0 %v2636
  %2657 = vmatprep.subr.bf16.mxu0 0
  %2658 = vmatpush1.bf16.msra.mxu0 %v2635
  %2659 = vmatprep.subr.bf16.mxu0 0
  %2660 = vmatpush1.bf16.msra.mxu0 %v2634
  %2661 = vmatprep.subr.bf16.mxu0 0
  %2662 = vmatpush1.bf16.msra.mxu0 %v2633
  %2663 = vmatprep.subr.bf16.mxu0 0
  %2664 = vmatpush2.bf16.msra.mxu0 0
  %2665 = vmatprep.subr.bf16.mxu0 0
  %2666 = vmatpush2.bf16.msra.mxu0 0
  %2667 = vmatprep.subr.bf16.mxu0 0
  %2668 = vmatpush2.bf16.msra.mxu0 0
  %2669 = vmatprep.subr.bf16.mxu0 0
  %2670 = vmatpush2.bf16.msra.mxu0 0
  %2671 = vmatprep.subr.bf16.mxu0 0
  %2672 = vmatpush2.bf16.msra.mxu0 0
  %2673 = vmatprep.subr.bf16.mxu0 0
  %2674 = vmatpush2.bf16.msra.mxu0 0
  %2675 = vmatprep.subr.bf16.mxu0 0
  %2676 = vmatpush2.bf16.msra.mxu0 0
  %2677 = vmatprep.subr.bf16.mxu0 0
  %2678 = vmatpush2.bf16.msra.mxu0 0
  %2679 = vmatprep.mubr.bf16.mxu0 0
  %2680 = vmatmul.mubr.bf16.gmra.mxu0 %v2242
  %v2681 = vpop.f32.mrf.mxu0
  %v2682 = vadd.f32 0.0, %v2681
  %v2683 = vpop.f32.mrf.mxu0
  %v2684 = vpop.f32.mrf.mxu0
  %v2685 = vadd.f32 0.0, %v2684
  %v2686 = vpop.f32.mrf.mxu0
  %2687 = vmatprep.mubr.bf16.mxu0 0
  %2688 = vmatmul.mubr.bf16.gmra.mxu0 %v2245
  %v2689 = vpop.f32.mrf.mxu0
  %v2690 = vadd.f32 0.0, %v2689
  %v2691 = vpop.f32.mrf.mxu0
  %v2692 = vpop.f32.mrf.mxu0
  %v2693 = vadd.f32 0.0, %v2692
  %v2694 = vpop.f32.mrf.mxu0
  %2695 = vmatprep.mubr.bf16.mxu0 0
  %2696 = vmatmul.mubr.bf16.gmra.mxu0 %v2248
  %v2697 = vpop.f32.mrf.mxu0
  %v2698 = vadd.f32 0.0, %v2697
  %v2699 = vpop.f32.mrf.mxu0
  %v2700 = vpop.f32.mrf.mxu0
  %v2701 = vadd.f32 0.0, %v2700
  %v2702 = vpop.f32.mrf.mxu0
  %2703 = vmatprep.mubr.bf16.mxu0 0
  %2704 = vmatmul.mubr.bf16.gmra.mxu0 %v2251
  %v2705 = vpop.f32.mrf.mxu0
  %v2706 = vadd.f32 0.0, %v2705
  %v2707 = vpop.f32.mrf.mxu0
  %v2708 = vpop.f32.mrf.mxu0
  %v2709 = vpop.f32.mrf.mxu0
  %2710 = vdwg.mxu0
  %v2725 = vunpack.c.l.b16 %v2576
  %v2726 = vunpack.c.l.b16 %v2577
  %v2727 = vunpack.c.l.b16 %v2578
  %v2728 = vunpack.c.l.b16 %v2579
  %v2729 = vunpack.c.l.b16 %v2580
  %v2730 = vunpack.c.l.b16 %v2581
  %v2731 = vunpack.c.l.b16 %v2582
  %v2732 = vunpack.c.l.b16 %v2583
  %v2733 = vunpack.c.l.b16 %v2584
  %v2734 = vunpack.c.l.b16 %v2585
  %v2735 = vunpack.c.l.b16 %v2586
  %v2736 = vunpack.c.l.b16 %v2587
  %v2737 = vunpack.c.l.b16 %v2588
  %v2738 = vunpack.c.l.b16 %v2589
  %v2739 = vpack.c.b16 %v2726, %v2725
  %v2740 = vpack.c.b16 %v2728, %v2727
  %v2741 = vpack.c.b16 %v2730, %v2729
  %v2742 = vpack.c.b16 %v2732, %v2731
  %v2743 = vpack.c.b16 %v2734, %v2733
  %v2744 = vpack.c.b16 %v2736, %v2735
  %v2745 = vpack.c.b16 %v2738, %v2737
  %2753 = vmatprep.subr.bf16.mxu0 0
  %2754 = vmatpush1.bf16.msra.mxu0 0
  %2755 = vmatprep.subr.bf16.mxu0 0
  %2756 = vmatpush1.bf16.msra.mxu0 %v2745
  %2757 = vmatprep.subr.bf16.mxu0 0
  %2758 = vmatpush1.bf16.msra.mxu0 %v2744
  %2759 = vmatprep.subr.bf16.mxu0 0
  %2760 = vmatpush1.bf16.msra.mxu0 %v2743
  %2761 = vmatprep.subr.bf16.mxu0 0
  %2762 = vmatpush1.bf16.msra.mxu0 %v2742
  %2763 = vmatprep.subr.bf16.mxu0 0
  %2764 = vmatpush1.bf16.msra.mxu0 %v2741
  %2765 = vmatprep.subr.bf16.mxu0 0
  %2766 = vmatpush1.bf16.msra.mxu0 %v2740
  %2767 = vmatprep.subr.bf16.mxu0 0
  %2768 = vmatpush1.bf16.msra.mxu0 %v2739
  %2769 = vmatprep.subr.bf16.mxu0 0
  %2770 = vmatpush2.bf16.msra.mxu0 0
  %2771 = vmatprep.subr.bf16.mxu0 0
  %2772 = vmatpush2.bf16.msra.mxu0 0
  %2773 = vmatprep.subr.bf16.mxu0 0
  %2774 = vmatpush2.bf16.msra.mxu0 0
  %2775 = vmatprep.subr.bf16.mxu0 0
  %2776 = vmatpush2.bf16.msra.mxu0 0
  %2777 = vmatprep.subr.bf16.mxu0 0
  %2778 = vmatpush2.bf16.msra.mxu0 0
  %2779 = vmatprep.subr.bf16.mxu0 0
  %2780 = vmatpush2.bf16.msra.mxu0 0
  %2781 = vmatprep.subr.bf16.mxu0 0
  %2782 = vmatpush2.bf16.msra.mxu0 0
  %2783 = vmatprep.subr.bf16.mxu0 0
  %2784 = vmatpush2.bf16.msra.mxu0 0
  %2785 = vmatprep.mubr.bf16.mxu0 0
  %2786 = vmatmul.mubr.bf16.gmra.mxu0 %v2360
  %v2787 = vpop.f32.mrf.mxu0
  %v2788 = vadd.f32 %v2682, %v2787
  %v2789 = vpop.f32.mrf.mxu0
  %v2790 = vpop.f32.mrf.mxu0
  %v2791 = vadd.f32 %v2685, %v2790
  %v2792 = vpop.f32.mrf.mxu0
  %2793 = vmatprep.mubr.bf16.mxu0 0
  %2794 = vmatmul.mubr.bf16.gmra.mxu0 %v2363
  %v2795 = vpop.f32.mrf.mxu0
  %v2796 = vadd.f32 %v2690, %v2795
  %v2797 = vpop.f32.mrf.mxu0
  %v2798 = vpop.f32.mrf.mxu0
  %v2799 = vadd.f32 %v2693, %v2798
  %v2800 = vpop.f32.mrf.mxu0
  %2801 = vmatprep.mubr.bf16.mxu0 0
  %2802 = vmatmul.mubr.bf16.gmra.mxu0 %v2366
  %v2803 = vpop.f32.mrf.mxu0
  %v2804 = vadd.f32 %v2698, %v2803
  %v2805 = vpop.f32.mrf.mxu0
  %v2806 = vpop.f32.mrf.mxu0
  %v2807 = vadd.f32 %v2701, %v2806
  %v2808 = vpop.f32.mrf.mxu0
  %2809 = vmatprep.mubr.bf16.mxu0 0
  %2810 = vmatmul.mubr.bf16.gmra.mxu0 %v2369
  %v2811 = vpop.f32.mrf.mxu0
  %v2812 = vadd.f32 %v2706, %v2811
  %v2813 = vpop.f32.mrf.mxu0
  %v2814 = vpop.f32.mrf.mxu0
  %v2815 = vpop.f32.mrf.mxu0
  %2816 = vdwg.mxu0
  %s2817 = scalar_lea.vmem %s5, 280
  %v2818 = vld [vmem:[%s2817] sm:$0xf]
  %v2819 = vld [vmem:[%s2817 + $0x4] sm:$0xf]
  %v2820 = vld [vmem:[%s2817 + $0x8] sm:$0xf]
  %v2821 = vld [vmem:[%s2817 + $0xc] sm:$0xf]
  %v2822 = vld [vmem:[%s2817 + $0x10] sm:$0xf]
  %v2823 = vld [vmem:[%s2817 + $0x14] sm:$0xf]
  %v2824 = vld [vmem:[%s2817 + $0x18] sm:$0xf]
  %v2825 = vld [vmem:[%s2817 + $0x1c] sm:$0xf]
  %v2826 = vld [vmem:[%s2817 + $0x20] sm:$0xf]
  %v2827 = vld [vmem:[%s2817 + $0x24] sm:$0xf]
  %v2828 = vld [vmem:[%s2817 + $0x28] sm:$0xf]
  %v2829 = vld [vmem:[%s2817 + $0x2c] sm:$0xf]
  %v2830 = vld [vmem:[%s2817 + $0x30] sm:$0xf]
  %v2831 = vld [vmem:[%s2817 + $0x34] sm:$0xf]
  %v2846 = vunpack.c.l.b16 %v2818
  %v2847 = vunpack.c.l.b16 %v2819
  %v2848 = vunpack.c.l.b16 %v2820
  %v2849 = vunpack.c.l.b16 %v2821
  %v2850 = vunpack.c.l.b16 %v2822
  %v2851 = vunpack.c.l.b16 %v2823
  %v2852 = vunpack.c.l.b16 %v2824
  %v2853 = vunpack.c.l.b16 %v2825
  %v2854 = vunpack.c.l.b16 %v2826
  %v2855 = vunpack.c.l.b16 %v2827
  %v2856 = vunpack.c.l.b16 %v2828
  %v2857 = vunpack.c.l.b16 %v2829
  %v2858 = vunpack.c.l.b16 %v2830
  %v2859 = vunpack.c.l.b16 %v2831
  %v2860 = vpack.c.b16 %v2847, %v2846
  %v2861 = vpack.c.b16 %v2849, %v2848
  %v2862 = vpack.c.b16 %v2851, %v2850
  %v2863 = vpack.c.b16 %v2853, %v2852
  %v2864 = vpack.c.b16 %v2855, %v2854
  %v2865 = vpack.c.b16 %v2857, %v2856
  %v2866 = vpack.c.b16 %v2859, %v2858
  %2874 = vmatprep.subr.bf16.mxu0 0
  %2875 = vmatpush1.bf16.msra.mxu0 0
  %2876 = vmatprep.subr.bf16.mxu0 0
  %2877 = vmatpush1.bf16.msra.mxu0 %v2866
  %2878 = vmatprep.subr.bf16.mxu0 0
  %2879 = vmatpush1.bf16.msra.mxu0 %v2865
  %2880 = vmatprep.subr.bf16.mxu0 0
  %2881 = vmatpush1.bf16.msra.mxu0 %v2864
  %2882 = vmatprep.subr.bf16.mxu0 0
  %2883 = vmatpush1.bf16.msra.mxu0 %v2863
  %2884 = vmatprep.subr.bf16.mxu0 0
  %2885 = vmatpush1.bf16.msra.mxu0 %v2862
  %2886 = vmatprep.subr.bf16.mxu0 0
  %2887 = vmatpush1.bf16.msra.mxu0 %v2861
  %2888 = vmatprep.subr.bf16.mxu0 0
  %2889 = vmatpush1.bf16.msra.mxu0 %v2860
  %2890 = vmatprep.subr.bf16.mxu0 0
  %2891 = vmatpush2.bf16.msra.mxu0 0
  %2892 = vmatprep.subr.bf16.mxu0 0
  %2893 = vmatpush2.bf16.msra.mxu0 0
  %2894 = vmatprep.subr.bf16.mxu0 0
  %2895 = vmatpush2.bf16.msra.mxu0 0
  %2896 = vmatprep.subr.bf16.mxu0 0
  %2897 = vmatpush2.bf16.msra.mxu0 0
  %2898 = vmatprep.subr.bf16.mxu0 0
  %2899 = vmatpush2.bf16.msra.mxu0 0
  %2900 = vmatprep.subr.bf16.mxu0 0
  %2901 = vmatpush2.bf16.msra.mxu0 0
  %2902 = vmatprep.subr.bf16.mxu0 0
  %2903 = vmatpush2.bf16.msra.mxu0 0
  %2904 = vmatprep.subr.bf16.mxu0 0
  %2905 = vmatpush2.bf16.msra.mxu0 0
  %2906 = vmatprep.mubr.bf16.mxu0 0
  %2907 = vmatmul.mubr.bf16.gmra.mxu0 %v2493
  %v2908 = vpop.f32.mrf.mxu0
  %v2909 = vadd.f32 0.0, %v2908
  %v2910 = vpop.f32.mrf.mxu0
  %v2911 = vpop.f32.mrf.mxu0
  %v2912 = vadd.f32 0.0, %v2911
  %v2913 = vpop.f32.mrf.mxu0
  %2914 = vmatprep.mubr.bf16.mxu0 0
  %2915 = vmatmul.mubr.bf16.gmra.mxu0 %v2496
  %v2916 = vpop.f32.mrf.mxu0
  %v2917 = vadd.f32 0.0, %v2916
  %v2918 = vpop.f32.mrf.mxu0
  %v2919 = vpop.f32.mrf.mxu0
  %v2920 = vadd.f32 0.0, %v2919
  %v2921 = vpop.f32.mrf.mxu0
  %2922 = vmatprep.mubr.bf16.mxu0 0
  %2923 = vmatmul.mubr.bf16.gmra.mxu0 %v2499
  %v2924 = vpop.f32.mrf.mxu0
  %v2925 = vadd.f32 0.0, %v2924
  %v2926 = vpop.f32.mrf.mxu0
  %v2927 = vpop.f32.mrf.mxu0
  %v2928 = vadd.f32 0.0, %v2927
  %v2929 = vpop.f32.mrf.mxu0
  %2930 = vmatprep.mubr.bf16.mxu0 0
  %2931 = vmatmul.mubr.bf16.gmra.mxu0 %v2502
  %v2932 = vpop.f32.mrf.mxu0
  %v2933 = vadd.f32 0.0, %v2932
  %v2934 = vpop.f32.mrf.mxu0
  %v2935 = vpop.f32.mrf.mxu0
  %v2936 = vpop.f32.mrf.mxu0
  %2937 = vdwg.mxu0
  %v2938 = vadd.f32 %v2788, %v2909
  %v2939 = vadd.f32 %v2791, %v2912
  %v2940 = vadd.f32 %v2796, %v2917
  %v2941 = vadd.f32 %v2799, %v2920
  %v2942 = vadd.f32 %v2804, %v2925
  %v2943 = vadd.f32 %v2807, %v2928
  %v2944 = vadd.f32 %v2812, %v2933
  %v2945 = vmax.f32 %v2568, %v2938
  %v2946 = vmax.f32 %v2569, %v2939
  %v2947 = vmax.f32 %v2570, %v2940
  %v2948 = vmax.f32 %v2571, %v2941
  %v2949 = vmax.f32 %v2572, %v2942
  %v2950 = vmax.f32 %v2573, %v2943
  %v2951 = vmax.f32 %v2574, %v2944
  %2952 = vmatprep.subr.bf16.mxu0 0
  %2953 = vmatpush1.bf16.msra.mxu0 0
  %2954 = vmatprep.subr.bf16.mxu0 0
  %2955 = vmatpush1.bf16.msra.mxu0 %v2232
  %2956 = vmatprep.subr.bf16.mxu0 0
  %2957 = vmatpush1.bf16.msra.mxu0 %v2231
  %2958 = vmatprep.subr.bf16.mxu0 0
  %2959 = vmatpush1.bf16.msra.mxu0 %v2230
  %2960 = vmatprep.subr.bf16.mxu0 0
  %2961 = vmatpush1.bf16.msra.mxu0 %v2229
  %2962 = vmatprep.subr.bf16.mxu0 0
  %2963 = vmatpush1.bf16.msra.mxu0 %v2228
  %2964 = vmatprep.subr.bf16.mxu0 0
  %2965 = vmatpush1.bf16.msra.mxu0 %v2227
  %2966 = vmatprep.subr.bf16.mxu0 0
  %2967 = vmatpush1.bf16.msra.mxu0 %v2226
  %2968 = vmatprep.subr.bf16.mxu0 0
  %2969 = vmatpush2.bf16.msra.mxu0 0
  %2970 = vmatprep.subr.bf16.mxu0 0
  %2971 = vmatpush2.bf16.msra.mxu0 0
  %2972 = vmatprep.subr.bf16.mxu0 0
  %2973 = vmatpush2.bf16.msra.mxu0 0
  %2974 = vmatprep.subr.bf16.mxu0 0
  %2975 = vmatpush2.bf16.msra.mxu0 0
  %2976 = vmatprep.subr.bf16.mxu0 0
  %2977 = vmatpush2.bf16.msra.mxu0 0
  %2978 = vmatprep.subr.bf16.mxu0 0
  %2979 = vmatpush2.bf16.msra.mxu0 0
  %2980 = vmatprep.subr.bf16.mxu0 0
  %2981 = vmatpush2.bf16.msra.mxu0 0
  %2982 = vmatprep.subr.bf16.mxu0 0
  %2983 = vmatpush2.bf16.msra.mxu0 0
  %2984 = vmatprep.mubr.bf16.mxu0 0
  %2985 = vmatmul.mubr.bf16.gmra.mxu0 %v2493
  %v2986 = vpop.f32.mrf.mxu0
  %v2987 = vadd.f32 0.0, %v2986
  %v2988 = vpop.f32.mrf.mxu0
  %v2989 = vpop.f32.mrf.mxu0
  %v2990 = vadd.f32 0.0, %v2989
  %v2991 = vpop.f32.mrf.mxu0
  %2992 = vmatprep.mubr.bf16.mxu0 0
  %2993 = vmatmul.mubr.bf16.gmra.mxu0 %v2496
  %v2994 = vpop.f32.mrf.mxu0
  %v2995 = vadd.f32 0.0, %v2994
  %v2996 = vpop.f32.mrf.mxu0
  %v2997 = vpop.f32.mrf.mxu0
  %v2998 = vadd.f32 0.0, %v2997
  %v2999 = vpop.f32.mrf.mxu0
  %3000 = vmatprep.mubr.bf16.mxu0 0
  %3001 = vmatmul.mubr.bf16.gmra.mxu0 %v2499
  %v3002 = vpop.f32.mrf.mxu0
  %v3003 = vadd.f32 0.0, %v3002
  %v3004 = vpop.f32.mrf.mxu0
  %v3005 = vpop.f32.mrf.mxu0
  %v3006 = vadd.f32 0.0, %v3005
  %v3007 = vpop.f32.mrf.mxu0
  %3008 = vmatprep.mubr.bf16.mxu0 0
  %3009 = vmatmul.mubr.bf16.gmra.mxu0 %v2502
  %v3010 = vpop.f32.mrf.mxu0
  %v3011 = vadd.f32 0.0, %v3010
  %v3012 = vpop.f32.mrf.mxu0
  %v3013 = vpop.f32.mrf.mxu0
  %v3014 = vpop.f32.mrf.mxu0
  %3015 = vdwg.mxu0
  %3016 = vmatprep.subr.bf16.mxu0 0
  %3017 = vmatpush1.bf16.msra.mxu0 0
  %3018 = vmatprep.subr.bf16.mxu0 0
  %3019 = vmatpush1.bf16.msra.mxu0 %v2351
  %3020 = vmatprep.subr.bf16.mxu0 0
  %3021 = vmatpush1.bf16.msra.mxu0 %v2350
  %3022 = vmatprep.subr.bf16.mxu0 0
  %3023 = vmatpush1.bf16.msra.mxu0 %v2349
  %3024 = vmatprep.subr.bf16.mxu0 0
  %3025 = vmatpush1.bf16.msra.mxu0 %v2348
  %3026 = vmatprep.subr.bf16.mxu0 0
  %3027 = vmatpush1.bf16.msra.mxu0 %v2347
  %3028 = vmatprep.subr.bf16.mxu0 0
  %3029 = vmatpush1.bf16.msra.mxu0 %v2346
  %3030 = vmatprep.subr.bf16.mxu0 0
  %3031 = vmatpush1.bf16.msra.mxu0 %v2345
  %3032 = vmatprep.subr.bf16.mxu0 0
  %3033 = vmatpush2.bf16.msra.mxu0 0
  %3034 = vmatprep.subr.bf16.mxu0 0
  %3035 = vmatpush2.bf16.msra.mxu0 0
  %3036 = vmatprep.subr.bf16.mxu0 0
  %3037 = vmatpush2.bf16.msra.mxu0 0
  %3038 = vmatprep.subr.bf16.mxu0 0
  %3039 = vmatpush2.bf16.msra.mxu0 0
  %3040 = vmatprep.subr.bf16.mxu0 0
  %3041 = vmatpush2.bf16.msra.mxu0 0
  %3042 = vmatprep.subr.bf16.mxu0 0
  %3043 = vmatpush2.bf16.msra.mxu0 0
  %3044 = vmatprep.subr.bf16.mxu0 0
  %3045 = vmatpush2.bf16.msra.mxu0 0
  %3046 = vmatprep.subr.bf16.mxu0 0
  %3047 = vmatpush2.bf16.msra.mxu0 0
  %3048 = vmatprep.mubr.bf16.mxu0 0
  %3049 = vmatmul.mubr.bf16.gmra.mxu0 %v2242
  %v3050 = vpop.f32.mrf.mxu0
  %v3051 = vadd.f32 %v2987, %v3050
  %v3052 = vpop.f32.mrf.mxu0
  %v3053 = vpop.f32.mrf.mxu0
  %v3054 = vadd.f32 %v2990, %v3053
  %v3055 = vpop.f32.mrf.mxu0
  %3056 = vmatprep.mubr.bf16.mxu0 0
  %3057 = vmatmul.mubr.bf16.gmra.mxu0 %v2245
  %v3058 = vpop.f32.mrf.mxu0
  %v3059 = vadd.f32 %v2995, %v3058
  %v3060 = vpop.f32.mrf.mxu0
  %v3061 = vpop.f32.mrf.mxu0
  %v3062 = vadd.f32 %v2998, %v3061
  %v3063 = vpop.f32.mrf.mxu0
  %3064 = vmatprep.mubr.bf16.mxu0 0
  %3065 = vmatmul.mubr.bf16.gmra.mxu0 %v2248
  %v3066 = vpop.f32.mrf.mxu0
  %v3067 = vadd.f32 %v3003, %v3066
  %v3068 = vpop.f32.mrf.mxu0
  %v3069 = vpop.f32.mrf.mxu0
  %v3070 = vadd.f32 %v3006, %v3069
  %v3071 = vpop.f32.mrf.mxu0
  %3072 = vmatprep.mubr.bf16.mxu0 0
  %3073 = vmatmul.mubr.bf16.gmra.mxu0 %v2251
  %v3074 = vpop.f32.mrf.mxu0
  %v3075 = vadd.f32 %v3011, %v3074
  %v3076 = vpop.f32.mrf.mxu0
  %v3077 = vpop.f32.mrf.mxu0
  %v3078 = vpop.f32.mrf.mxu0
  %3079 = vdwg.mxu0
  %v3081 = vsel %vm2240, %v2156, 0
  %v3084 = vsel %vm2240, %v2157, 0
  %v3087 = vsel %vm2240, %v2158, 0
  %v3090 = vsel %vm2240, %v2159, 0
  %3092 = vmatprep.subr.bf16.mxu0 0
  %3093 = vmatpush1.bf16.msra.mxu0 0
  %3094 = vmatprep.subr.bf16.mxu0 0
  %3095 = vmatpush1.bf16.msra.mxu0 %v2484
  %3096 = vmatprep.subr.bf16.mxu0 0
  %3097 = vmatpush1.bf16.msra.mxu0 %v2483
  %3098 = vmatprep.subr.bf16.mxu0 0
  %3099 = vmatpush1.bf16.msra.mxu0 %v2482
  %3100 = vmatprep.subr.bf16.mxu0 0
  %3101 = vmatpush1.bf16.msra.mxu0 %v2481
  %3102 = vmatprep.subr.bf16.mxu0 0
  %3103 = vmatpush1.bf16.msra.mxu0 %v2480
  %3104 = vmatprep.subr.bf16.mxu0 0
  %3105 = vmatpush1.bf16.msra.mxu0 %v2479
  %3106 = vmatprep.subr.bf16.mxu0 0
  %3107 = vmatpush1.bf16.msra.mxu0 %v2478
  %3108 = vmatprep.subr.bf16.mxu0 0
  %3109 = vmatpush2.bf16.msra.mxu0 0
  %3110 = vmatprep.subr.bf16.mxu0 0
  %3111 = vmatpush2.bf16.msra.mxu0 0
  %3112 = vmatprep.subr.bf16.mxu0 0
  %3113 = vmatpush2.bf16.msra.mxu0 0
  %3114 = vmatprep.subr.bf16.mxu0 0
  %3115 = vmatpush2.bf16.msra.mxu0 0
  %3116 = vmatprep.subr.bf16.mxu0 0
  %3117 = vmatpush2.bf16.msra.mxu0 0
  %3118 = vmatprep.subr.bf16.mxu0 0
  %3119 = vmatpush2.bf16.msra.mxu0 0
  %3120 = vmatprep.subr.bf16.mxu0 0
  %3121 = vmatpush2.bf16.msra.mxu0 0
  %3122 = vmatprep.subr.bf16.mxu0 0
  %3123 = vmatpush2.bf16.msra.mxu0 0
  %3124 = vmatprep.mubr.bf16.mxu0 0
  %3125 = vmatmul.mubr.bf16.gmra.mxu0 %v3081
  %v3126 = vpop.f32.mrf.mxu0
  %v3127 = vadd.f32 0.0, %v3126
  %v3128 = vpop.f32.mrf.mxu0
  %v3129 = vpop.f32.mrf.mxu0
  %v3130 = vadd.f32 0.0, %v3129
  %v3131 = vpop.f32.mrf.mxu0
  %3132 = vmatprep.mubr.bf16.mxu0 0
  %3133 = vmatmul.mubr.bf16.gmra.mxu0 %v3084
  %v3134 = vpop.f32.mrf.mxu0
  %v3135 = vadd.f32 0.0, %v3134
  %v3136 = vpop.f32.mrf.mxu0
  %v3137 = vpop.f32.mrf.mxu0
  %v3138 = vadd.f32 0.0, %v3137
  %v3139 = vpop.f32.mrf.mxu0
  %3140 = vmatprep.mubr.bf16.mxu0 0
  %3141 = vmatmul.mubr.bf16.gmra.mxu0 %v3087
  %v3142 = vpop.f32.mrf.mxu0
  %v3143 = vadd.f32 0.0, %v3142
  %v3144 = vpop.f32.mrf.mxu0
  %v3145 = vpop.f32.mrf.mxu0
  %v3146 = vadd.f32 0.0, %v3145
  %v3147 = vpop.f32.mrf.mxu0
  %3148 = vmatprep.mubr.bf16.mxu0 0
  %3149 = vmatmul.mubr.bf16.gmra.mxu0 %v3090
  %v3150 = vpop.f32.mrf.mxu0
  %v3151 = vadd.f32 0.0, %v3150
  %v3152 = vpop.f32.mrf.mxu0
  %v3153 = vpop.f32.mrf.mxu0
  %v3154 = vpop.f32.mrf.mxu0
  %3155 = vdwg.mxu0
  %v3156 = vadd.f32 %v3051, %v3127
  %v3157 = vadd.f32 %v3054, %v3130
  %v3158 = vadd.f32 %v3059, %v3135
  %v3159 = vadd.f32 %v3062, %v3138
  %v3160 = vadd.f32 %v3067, %v3143
  %v3161 = vadd.f32 %v3070, %v3146
  %v3162 = vadd.f32 %v3075, %v3151
  %v3163 = vmax.f32 %v2945, %v3156
  %v3164 = vmax.f32 %v2946, %v3157
  %v3165 = vmax.f32 %v2947, %v3158
  %v3166 = vmax.f32 %v2948, %v3159
  %v3167 = vmax.f32 %v2949, %v3160
  %v3168 = vmax.f32 %v2950, %v3161
  %v3169 = vmax.f32 %v2951, %v3162
  %3170 = vmatprep.subr.bf16.mxu0 0
  %3171 = vmatpush1.bf16.msra.mxu0 0
  %3172 = vmatprep.subr.bf16.mxu0 0
  %3173 = vmatpush1.bf16.msra.mxu0 %v2639
  %3174 = vmatprep.subr.bf16.mxu0 0
  %3175 = vmatpush1.bf16.msra.mxu0 %v2638
  %3176 = vmatprep.subr.bf16.mxu0 0
  %3177 = vmatpush1.bf16.msra.mxu0 %v2637
  %3178 = vmatprep.subr.bf16.mxu0 0
  %3179 = vmatpush1.bf16.msra.mxu0 %v2636
  %3180 = vmatprep.subr.bf16.mxu0 0
  %3181 = vmatpush1.bf16.msra.mxu0 %v2635
  %3182 = vmatprep.subr.bf16.mxu0 0
  %3183 = vmatpush1.bf16.msra.mxu0 %v2634
  %3184 = vmatprep.subr.bf16.mxu0 0
  %3185 = vmatpush1.bf16.msra.mxu0 %v2633
  %3186 = vmatprep.subr.bf16.mxu0 0
  %3187 = vmatpush2.bf16.msra.mxu0 0
  %3188 = vmatprep.subr.bf16.mxu0 0
  %3189 = vmatpush2.bf16.msra.mxu0 0
  %3190 = vmatprep.subr.bf16.mxu0 0
  %3191 = vmatpush2.bf16.msra.mxu0 0
  %3192 = vmatprep.subr.bf16.mxu0 0
  %3193 = vmatpush2.bf16.msra.mxu0 0
  %3194 = vmatprep.subr.bf16.mxu0 0
  %3195 = vmatpush2.bf16.msra.mxu0 0
  %3196 = vmatprep.subr.bf16.mxu0 0
  %3197 = vmatpush2.bf16.msra.mxu0 0
  %3198 = vmatprep.subr.bf16.mxu0 0
  %3199 = vmatpush2.bf16.msra.mxu0 0
  %3200 = vmatprep.subr.bf16.mxu0 0
  %3201 = vmatpush2.bf16.msra.mxu0 0
  %3202 = vmatprep.mubr.bf16.mxu0 0
  %3203 = vmatmul.mubr.bf16.gmra.mxu0 %v2493
  %v3204 = vpop.f32.mrf.mxu0
  %v3205 = vadd.f32 0.0, %v3204
  %v3206 = vpop.f32.mrf.mxu0
  %v3207 = vpop.f32.mrf.mxu0
  %v3208 = vadd.f32 0.0, %v3207
  %v3209 = vpop.f32.mrf.mxu0
  %3210 = vmatprep.mubr.bf16.mxu0 0
  %3211 = vmatmul.mubr.bf16.gmra.mxu0 %v2496
  %v3212 = vpop.f32.mrf.mxu0
  %v3213 = vadd.f32 0.0, %v3212
  %v3214 = vpop.f32.mrf.mxu0
  %v3215 = vpop.f32.mrf.mxu0
  %v3216 = vadd.f32 0.0, %v3215
  %v3217 = vpop.f32.mrf.mxu0
  %3218 = vmatprep.mubr.bf16.mxu0 0
  %3219 = vmatmul.mubr.bf16.gmra.mxu0 %v2499
  %v3220 = vpop.f32.mrf.mxu0
  %v3221 = vadd.f32 0.0, %v3220
  %v3222 = vpop.f32.mrf.mxu0
  %v3223 = vpop.f32.mrf.mxu0
  %v3224 = vadd.f32 0.0, %v3223
  %v3225 = vpop.f32.mrf.mxu0
  %3226 = vmatprep.mubr.bf16.mxu0 0
  %3227 = vmatmul.mubr.bf16.gmra.mxu0 %v2502
  %v3228 = vpop.f32.mrf.mxu0
  %v3229 = vadd.f32 0.0, %v3228
  %v3230 = vpop.f32.mrf.mxu0
  %v3231 = vpop.f32.mrf.mxu0
  %v3232 = vpop.f32.mrf.mxu0
  %3233 = vdwg.mxu0
  %3234 = vmatprep.subr.bf16.mxu0 0
  %3235 = vmatpush1.bf16.msra.mxu0 0
  %3236 = vmatprep.subr.bf16.mxu0 0
  %3237 = vmatpush1.bf16.msra.mxu0 %v2745
  %3238 = vmatprep.subr.bf16.mxu0 0
  %3239 = vmatpush1.bf16.msra.mxu0 %v2744
  %3240 = vmatprep.subr.bf16.mxu0 0
  %3241 = vmatpush1.bf16.msra.mxu0 %v2743
  %3242 = vmatprep.subr.bf16.mxu0 0
  %3243 = vmatpush1.bf16.msra.mxu0 %v2742
  %3244 = vmatprep.subr.bf16.mxu0 0
  %3245 = vmatpush1.bf16.msra.mxu0 %v2741
  %3246 = vmatprep.subr.bf16.mxu0 0
  %3247 = vmatpush1.bf16.msra.mxu0 %v2740
  %3248 = vmatprep.subr.bf16.mxu0 0
  %3249 = vmatpush1.bf16.msra.mxu0 %v2739
  %3250 = vmatprep.subr.bf16.mxu0 0
  %3251 = vmatpush2.bf16.msra.mxu0 0
  %3252 = vmatprep.subr.bf16.mxu0 0
  %3253 = vmatpush2.bf16.msra.mxu0 0
  %3254 = vmatprep.subr.bf16.mxu0 0
  %3255 = vmatpush2.bf16.msra.mxu0 0
  %3256 = vmatprep.subr.bf16.mxu0 0
  %3257 = vmatpush2.bf16.msra.mxu0 0
  %3258 = vmatprep.subr.bf16.mxu0 0
  %3259 = vmatpush2.bf16.msra.mxu0 0
  %3260 = vmatprep.subr.bf16.mxu0 0
  %3261 = vmatpush2.bf16.msra.mxu0 0
  %3262 = vmatprep.subr.bf16.mxu0 0
  %3263 = vmatpush2.bf16.msra.mxu0 0
  %3264 = vmatprep.subr.bf16.mxu0 0
  %3265 = vmatpush2.bf16.msra.mxu0 0
  %3266 = vmatprep.mubr.bf16.mxu0 0
  %3267 = vmatmul.mubr.bf16.gmra.mxu0 %v2242
  %v3268 = vpop.f32.mrf.mxu0
  %v3269 = vadd.f32 %v3205, %v3268
  %v3270 = vpop.f32.mrf.mxu0
  %v3271 = vpop.f32.mrf.mxu0
  %v3272 = vadd.f32 %v3208, %v3271
  %v3273 = vpop.f32.mrf.mxu0
  %3274 = vmatprep.mubr.bf16.mxu0 0
  %3275 = vmatmul.mubr.bf16.gmra.mxu0 %v2245
  %v3276 = vpop.f32.mrf.mxu0
  %v3277 = vadd.f32 %v3213, %v3276
  %v3278 = vpop.f32.mrf.mxu0
  %v3279 = vpop.f32.mrf.mxu0
  %v3280 = vadd.f32 %v3216, %v3279
  %v3281 = vpop.f32.mrf.mxu0
  %3282 = vmatprep.mubr.bf16.mxu0 0
  %3283 = vmatmul.mubr.bf16.gmra.mxu0 %v2248
  %v3284 = vpop.f32.mrf.mxu0
  %v3285 = vadd.f32 %v3221, %v3284
  %v3286 = vpop.f32.mrf.mxu0
  %v3287 = vpop.f32.mrf.mxu0
  %v3288 = vadd.f32 %v3224, %v3287
  %v3289 = vpop.f32.mrf.mxu0
  %3290 = vmatprep.mubr.bf16.mxu0 0
  %3291 = vmatmul.mubr.bf16.gmra.mxu0 %v2251
  %v3292 = vpop.f32.mrf.mxu0
  %v3293 = vadd.f32 %v3229, %v3292
  %v3294 = vpop.f32.mrf.mxu0
  %v3295 = vpop.f32.mrf.mxu0
  %v3296 = vpop.f32.mrf.mxu0
  %3297 = vdwg.mxu0
  %3298 = vmatprep.subr.bf16.mxu0 0
  %3299 = vmatpush1.bf16.msra.mxu0 0
  %3300 = vmatprep.subr.bf16.mxu0 0
  %3301 = vmatpush1.bf16.msra.mxu0 %v2866
  %3302 = vmatprep.subr.bf16.mxu0 0
  %3303 = vmatpush1.bf16.msra.mxu0 %v2865
  %3304 = vmatprep.subr.bf16.mxu0 0
  %3305 = vmatpush1.bf16.msra.mxu0 %v2864
  %3306 = vmatprep.subr.bf16.mxu0 0
  %3307 = vmatpush1.bf16.msra.mxu0 %v2863
  %3308 = vmatprep.subr.bf16.mxu0 0
  %3309 = vmatpush1.bf16.msra.mxu0 %v2862
  %3310 = vmatprep.subr.bf16.mxu0 0
  %3311 = vmatpush1.bf16.msra.mxu0 %v2861
  %3312 = vmatprep.subr.bf16.mxu0 0
  %3313 = vmatpush1.bf16.msra.mxu0 %v2860
  %3314 = vmatprep.subr.bf16.mxu0 0
  %3315 = vmatpush2.bf16.msra.mxu0 0
  %3316 = vmatprep.subr.bf16.mxu0 0
  %3317 = vmatpush2.bf16.msra.mxu0 0
  %3318 = vmatprep.subr.bf16.mxu0 0
  %3319 = vmatpush2.bf16.msra.mxu0 0
  %3320 = vmatprep.subr.bf16.mxu0 0
  %3321 = vmatpush2.bf16.msra.mxu0 0
  %3322 = vmatprep.subr.bf16.mxu0 0
  %3323 = vmatpush2.bf16.msra.mxu0 0
  %3324 = vmatprep.subr.bf16.mxu0 0
  %3325 = vmatpush2.bf16.msra.mxu0 0
  %3326 = vmatprep.subr.bf16.mxu0 0
  %3327 = vmatpush2.bf16.msra.mxu0 0
  %3328 = vmatprep.subr.bf16.mxu0 0
  %3329 = vmatpush2.bf16.msra.mxu0 0
  %3330 = vmatprep.mubr.bf16.mxu0 0
  %3331 = vmatmul.mubr.bf16.gmra.mxu0 %v3081
  %v3332 = vpop.f32.mrf.mxu0
  %v3333 = vadd.f32 0.0, %v3332
  %v3334 = vpop.f32.mrf.mxu0
  %v3335 = vpop.f32.mrf.mxu0
  %v3336 = vadd.f32 0.0, %v3335
  %v3337 = vpop.f32.mrf.mxu0
  %3338 = vmatprep.mubr.bf16.mxu0 0
  %3339 = vmatmul.mubr.bf16.gmra.mxu0 %v3084
  %v3340 = vpop.f32.mrf.mxu0
  %v3341 = vadd.f32 0.0, %v3340
  %v3342 = vpop.f32.mrf.mxu0
  %v3343 = vpop.f32.mrf.mxu0
  %v3344 = vadd.f32 0.0, %v3343
  %v3345 = vpop.f32.mrf.mxu0
  %3346 = vmatprep.mubr.bf16.mxu0 0
  %3347 = vmatmul.mubr.bf16.gmra.mxu0 %v3087
  %v3348 = vpop.f32.mrf.mxu0
  %v3349 = vadd.f32 0.0, %v3348
  %v3350 = vpop.f32.mrf.mxu0
  %v3351 = vpop.f32.mrf.mxu0
  %v3352 = vadd.f32 0.0, %v3351
  %v3353 = vpop.f32.mrf.mxu0
  %3354 = vmatprep.mubr.bf16.mxu0 0
  %3355 = vmatmul.mubr.bf16.gmra.mxu0 %v3090
  %v3356 = vpop.f32.mrf.mxu0
  %v3357 = vadd.f32 0.0, %v3356
  %v3358 = vpop.f32.mrf.mxu0
  %v3359 = vpop.f32.mrf.mxu0
  %v3360 = vpop.f32.mrf.mxu0
  %3361 = vdwg.mxu0
  %v3362 = vadd.f32 %v3269, %v3333
  %v3363 = vadd.f32 %v3272, %v3336
  %v3364 = vadd.f32 %v3277, %v3341
  %v3365 = vadd.f32 %v3280, %v3344
  %v3366 = vadd.f32 %v3285, %v3349
  %v3367 = vadd.f32 %v3288, %v3352
  %v3368 = vadd.f32 %v3293, %v3357
  %v3369 = vmax.f32 %v3163, %v3362
  %v3370 = vmax.f32 %v3164, %v3363
  %v3371 = vmax.f32 %v3165, %v3364
  %v3372 = vmax.f32 %v3166, %v3365
  %v3373 = vmax.f32 %v3167, %v3366
  %v3374 = vmax.f32 %v3168, %v3367
  %v3375 = vmax.f32 %v3169, %v3368
  %v3377 = vlaneseq
  %v3378 = vshrl.u32 %v3377, 7
  %v3379 = vsub.s32 0, %v3378
  %v3380 = vrot.slane %v2168, %v3379
  %v3382 = vadd.f32 %v3369, %v3380
  %v3383 = vadd.f32 %v3370, %v3380
  %v3384 = vadd.f32 %v3371, %v3380
  %v3385 = vadd.f32 %v3372, %v3380
  %v3386 = vadd.f32 %v3373, %v3380
  %v3387 = vadd.f32 %v3374, %v3380
  %v3388 = vadd.f32 %v3375, %v3380
  %v3389 = vmax.f32 %v3382, 0.0
  %v3390 = vmax.f32 %v3383, 0.0
  %v3391 = vmax.f32 %v3384, 0.0
  %v3392 = vmax.f32 %v3385, 0.0
  %v3393 = vmax.f32 %v3386, 0.0
  %v3394 = vmax.f32 %v3387, 0.0
  %v3395 = vmax.f32 %v3388, 0.0
  %v3396 = vpack.c.bf16 %v3389, %v3389
  %v3397 = vld [vmem:[%s6] sm:$0xf]
  %v3398 = vld [vmem:[%s6 + $0x4] sm:$0xf]
  %v3399 = vld [vmem:[%s6 + $0x8] sm:$0xf]
  %v3400 = vld [vmem:[%s6 + $0xc] sm:$0xf]
  %v3401 = vld [vmem:[%s6 + $0x10] sm:$0xf]
  %v3402 = vld [vmem:[%s6 + $0x14] sm:$0xf]
  %v3403 = vld [vmem:[%s6 + $0x18] sm:$0xf]
  %v3404 = vld [vmem:[%s6 + $0x1c] sm:$0xf]
  %v3405 = vld [vmem:[%s6 + $0x20] sm:$0xf]
  %v3406 = vld [vmem:[%s6 + $0x24] sm:$0xf]
  %v3407 = vld [vmem:[%s6 + $0x28] sm:$0xf]
  %v3408 = vld [vmem:[%s6 + $0x2c] sm:$0xf]
  %v3409 = vld [vmem:[%s6 + $0x30] sm:$0xf]
  %v3410 = vld [vmem:[%s6 + $0x34] sm:$0xf]
  %v3411 = vpack.c.bf16 %v3390, %v3390
  %s3412 = scalar_lea.vmem %s6, 56
  %v3413 = vld [vmem:[%s3412] sm:$0xf]
  %v3414 = vld [vmem:[%s3412 + $0x4] sm:$0xf]
  %v3415 = vld [vmem:[%s3412 + $0x8] sm:$0xf]
  %v3416 = vld [vmem:[%s3412 + $0xc] sm:$0xf]
  %v3417 = vld [vmem:[%s3412 + $0x10] sm:$0xf]
  %v3418 = vld [vmem:[%s3412 + $0x14] sm:$0xf]
  %v3419 = vld [vmem:[%s3412 + $0x18] sm:$0xf]
  %v3420 = vld [vmem:[%s3412 + $0x1c] sm:$0xf]
  %v3421 = vld [vmem:[%s3412 + $0x20] sm:$0xf]
  %v3422 = vld [vmem:[%s3412 + $0x24] sm:$0xf]
  %v3423 = vld [vmem:[%s3412 + $0x28] sm:$0xf]
  %v3424 = vld [vmem:[%s3412 + $0x2c] sm:$0xf]
  %v3425 = vld [vmem:[%s3412 + $0x30] sm:$0xf]
  %v3426 = vld [vmem:[%s3412 + $0x34] sm:$0xf]
  %v3441 = vunpack.c.l.b16 %v3413
  %v3442 = vunpack.c.l.b16 %v3414
  %v3443 = vunpack.c.l.b16 %v3415
  %v3444 = vunpack.c.l.b16 %v3416
  %v3445 = vunpack.c.l.b16 %v3417
  %v3446 = vunpack.c.l.b16 %v3418
  %v3447 = vunpack.c.l.b16 %v3419
  %v3448 = vunpack.c.l.b16 %v3420
  %v3449 = vunpack.c.l.b16 %v3421
  %v3450 = vunpack.c.l.b16 %v3422
  %v3451 = vunpack.c.l.b16 %v3423
  %v3452 = vunpack.c.l.b16 %v3424
  %v3453 = vunpack.c.l.b16 %v3425
  %v3454 = vunpack.c.l.b16 %v3426
  %v3455 = vpack.c.b16 %v3442, %v3441
  %v3456 = vpack.c.b16 %v3444, %v3443
  %v3457 = vpack.c.b16 %v3446, %v3445
  %v3458 = vpack.c.b16 %v3448, %v3447
  %v3459 = vpack.c.b16 %v3450, %v3449
  %v3460 = vpack.c.b16 %v3452, %v3451
  %v3461 = vpack.c.b16 %v3454, %v3453
  %v3470 = vsel %vm2240, %v3411, 0
  %3472 = vmatprep.subr.bf16.mxu0 0
  %3473 = vmatpush1.bf16.msra.mxu0 0
  %3474 = vmatprep.subr.bf16.mxu0 0
  %3475 = vmatpush1.bf16.msra.mxu0 %v3461
  %3476 = vmatprep.subr.bf16.mxu0 0
  %3477 = vmatpush1.bf16.msra.mxu0 %v3460
  %3478 = vmatprep.subr.bf16.mxu0 0
  %3479 = vmatpush1.bf16.msra.mxu0 %v3459
  %3480 = vmatprep.subr.bf16.mxu0 0
  %3481 = vmatpush1.bf16.msra.mxu0 %v3458
  %3482 = vmatprep.subr.bf16.mxu0 0
  %3483 = vmatpush1.bf16.msra.mxu0 %v3457
  %3484 = vmatprep.subr.bf16.mxu0 0
  %3485 = vmatpush1.bf16.msra.mxu0 %v3456
  %3486 = vmatprep.subr.bf16.mxu0 0
  %3487 = vmatpush1.bf16.msra.mxu0 %v3455
  %3488 = vmatprep.subr.bf16.mxu0 0
  %3489 = vmatpush2.bf16.msra.mxu0 0
  %3490 = vmatprep.subr.bf16.mxu0 0
  %3491 = vmatpush2.bf16.msra.mxu0 0
  %3492 = vmatprep.subr.bf16.mxu0 0
  %3493 = vmatpush2.bf16.msra.mxu0 0
  %3494 = vmatprep.subr.bf16.mxu0 0
  %3495 = vmatpush2.bf16.msra.mxu0 0
  %3496 = vmatprep.subr.bf16.mxu0 0
  %3497 = vmatpush2.bf16.msra.mxu0 0
  %3498 = vmatprep.subr.bf16.mxu0 0
  %3499 = vmatpush2.bf16.msra.mxu0 0
  %3500 = vmatprep.subr.bf16.mxu0 0
  %3501 = vmatpush2.bf16.msra.mxu0 0
  %3502 = vmatprep.subr.bf16.mxu0 0
  %3503 = vmatpush2.bf16.msra.mxu0 0
  %3504 = vmatprep.mubr.bf16.mxu0 0
  %3505 = vmatmul.mubr.bf16.gmra.mxu0 %v3470
  %v3506 = vpop.f32.mrf.mxu0
  %v3507 = vadd.f32 0.0, %v3506
  %v3508 = vpop.f32.mrf.mxu0
  %v3509 = vpop.f32.mrf.mxu0
  %v3510 = vpop.f32.mrf.mxu0
  %3511 = vdwg.mxu0
  %v3526 = vunpack.c.l.b16 %v3397
  %v3527 = vunpack.c.l.b16 %v3398
  %v3528 = vunpack.c.l.b16 %v3399
  %v3529 = vunpack.c.l.b16 %v3400
  %v3530 = vunpack.c.l.b16 %v3401
  %v3531 = vunpack.c.l.b16 %v3402
  %v3532 = vunpack.c.l.b16 %v3403
  %v3533 = vunpack.c.l.b16 %v3404
  %v3534 = vunpack.c.l.b16 %v3405
  %v3535 = vunpack.c.l.b16 %v3406
  %v3536 = vunpack.c.l.b16 %v3407
  %v3537 = vunpack.c.l.b16 %v3408
  %v3538 = vunpack.c.l.b16 %v3409
  %v3539 = vunpack.c.l.b16 %v3410
  %v3540 = vpack.c.b16 %v3527, %v3526
  %v3541 = vpack.c.b16 %v3529, %v3528
  %v3542 = vpack.c.b16 %v3531, %v3530
  %v3543 = vpack.c.b16 %v3533, %v3532
  %v3544 = vpack.c.b16 %v3535, %v3534
  %v3545 = vpack.c.b16 %v3537, %v3536
  %v3546 = vpack.c.b16 %v3539, %v3538
  %v3555 = vsel %vm2240, %v3396, 0
  %3557 = vmatprep.subr.bf16.mxu0 0
  %3558 = vmatpush1.bf16.msra.mxu0 0
  %3559 = vmatprep.subr.bf16.mxu0 0
  %3560 = vmatpush1.bf16.msra.mxu0 %v3546
  %3561 = vmatprep.subr.bf16.mxu0 0
  %3562 = vmatpush1.bf16.msra.mxu0 %v3545
  %3563 = vmatprep.subr.bf16.mxu0 0
  %3564 = vmatpush1.bf16.msra.mxu0 %v3544
  %3565 = vmatprep.subr.bf16.mxu0 0
  %3566 = vmatpush1.bf16.msra.mxu0 %v3543
  %3567 = vmatprep.subr.bf16.mxu0 0
  %3568 = vmatpush1.bf16.msra.mxu0 %v3542
  %3569 = vmatprep.subr.bf16.mxu0 0
  %3570 = vmatpush1.bf16.msra.mxu0 %v3541
  %3571 = vmatprep.subr.bf16.mxu0 0
  %3572 = vmatpush1.bf16.msra.mxu0 %v3540
  %3573 = vmatprep.subr.bf16.mxu0 0
  %3574 = vmatpush2.bf16.msra.mxu0 0
  %3575 = vmatprep.subr.bf16.mxu0 0
  %3576 = vmatpush2.bf16.msra.mxu0 0
  %3577 = vmatprep.subr.bf16.mxu0 0
  %3578 = vmatpush2.bf16.msra.mxu0 0
  %3579 = vmatprep.subr.bf16.mxu0 0
  %3580 = vmatpush2.bf16.msra.mxu0 0
  %3581 = vmatprep.subr.bf16.mxu0 0
  %3582 = vmatpush2.bf16.msra.mxu0 0
  %3583 = vmatprep.subr.bf16.mxu0 0
  %3584 = vmatpush2.bf16.msra.mxu0 0
  %3585 = vmatprep.subr.bf16.mxu0 0
  %3586 = vmatpush2.bf16.msra.mxu0 0
  %3587 = vmatprep.subr.bf16.mxu0 0
  %3588 = vmatpush2.bf16.msra.mxu0 0
  %3589 = vmatprep.mubr.bf16.mxu0 0
  %3590 = vmatmul.mubr.bf16.gmra.mxu0 %v3555
  %v3591 = vpop.f32.mrf.mxu0
  %v3592 = vadd.f32 %v3507, %v3591
  %v3593 = vpop.f32.mrf.mxu0
  %v3594 = vpop.f32.mrf.mxu0
  %v3595 = vpop.f32.mrf.mxu0
  %3596 = vdwg.mxu0
  %v3597 = vpack.c.bf16 %v3391, %v3391
  %s3598 = scalar_lea.vmem %s6, 112
  %v3599 = vld [vmem:[%s3598] sm:$0xf]
  %v3600 = vld [vmem:[%s3598 + $0x4] sm:$0xf]
  %v3601 = vld [vmem:[%s3598 + $0x8] sm:$0xf]
  %v3602 = vld [vmem:[%s3598 + $0xc] sm:$0xf]
  %v3603 = vld [vmem:[%s3598 + $0x10] sm:$0xf]
  %v3604 = vld [vmem:[%s3598 + $0x14] sm:$0xf]
  %v3605 = vld [vmem:[%s3598 + $0x18] sm:$0xf]
  %v3606 = vld [vmem:[%s3598 + $0x1c] sm:$0xf]
  %v3607 = vld [vmem:[%s3598 + $0x20] sm:$0xf]
  %v3608 = vld [vmem:[%s3598 + $0x24] sm:$0xf]
  %v3609 = vld [vmem:[%s3598 + $0x28] sm:$0xf]
  %v3610 = vld [vmem:[%s3598 + $0x2c] sm:$0xf]
  %v3611 = vld [vmem:[%s3598 + $0x30] sm:$0xf]
  %v3612 = vld [vmem:[%s3598 + $0x34] sm:$0xf]
  %v3627 = vunpack.c.l.b16 %v3599
  %v3628 = vunpack.c.l.b16 %v3600
  %v3629 = vunpack.c.l.b16 %v3601
  %v3630 = vunpack.c.l.b16 %v3602
  %v3631 = vunpack.c.l.b16 %v3603
  %v3632 = vunpack.c.l.b16 %v3604
  %v3633 = vunpack.c.l.b16 %v3605
  %v3634 = vunpack.c.l.b16 %v3606
  %v3635 = vunpack.c.l.b16 %v3607
  %v3636 = vunpack.c.l.b16 %v3608
  %v3637 = vunpack.c.l.b16 %v3609
  %v3638 = vunpack.c.l.b16 %v3610
  %v3639 = vunpack.c.l.b16 %v3611
  %v3640 = vunpack.c.l.b16 %v3612
  %v3641 = vpack.c.b16 %v3628, %v3627
  %v3642 = vpack.c.b16 %v3630, %v3629
  %v3643 = vpack.c.b16 %v3632, %v3631
  %v3644 = vpack.c.b16 %v3634, %v3633
  %v3645 = vpack.c.b16 %v3636, %v3635
  %v3646 = vpack.c.b16 %v3638, %v3637
  %v3647 = vpack.c.b16 %v3640, %v3639
  %v3656 = vsel %vm2240, %v3597, 0
  %3658 = vmatprep.subr.bf16.mxu0 0
  %3659 = vmatpush1.bf16.msra.mxu0 0
  %3660 = vmatprep.subr.bf16.mxu0 0
  %3661 = vmatpush1.bf16.msra.mxu0 %v3647
  %3662 = vmatprep.subr.bf16.mxu0 0
  %3663 = vmatpush1.bf16.msra.mxu0 %v3646
  %3664 = vmatprep.subr.bf16.mxu0 0
  %3665 = vmatpush1.bf16.msra.mxu0 %v3645
  %3666 = vmatprep.subr.bf16.mxu0 0
  %3667 = vmatpush1.bf16.msra.mxu0 %v3644
  %3668 = vmatprep.subr.bf16.mxu0 0
  %3669 = vmatpush1.bf16.msra.mxu0 %v3643
  %3670 = vmatprep.subr.bf16.mxu0 0
  %3671 = vmatpush1.bf16.msra.mxu0 %v3642
  %3672 = vmatprep.subr.bf16.mxu0 0
  %3673 = vmatpush1.bf16.msra.mxu0 %v3641
  %3674 = vmatprep.subr.bf16.mxu0 0
  %3675 = vmatpush2.bf16.msra.mxu0 0
  %3676 = vmatprep.subr.bf16.mxu0 0
  %3677 = vmatpush2.bf16.msra.mxu0 0
  %3678 = vmatprep.subr.bf16.mxu0 0
  %3679 = vmatpush2.bf16.msra.mxu0 0
  %3680 = vmatprep.subr.bf16.mxu0 0
  %3681 = vmatpush2.bf16.msra.mxu0 0
  %3682 = vmatprep.subr.bf16.mxu0 0
  %3683 = vmatpush2.bf16.msra.mxu0 0
  %3684 = vmatprep.subr.bf16.mxu0 0
  %3685 = vmatpush2.bf16.msra.mxu0 0
  %3686 = vmatprep.subr.bf16.mxu0 0
  %3687 = vmatpush2.bf16.msra.mxu0 0
  %3688 = vmatprep.subr.bf16.mxu0 0
  %3689 = vmatpush2.bf16.msra.mxu0 0
  %3690 = vmatprep.mubr.bf16.mxu0 0
  %3691 = vmatmul.mubr.bf16.gmra.mxu0 %v3656
  %v3692 = vpop.f32.mrf.mxu0
  %v3693 = vadd.f32 0.0, %v3692
  %v3694 = vpop.f32.mrf.mxu0
  %v3695 = vpop.f32.mrf.mxu0
  %v3696 = vpop.f32.mrf.mxu0
  %3697 = vdwg.mxu0
  %v3698 = vadd.f32 %v3592, %v3693
  %v3699 = vpack.c.bf16 %v3392, %v3392
  %s3700 = scalar_lea.vmem %s6, 168
  %v3701 = vld [vmem:[%s3700] sm:$0xf]
  %v3702 = vld [vmem:[%s3700 + $0x4] sm:$0xf]
  %v3703 = vld [vmem:[%s3700 + $0x8] sm:$0xf]
  %v3704 = vld [vmem:[%s3700 + $0xc] sm:$0xf]
  %v3705 = vld [vmem:[%s3700 + $0x10] sm:$0xf]
  %v3706 = vld [vmem:[%s3700 + $0x14] sm:$0xf]
  %v3707 = vld [vmem:[%s3700 + $0x18] sm:$0xf]
  %v3708 = vld [vmem:[%s3700 + $0x1c] sm:$0xf]
  %v3709 = vld [vmem:[%s3700 + $0x20] sm:$0xf]
  %v3710 = vld [vmem:[%s3700 + $0x24] sm:$0xf]
  %v3711 = vld [vmem:[%s3700 + $0x28] sm:$0xf]
  %v3712 = vld [vmem:[%s3700 + $0x2c] sm:$0xf]
  %v3713 = vld [vmem:[%s3700 + $0x30] sm:$0xf]
  %v3714 = vld [vmem:[%s3700 + $0x34] sm:$0xf]
  %v3729 = vunpack.c.l.b16 %v3701
  %v3730 = vunpack.c.l.b16 %v3702
  %v3731 = vunpack.c.l.b16 %v3703
  %v3732 = vunpack.c.l.b16 %v3704
  %v3733 = vunpack.c.l.b16 %v3705
  %v3734 = vunpack.c.l.b16 %v3706
  %v3735 = vunpack.c.l.b16 %v3707
  %v3736 = vunpack.c.l.b16 %v3708
  %v3737 = vunpack.c.l.b16 %v3709
  %v3738 = vunpack.c.l.b16 %v3710
  %v3739 = vunpack.c.l.b16 %v3711
  %v3740 = vunpack.c.l.b16 %v3712
  %v3741 = vunpack.c.l.b16 %v3713
  %v3742 = vunpack.c.l.b16 %v3714
  %v3743 = vpack.c.b16 %v3730, %v3729
  %v3744 = vpack.c.b16 %v3732, %v3731
  %v3745 = vpack.c.b16 %v3734, %v3733
  %v3746 = vpack.c.b16 %v3736, %v3735
  %v3747 = vpack.c.b16 %v3738, %v3737
  %v3748 = vpack.c.b16 %v3740, %v3739
  %v3749 = vpack.c.b16 %v3742, %v3741
  %v3758 = vsel %vm2240, %v3699, 0
  %3760 = vmatprep.subr.bf16.mxu0 0
  %3761 = vmatpush1.bf16.msra.mxu0 0
  %3762 = vmatprep.subr.bf16.mxu0 0
  %3763 = vmatpush1.bf16.msra.mxu0 %v3749
  %3764 = vmatprep.subr.bf16.mxu0 0
  %3765 = vmatpush1.bf16.msra.mxu0 %v3748
  %3766 = vmatprep.subr.bf16.mxu0 0
  %3767 = vmatpush1.bf16.msra.mxu0 %v3747
  %3768 = vmatprep.subr.bf16.mxu0 0
  %3769 = vmatpush1.bf16.msra.mxu0 %v3746
  %3770 = vmatprep.subr.bf16.mxu0 0
  %3771 = vmatpush1.bf16.msra.mxu0 %v3745
  %3772 = vmatprep.subr.bf16.mxu0 0
  %3773 = vmatpush1.bf16.msra.mxu0 %v3744
  %3774 = vmatprep.subr.bf16.mxu0 0
  %3775 = vmatpush1.bf16.msra.mxu0 %v3743
  %3776 = vmatprep.subr.bf16.mxu0 0
  %3777 = vmatpush2.bf16.msra.mxu0 0
  %3778 = vmatprep.subr.bf16.mxu0 0
  %3779 = vmatpush2.bf16.msra.mxu0 0
  %3780 = vmatprep.subr.bf16.mxu0 0
  %3781 = vmatpush2.bf16.msra.mxu0 0
  %3782 = vmatprep.subr.bf16.mxu0 0
  %3783 = vmatpush2.bf16.msra.mxu0 0
  %3784 = vmatprep.subr.bf16.mxu0 0
  %3785 = vmatpush2.bf16.msra.mxu0 0
  %3786 = vmatprep.subr.bf16.mxu0 0
  %3787 = vmatpush2.bf16.msra.mxu0 0
  %3788 = vmatprep.subr.bf16.mxu0 0
  %3789 = vmatpush2.bf16.msra.mxu0 0
  %3790 = vmatprep.subr.bf16.mxu0 0
  %3791 = vmatpush2.bf16.msra.mxu0 0
  %3792 = vmatprep.mubr.bf16.mxu0 0
  %3793 = vmatmul.mubr.bf16.gmra.mxu0 %v3758
  %v3794 = vpop.f32.mrf.mxu0
  %v3795 = vadd.f32 0.0, %v3794
  %v3796 = vpop.f32.mrf.mxu0
  %v3797 = vpop.f32.mrf.mxu0
  %v3798 = vpop.f32.mrf.mxu0
  %3799 = vdwg.mxu0
  %v3800 = vadd.f32 %v3698, %v3795
  %v3801 = vpack.c.bf16 %v3393, %v3393
  %s3802 = scalar_lea.vmem %s6, 224
  %v3803 = vld [vmem:[%s3802] sm:$0xf]
  %v3804 = vld [vmem:[%s3802 + $0x4] sm:$0xf]
  %v3805 = vld [vmem:[%s3802 + $0x8] sm:$0xf]
  %v3806 = vld [vmem:[%s3802 + $0xc] sm:$0xf]
  %v3807 = vld [vmem:[%s3802 + $0x10] sm:$0xf]
  %v3808 = vld [vmem:[%s3802 + $0x14] sm:$0xf]
  %v3809 = vld [vmem:[%s3802 + $0x18] sm:$0xf]
  %v3810 = vld [vmem:[%s3802 + $0x1c] sm:$0xf]
  %v3811 = vld [vmem:[%s3802 + $0x20] sm:$0xf]
  %v3812 = vld [vmem:[%s3802 + $0x24] sm:$0xf]
  %v3813 = vld [vmem:[%s3802 + $0x28] sm:$0xf]
  %v3814 = vld [vmem:[%s3802 + $0x2c] sm:$0xf]
  %v3815 = vld [vmem:[%s3802 + $0x30] sm:$0xf]
  %v3816 = vld [vmem:[%s3802 + $0x34] sm:$0xf]
  %v3831 = vunpack.c.l.b16 %v3803
  %v3832 = vunpack.c.l.b16 %v3804
  %v3833 = vunpack.c.l.b16 %v3805
  %v3834 = vunpack.c.l.b16 %v3806
  %v3835 = vunpack.c.l.b16 %v3807
  %v3836 = vunpack.c.l.b16 %v3808
  %v3837 = vunpack.c.l.b16 %v3809
  %v3838 = vunpack.c.l.b16 %v3810
  %v3839 = vunpack.c.l.b16 %v3811
  %v3840 = vunpack.c.l.b16 %v3812
  %v3841 = vunpack.c.l.b16 %v3813
  %v3842 = vunpack.c.l.b16 %v3814
  %v3843 = vunpack.c.l.b16 %v3815
  %v3844 = vunpack.c.l.b16 %v3816
  %v3845 = vpack.c.b16 %v3832, %v3831
  %v3846 = vpack.c.b16 %v3834, %v3833
  %v3847 = vpack.c.b16 %v3836, %v3835
  %v3848 = vpack.c.b16 %v3838, %v3837
  %v3849 = vpack.c.b16 %v3840, %v3839
  %v3850 = vpack.c.b16 %v3842, %v3841
  %v3851 = vpack.c.b16 %v3844, %v3843
  %v3860 = vsel %vm2240, %v3801, 0
  %3862 = vmatprep.subr.bf16.mxu0 0
  %3863 = vmatpush1.bf16.msra.mxu0 0
  %3864 = vmatprep.subr.bf16.mxu0 0
  %3865 = vmatpush1.bf16.msra.mxu0 %v3851
  %3866 = vmatprep.subr.bf16.mxu0 0
  %3867 = vmatpush1.bf16.msra.mxu0 %v3850
  %3868 = vmatprep.subr.bf16.mxu0 0
  %3869 = vmatpush1.bf16.msra.mxu0 %v3849
  %3870 = vmatprep.subr.bf16.mxu0 0
  %3871 = vmatpush1.bf16.msra.mxu0 %v3848
  %3872 = vmatprep.subr.bf16.mxu0 0
  %3873 = vmatpush1.bf16.msra.mxu0 %v3847
  %3874 = vmatprep.subr.bf16.mxu0 0
  %3875 = vmatpush1.bf16.msra.mxu0 %v3846
  %3876 = vmatprep.subr.bf16.mxu0 0
  %3877 = vmatpush1.bf16.msra.mxu0 %v3845
  %3878 = vmatprep.subr.bf16.mxu0 0
  %3879 = vmatpush2.bf16.msra.mxu0 0
  %3880 = vmatprep.subr.bf16.mxu0 0
  %3881 = vmatpush2.bf16.msra.mxu0 0
  %3882 = vmatprep.subr.bf16.mxu0 0
  %3883 = vmatpush2.bf16.msra.mxu0 0
  %3884 = vmatprep.subr.bf16.mxu0 0
  %3885 = vmatpush2.bf16.msra.mxu0 0
  %3886 = vmatprep.subr.bf16.mxu0 0
  %3887 = vmatpush2.bf16.msra.mxu0 0
  %3888 = vmatprep.subr.bf16.mxu0 0
  %3889 = vmatpush2.bf16.msra.mxu0 0
  %3890 = vmatprep.subr.bf16.mxu0 0
  %3891 = vmatpush2.bf16.msra.mxu0 0
  %3892 = vmatprep.subr.bf16.mxu0 0
  %3893 = vmatpush2.bf16.msra.mxu0 0
  %3894 = vmatprep.mubr.bf16.mxu0 0
  %3895 = vmatmul.mubr.bf16.gmra.mxu0 %v3860
  %v3896 = vpop.f32.mrf.mxu0
  %v3897 = vadd.f32 0.0, %v3896
  %v3898 = vpop.f32.mrf.mxu0
  %v3899 = vpop.f32.mrf.mxu0
  %v3900 = vpop.f32.mrf.mxu0
  %3901 = vdwg.mxu0
  %v3902 = vadd.f32 %v3800, %v3897
  %v3903 = vpack.c.bf16 %v3394, %v3394
  %s3904 = scalar_lea.vmem %s6, 280
  %v3905 = vld [vmem:[%s3904] sm:$0xf]
  %v3906 = vld [vmem:[%s3904 + $0x4] sm:$0xf]
  %v3907 = vld [vmem:[%s3904 + $0x8] sm:$0xf]
  %v3908 = vld [vmem:[%s3904 + $0xc] sm:$0xf]
  %v3909 = vld [vmem:[%s3904 + $0x10] sm:$0xf]
  %v3910 = vld [vmem:[%s3904 + $0x14] sm:$0xf]
  %v3911 = vld [vmem:[%s3904 + $0x18] sm:$0xf]
  %v3912 = vld [vmem:[%s3904 + $0x1c] sm:$0xf]
  %v3913 = vld [vmem:[%s3904 + $0x20] sm:$0xf]
  %v3914 = vld [vmem:[%s3904 + $0x24] sm:$0xf]
  %v3915 = vld [vmem:[%s3904 + $0x28] sm:$0xf]
  %v3916 = vld [vmem:[%s3904 + $0x2c] sm:$0xf]
  %v3917 = vld [vmem:[%s3904 + $0x30] sm:$0xf]
  %v3918 = vld [vmem:[%s3904 + $0x34] sm:$0xf]
  %v3933 = vunpack.c.l.b16 %v3905
  %v3934 = vunpack.c.l.b16 %v3906
  %v3935 = vunpack.c.l.b16 %v3907
  %v3936 = vunpack.c.l.b16 %v3908
  %v3937 = vunpack.c.l.b16 %v3909
  %v3938 = vunpack.c.l.b16 %v3910
  %v3939 = vunpack.c.l.b16 %v3911
  %v3940 = vunpack.c.l.b16 %v3912
  %v3941 = vunpack.c.l.b16 %v3913
  %v3942 = vunpack.c.l.b16 %v3914
  %v3943 = vunpack.c.l.b16 %v3915
  %v3944 = vunpack.c.l.b16 %v3916
  %v3945 = vunpack.c.l.b16 %v3917
  %v3946 = vunpack.c.l.b16 %v3918
  %v3947 = vpack.c.b16 %v3934, %v3933
  %v3948 = vpack.c.b16 %v3936, %v3935
  %v3949 = vpack.c.b16 %v3938, %v3937
  %v3950 = vpack.c.b16 %v3940, %v3939
  %v3951 = vpack.c.b16 %v3942, %v3941
  %v3952 = vpack.c.b16 %v3944, %v3943
  %v3953 = vpack.c.b16 %v3946, %v3945
  %v3962 = vsel %vm2240, %v3903, 0
  %3964 = vmatprep.subr.bf16.mxu0 0
  %3965 = vmatpush1.bf16.msra.mxu0 0
  %3966 = vmatprep.subr.bf16.mxu0 0
  %3967 = vmatpush1.bf16.msra.mxu0 %v3953
  %3968 = vmatprep.subr.bf16.mxu0 0
  %3969 = vmatpush1.bf16.msra.mxu0 %v3952
  %3970 = vmatprep.subr.bf16.mxu0 0
  %3971 = vmatpush1.bf16.msra.mxu0 %v3951
  %3972 = vmatprep.subr.bf16.mxu0 0
  %3973 = vmatpush1.bf16.msra.mxu0 %v3950
  %3974 = vmatprep.subr.bf16.mxu0 0
  %3975 = vmatpush1.bf16.msra.mxu0 %v3949
  %3976 = vmatprep.subr.bf16.mxu0 0
  %3977 = vmatpush1.bf16.msra.mxu0 %v3948
  %3978 = vmatprep.subr.bf16.mxu0 0
  %3979 = vmatpush1.bf16.msra.mxu0 %v3947
  %3980 = vmatprep.subr.bf16.mxu0 0
  %3981 = vmatpush2.bf16.msra.mxu0 0
  %3982 = vmatprep.subr.bf16.mxu0 0
  %3983 = vmatpush2.bf16.msra.mxu0 0
  %3984 = vmatprep.subr.bf16.mxu0 0
  %3985 = vmatpush2.bf16.msra.mxu0 0
  %3986 = vmatprep.subr.bf16.mxu0 0
  %3987 = vmatpush2.bf16.msra.mxu0 0
  %3988 = vmatprep.subr.bf16.mxu0 0
  %3989 = vmatpush2.bf16.msra.mxu0 0
  %3990 = vmatprep.subr.bf16.mxu0 0
  %3991 = vmatpush2.bf16.msra.mxu0 0
  %3992 = vmatprep.subr.bf16.mxu0 0
  %3993 = vmatpush2.bf16.msra.mxu0 0
  %3994 = vmatprep.subr.bf16.mxu0 0
  %3995 = vmatpush2.bf16.msra.mxu0 0
  %3996 = vmatprep.mubr.bf16.mxu0 0
  %3997 = vmatmul.mubr.bf16.gmra.mxu0 %v3962
  %v3998 = vpop.f32.mrf.mxu0
  %v3999 = vadd.f32 0.0, %v3998
  %v4000 = vpop.f32.mrf.mxu0
  %v4001 = vpop.f32.mrf.mxu0
  %v4002 = vpop.f32.mrf.mxu0
  %4003 = vdwg.mxu0
  %v4004 = vadd.f32 %v3902, %v3999
  %v4005 = vpack.c.bf16 %v3395, %v3395
  %s4006 = scalar_lea.vmem %s6, 336
  %v4007 = vld [vmem:[%s4006] sm:$0xf]
  %v4008 = vld [vmem:[%s4006 + $0x4] sm:$0xf]
  %v4009 = vld [vmem:[%s4006 + $0x8] sm:$0xf]
  %v4010 = vld [vmem:[%s4006 + $0xc] sm:$0xf]
  %v4011 = vld [vmem:[%s4006 + $0x10] sm:$0xf]
  %v4012 = vld [vmem:[%s4006 + $0x14] sm:$0xf]
  %v4013 = vld [vmem:[%s4006 + $0x18] sm:$0xf]
  %v4014 = vld [vmem:[%s4006 + $0x1c] sm:$0xf]
  %v4015 = vld [vmem:[%s4006 + $0x20] sm:$0xf]
  %v4016 = vld [vmem:[%s4006 + $0x24] sm:$0xf]
  %v4017 = vld [vmem:[%s4006 + $0x28] sm:$0xf]
  %v4018 = vld [vmem:[%s4006 + $0x2c] sm:$0xf]
  %v4019 = vld [vmem:[%s4006 + $0x30] sm:$0xf]
  %v4020 = vld [vmem:[%s4006 + $0x34] sm:$0xf]
  %v4035 = vunpack.c.l.b16 %v4007
  %v4036 = vunpack.c.l.b16 %v4008
  %v4037 = vunpack.c.l.b16 %v4009
  %v4038 = vunpack.c.l.b16 %v4010
  %v4039 = vunpack.c.l.b16 %v4011
  %v4040 = vunpack.c.l.b16 %v4012
  %v4041 = vunpack.c.l.b16 %v4013
  %v4042 = vunpack.c.l.b16 %v4014
  %v4043 = vunpack.c.l.b16 %v4015
  %v4044 = vunpack.c.l.b16 %v4016
  %v4045 = vunpack.c.l.b16 %v4017
  %v4046 = vunpack.c.l.b16 %v4018
  %v4047 = vunpack.c.l.b16 %v4019
  %v4048 = vunpack.c.l.b16 %v4020
  %v4049 = vpack.c.b16 %v4036, %v4035
  %v4050 = vpack.c.b16 %v4038, %v4037
  %v4051 = vpack.c.b16 %v4040, %v4039
  %v4052 = vpack.c.b16 %v4042, %v4041
  %v4053 = vpack.c.b16 %v4044, %v4043
  %v4054 = vpack.c.b16 %v4046, %v4045
  %v4055 = vpack.c.b16 %v4048, %v4047
  %v4064 = vsel %vm2240, %v4005, 0
  %4066 = vmatprep.subr.bf16.mxu0 0
  %4067 = vmatpush1.bf16.msra.mxu0 0
  %4068 = vmatprep.subr.bf16.mxu0 0
  %4069 = vmatpush1.bf16.msra.mxu0 %v4055
  %4070 = vmatprep.subr.bf16.mxu0 0
  %4071 = vmatpush1.bf16.msra.mxu0 %v4054
  %4072 = vmatprep.subr.bf16.mxu0 0
  %4073 = vmatpush1.bf16.msra.mxu0 %v4053
  %4074 = vmatprep.subr.bf16.mxu0 0
  %4075 = vmatpush1.bf16.msra.mxu0 %v4052
  %4076 = vmatprep.subr.bf16.mxu0 0
  %4077 = vmatpush1.bf16.msra.mxu0 %v4051
  %4078 = vmatprep.subr.bf16.mxu0 0
  %4079 = vmatpush1.bf16.msra.mxu0 %v4050
  %4080 = vmatprep.subr.bf16.mxu0 0
  %4081 = vmatpush1.bf16.msra.mxu0 %v4049
  %4082 = vmatprep.subr.bf16.mxu0 0
  %4083 = vmatpush2.bf16.msra.mxu0 0
  %4084 = vmatprep.subr.bf16.mxu0 0
  %4085 = vmatpush2.bf16.msra.mxu0 0
  %4086 = vmatprep.subr.bf16.mxu0 0
  %4087 = vmatpush2.bf16.msra.mxu0 0
  %4088 = vmatprep.subr.bf16.mxu0 0
  %4089 = vmatpush2.bf16.msra.mxu0 0
  %4090 = vmatprep.subr.bf16.mxu0 0
  %4091 = vmatpush2.bf16.msra.mxu0 0
  %4092 = vmatprep.subr.bf16.mxu0 0
  %4093 = vmatpush2.bf16.msra.mxu0 0
  %4094 = vmatprep.subr.bf16.mxu0 0
  %4095 = vmatpush2.bf16.msra.mxu0 0
  %4096 = vmatprep.subr.bf16.mxu0 0
  %4097 = vmatpush2.bf16.msra.mxu0 0
  %4098 = vmatprep.mubr.bf16.mxu0 0
  %4099 = vmatmul.mubr.bf16.gmra.mxu0 %v4064
  %v4100 = vpop.f32.mrf.mxu0
  %v4101 = vadd.f32 0.0, %v4100
  %v4102 = vpop.f32.mrf.mxu0
  %v4103 = vpop.f32.mrf.mxu0
  %v4104 = vpop.f32.mrf.mxu0
  %4105 = vdwg.mxu0
  %v4106 = vadd.f32 %v4004, %v4101
  %v4107 = vld [vmem:[%s9] sm:$0x1]
  %v4109 = vlaneseq
  %v4110 = vshrl.u32 %v4109, 7
  %v4111 = vsub.s32 0, %v4110
  %v4112 = vrot.slane %v4107, %v4111
  %v4114 = vadd.f32 %v4106, %v4112
  %vm4115 = vcmask 80896
  %4116 = vst.msk [vmem:[%s10] sm:$0xff] %vm4115, %v4114
  // Predicated region
  $region42: #{cnn_forward.1} parent=0 // pred_check
    _
  $region43: #{cnn_forward.1} parent=0 // pred_check_branch
    %4118 = sbr.rel (0) target = $region45
  $region44: #{cnn_forward.1} parent=0 // pred_region
    _
  $region45: #{cnn_forward.1} parent=0 // pred_fallthru
    _
  // Predicated region
  $region46: #{cnn_forward.1} parent=0 // pred_check
    _
  $region47: #{cnn_forward.1} parent=0 // pred_check_branch
    %4120 = sbr.rel (0) target = $region49
  $region48: #{cnn_forward.1} parent=0 // pred_region
    _
  $region49: #{cnn_forward.1} parent=0 // pred_fallthru
    _

</llo_original>
